<compile_context>
chip_gen: v7x
topology: tpu7x:2x2x1
jax: 0.10.0
libtpu: 0.0.40
codegen_flags: <defaults>
</compile_context>

<pallas_src>
import functools
import math

import jax
import jax.numpy as jnp
from jax.experimental import pallas as pl
from jax.experimental.pallas import tpu as pltpu


# stacked-net index constants
S0, S1, T0, T1, Q0, Q1 = 0, 1, 2, 3, 4, 5       # "half" nets (dim1 -> dim2)
F0, F1, V0, V1 = 0, 1, 2, 3                     # "full" nets (C -> C)

_LANES = 128


# ----------------------------- shared MLP math ---------------------------------------
def _mlp_apply(inp, w_in, b_in, w_mid, b_mid, w_out, b_out, use_tanh):
    """BasicFullyConnectedNet forward. Weights bf16 (MXU operands), biases and
    activations f32, f32 accumulation."""
    h = jnp.dot(inp.astype(jnp.bfloat16), w_in,
                preferred_element_type=jnp.float32) + b_in
    h = jnp.maximum(h, 0.01 * h)                              # LeakyReLU(0.01)
    for l in range(w_mid.shape[0]):                           # static, unrolled
        h = jnp.dot(h.astype(jnp.bfloat16), w_mid[l],
                    preferred_element_type=jnp.float32) + b_mid[l]
        h = jnp.maximum(h, 0.01 * h)
    y = jnp.dot(h.astype(jnp.bfloat16), w_out,
                preferred_element_type=jnp.float32) + b_out
    return jnp.tanh(y) if use_tanh else y


# ------------------------------------ kernel -----------------------------------------
def _leapfrog_kernel(x_ref, v_ref,
                     wh_in_ref, bh_in_ref, wh_mid_ref, bh_mid_ref,
                     wh_out_ref, bh_out_ref,
                     wf_in_ref, bf_in_ref, wf_mid_ref, bf_mid_ref,
                     wf_out_ref, bf_out_ref,
                     xo_ref, vo_ref, ld_ref, *, delta_t, d1):
    x = x_ref[...]                                            # (bn, C) f32
    v = v_ref[...]                                            # (bn, C) f32

    def half_net(inp, idx, use_tanh):
        return _mlp_apply(inp, wh_in_ref[idx], bh_in_ref[idx], wh_mid_ref[idx],
                          bh_mid_ref[idx], wh_out_ref[idx], bh_out_ref[idx],
                          use_tanh)

    def full_net(inp, idx, use_tanh):
        return _mlp_apply(inp, wf_in_ref[idx], bf_in_ref[idx], wf_mid_ref[idx],
                          bf_mid_ref[idx], wf_out_ref[idx], bf_out_ref[idx],
                          use_tanh)

    # --- velocity "kick-in" -----------------------------------------------------------
    scale_v1 = full_net(x, V0, True)                          # (bn, C)
    v_prime = v * jnp.exp(0.5 * scale_v1) - 0.5 * delta_t * full_net(x, F0, False)

    # --- coupling step 0: condition on first half, transform second half --------------
    xa, xb = x[:, :d1], x[:, d1:]
    vpa, vpb = v_prime[:, :d1], v_prime[:, d1:]
    sx0 = half_net(xa, S0, True)
    xb_new = (xb * jnp.exp(sx0) + half_net(xa, T0, False)
              + jnp.exp(half_net(xa, Q0, True)) * delta_t * vpb)

    # --- coupling step 1 (halves swapped): condition on xb_new, transform xa ----------
    sx1 = half_net(xb_new, S1, True)
    xa_new = (xa * jnp.exp(sx1) + half_net(xb_new, T1, False)
              + jnp.exp(half_net(xb_new, Q1, True)) * delta_t * vpa)

    # torch code leaves x / v_prime in the swapped order after the loop
    x_out = jnp.concatenate([xb_new, xa_new], axis=1)         # (bn, C)
    vp_out = jnp.concatenate([vpb, vpa], axis=1)              # (bn, C)

    # --- velocity "kick-out" -----------------------------------------------------------
    scale_v2 = full_net(x_out, V1, True)
    v_out = vp_out * jnp.exp(0.5 * scale_v2) - 0.5 * delta_t * full_net(x_out, F1, False)

    xo_ref[...] = x_out
    vo_ref[...] = v_out

    # merged row reductions: one XLU pass per feature width
    ld = (0.5 * jnp.sum(scale_v1 + scale_v2, axis=1, keepdims=True)
          + jnp.sum(sx0 + sx1, axis=1, keepdims=True))        # (bn, 1)
    ld_ref[...] = jnp.broadcast_to(ld, ld_ref.shape)          # lane-dense store


# ------------------------------------ wrapper -----------------------------------------
def extended_leapfrog_forward(x4, v, params, delta_t, *, block_n=128):
    assert x4.ndim == 4 and x4.shape[2] == 1 and x4.shape[3] == 1
    assert v.ndim == 2
    x = x4[:, :, 0, 0]
    n, c = x.shape
    assert c % 2 == 0, "TODO(synk): odd in_channels not supported"
    d1 = c // 2

    bn = min(block_n, n)
    assert n % bn == 0, "batch must be divisible by block_n for this demo"
    grid = (n // bn,)

    def row_spec(width):
        return pl.BlockSpec((bn, width), lambda i: (i, 0))

    def const_spec(arr):
        nd = arr.ndim
        return pl.BlockSpec(arr.shape, lambda i: (0,) * nd)   # VMEM-resident weights

    weight_names = ["wh_in", "bh_in", "wh_mid", "bh_mid", "wh_out", "bh_out",
                    "wf_in", "bf_in", "wf_mid", "bf_mid", "wf_out", "bf_out"]
    weights = [params[name] for name in weight_names]

    kernel = functools.partial(_leapfrog_kernel, delta_t=float(delta_t), d1=d1)

    x_out, v_out, ld_pad = pl.pallas_call(
        kernel,
        out_shape=(jax.ShapeDtypeStruct((n, c), jnp.float32),
                   jax.ShapeDtypeStruct((n, c), jnp.float32),
                   jax.ShapeDtypeStruct((n, _LANES), jnp.float32)),
        grid=grid,
        in_specs=[row_spec(c), row_spec(c)] + [const_spec(w) for w in weights],
        out_specs=(row_spec(c), row_spec(c), row_spec(_LANES)),
        compiler_params=pltpu.CompilerParams(
            dimension_semantics=("parallel",)),
    )(x, v, *weights)

    return x_out[:, :, None, None], v_out, ld_pad[:, 0]


# ------------------------------ pure-JAX reference ------------------------------------
# Literal port of the PyTorch forward (with the chunk/swap loop), using the same
# bf16-operand matmuls so the kernel can be checked tightly.
def reference_forward(x4, v, params, delta_t):
    p = params
    x = x4[:, :, 0, 0]
    c = x.shape[1]
    d1 = c // 2

    def half_net(inp, idx, use_tanh):
        return _mlp_apply(inp, p["wh_in"][idx], p["bh_in"][idx], p["wh_mid"][idx],
                          p["bh_mid"][idx], p["wh_out"][idx], p["bh_out"][idx],
                          use_tanh)

    def full_net(inp, idx, use_tanh):
        return _mlp_apply(inp, p["wf_in"][idx], p["bf_in"][idx], p["wf_mid"][idx],
                          p["bf_mid"][idx], p["wf_out"][idx], p["bf_out"][idx],
                          use_tanh)

    scale_v1 = full_net(x, V0, True)
    v_prime = v * jnp.exp(0.5 * scale_v1) - 0.5 * delta_t * full_net(x, F0, False)
    logdet = 0.5 * jnp.sum(scale_v1, axis=1)

    s_idx, t_idx, q_idx = [S0, S1], [T0, T1], [Q0, Q1]
    for i in range(2):
        if i % 2 != 0:
            x = jnp.concatenate([x[:, d1:], x[:, :d1]], axis=1)
            v_prime = jnp.concatenate([v_prime[:, d1:], v_prime[:, :d1]], axis=1)
        xa, xb = x[:, :d1], x[:, d1:]
        vpa, vpb = v_prime[:, :d1], v_prime[:, d1:]
        sx = half_net(xa, s_idx[i], True)
        sv = half_net(xa, q_idx[i], True)
        tt = half_net(xa, t_idx[i], False)
        xb_ = xb * jnp.exp(sx) + tt + jnp.exp(sv) * delta_t * vpb
        x = jnp.concatenate([xa, xb_], axis=1)
        v_prime = jnp.concatenate([vpa, vpb], axis=1)
        logdet = logdet + jnp.sum(sx, axis=1)

    scale_v2 = full_net(x, V1, True)
    v_out = v_prime * jnp.exp(0.5 * scale_v2) - 0.5 * delta_t * full_net(x, F1, False)
    logdet = logdet + 0.5 * jnp.sum(scale_v2, axis=1)
    return x[:, :, None, None], v_out, logdet


# --------------------------------- param init -----------------------------------------
def init_params(key, in_channels, hidden_dim, hidden_depth):
    d1 = in_channels // 2 + in_channels % 2
    d2 = in_channels // 2
    n_half, n_full = 6, 4
    ks = list(jax.random.split(key, 12))

    def w(k, shape, fan_in):
        return (jax.random.normal(k, shape, jnp.float32)
                / math.sqrt(fan_in)).astype(jnp.bfloat16)     # bf16 MXU operands

    def b(k, shape):
        return 0.1 * jax.random.normal(k, shape, jnp.float32)

    return dict(
        wh_in=w(ks[0], (n_half, d1, hidden_dim), d1),
        bh_in=b(ks[1], (n_half, 1, hidden_dim)),
        wh_mid=w(ks[2], (n_half, hidden_depth, hidden_dim, hidden_dim), hidden_dim),
        bh_mid=b(ks[3], (n_half, hidden_depth, 1, hidden_dim)),
        wh_out=w(ks[4], (n_half, hidden_dim, d2), hidden_dim),
        bh_out=b(ks[5], (n_half, 1, d2)),
        wf_in=w(ks[6], (n_full, in_channels, hidden_dim), in_channels),
        bf_in=b(ks[7], (n_full, 1, hidden_dim)),
        wf_mid=w(ks[8], (n_full, hidden_depth, hidden_dim, hidden_dim), hidden_dim),
        bf_mid=b(ks[9], (n_full, hidden_depth, 1, hidden_dim)),
        wf_out=w(ks[10], (n_full, hidden_dim, in_channels), hidden_dim),
        bf_out=b(ks[11], (n_full, 1, in_channels)),
    )


# ------------------------------------- main --------------------------------------------
if __name__ == "__main__":
    N = 64
    in_channels = 16
    hidden_dim = 128          # lane-aligned hidden width (MXU friendly)
    hidden_depth = 2
    delta_t = 0.75

    key = jax.random.PRNGKey(0)
    k_x, k_v, k_p = jax.random.split(key, 3)
    x4 = jax.random.normal(k_x, (N, in_channels, 1, 1), dtype=jnp.float32)
    v = jax.random.normal(k_v, (N, in_channels), dtype=jnp.float32)
    params = init_params(k_p, in_channels, hidden_dim, hidden_depth)

    x_out, v_out, logdet = extended_leapfrog_forward(x4, v, params, delta_t,
                                                     block_n=32)
    jax.block_until_ready((x_out, v_out, logdet))

    x_ref, v_ref, ld_ref = reference_forward(x4, v, params, delta_t)

    assert x_out.shape == (N, in_channels, 1, 1)
    assert v_out.shape == (N, in_channels)
    assert logdet.shape == (N,)
    assert jnp.allclose(x_out, x_ref, rtol=5e-3, atol=5e-3), "x mismatch vs reference"
    assert jnp.allclose(v_out, v_ref, rtol=5e-3, atol=5e-3), "v mismatch vs reference"
    assert jnp.allclose(logdet, ld_ref, rtol=5e-3, atol=5e-3), "logdet mismatch vs reference"

    print("KERNEL_OK")
</pallas_src>

<mosaic_0001>
module attributes {stable_mosaic.version = 11 : i64} {
  func.func @_leapfrog_kernel(%arg0: i32, %arg1: memref<32x16xf32, #tpu.memory_space<vmem>>, %arg2: memref<32x16xf32, #tpu.memory_space<vmem>>, %arg3: memref<6x8x128xbf16, #tpu.memory_space<vmem>>, %arg4: memref<6x1x128xf32, #tpu.memory_space<vmem>>, %arg5: memref<6x2x128x128xbf16, #tpu.memory_space<vmem>>, %arg6: memref<6x2x1x128xf32, #tpu.memory_space<vmem>>, %arg7: memref<6x128x8xbf16, #tpu.memory_space<vmem>>, %arg8: memref<6x1x8xf32, #tpu.memory_space<vmem>>, %arg9: memref<4x16x128xbf16, #tpu.memory_space<vmem>>, %arg10: memref<4x1x128xf32, #tpu.memory_space<vmem>>, %arg11: memref<4x2x128x128xbf16, #tpu.memory_space<vmem>>, %arg12: memref<4x2x1x128xf32, #tpu.memory_space<vmem>>, %arg13: memref<4x128x16xbf16, #tpu.memory_space<vmem>>, %arg14: memref<4x1x16xf32, #tpu.memory_space<vmem>>, %arg15: memref<32x16xf32, #tpu.memory_space<vmem>>, %arg16: memref<32x16xf32, #tpu.memory_space<vmem>>, %arg17: memref<32x128xf32, #tpu.memory_space<vmem>>) attributes {dimension_semantics = [#tpu.dimension_semantics<parallel>], iteration_bounds = array<i64: 2>, scalar_prefetch = 0 : i64, scratch_operands = 0 : i64, tpu.core_type = #tpu.core_type<tc>, window_params = [{transform_indices = @transform_0, window_bounds = array<i64: 32, 16>}, {transform_indices = @transform_1, window_bounds = array<i64: 32, 16>}, {pipeline_mode = #tpu.pipeline_mode<synchronous>, transform_indices = @transform_2, window_bounds = array<i64: 6, 8, 128>}, {pipeline_mode = #tpu.pipeline_mode<synchronous>, transform_indices = @transform_3, window_bounds = array<i64: 6, 1, 128>}, {pipeline_mode = #tpu.pipeline_mode<synchronous>, transform_indices = @transform_4, window_bounds = array<i64: 6, 2, 128, 128>}, {pipeline_mode = #tpu.pipeline_mode<synchronous>, transform_indices = @transform_5, window_bounds = array<i64: 6, 2, 1, 128>}, {pipeline_mode = #tpu.pipeline_mode<synchronous>, transform_indices = @transform_6, window_bounds = array<i64: 6, 128, 8>}, {pipeline_mode = #tpu.pipeline_mode<synchronous>, transform_indices = @transform_7, window_bounds = array<i64: 6, 1, 8>}, {pipeline_mode = #tpu.pipeline_mode<synchronous>, transform_indices = @transform_8, window_bounds = array<i64: 4, 16, 128>}, {pipeline_mode = #tpu.pipeline_mode<synchronous>, transform_indices = @transform_9, window_bounds = array<i64: 4, 1, 128>}, {pipeline_mode = #tpu.pipeline_mode<synchronous>, transform_indices = @transform_10, window_bounds = array<i64: 4, 2, 128, 128>}, {pipeline_mode = #tpu.pipeline_mode<synchronous>, transform_indices = @transform_11, window_bounds = array<i64: 4, 2, 1, 128>}, {pipeline_mode = #tpu.pipeline_mode<synchronous>, transform_indices = @transform_12, window_bounds = array<i64: 4, 128, 16>}, {pipeline_mode = #tpu.pipeline_mode<synchronous>, transform_indices = @transform_13, window_bounds = array<i64: 4, 1, 16>}, {transform_indices = @transform_14, window_bounds = array<i64: 32, 16>}, {transform_indices = @transform_15, window_bounds = array<i64: 32, 16>}, {transform_indices = @transform_16, window_bounds = array<i64: 32, 128>}]} {
    %c0 = arith.constant 0 : index
    %c0_0 = arith.constant 0 : index
    %0 = vector.load %arg1[%c0, %c0_0] : memref<32x16xf32, #tpu.memory_space<vmem>>, vector<32x16xf32>
    %c0_1 = arith.constant 0 : index
    %c0_2 = arith.constant 0 : index
    %1 = vector.load %arg2[%c0_1, %c0_2] : memref<32x16xf32, #tpu.memory_space<vmem>>, vector<32x16xf32>
    %c2 = arith.constant 2 : index
    %c0_3 = arith.constant 0 : index
    %c0_4 = arith.constant 0 : index
    %2 = vector.load %arg9[%c2, %c0_3, %c0_4] : memref<4x16x128xbf16, #tpu.memory_space<vmem>>, vector<1x16x128xbf16>
    %3 = vector.shape_cast %2 : vector<1x16x128xbf16> to vector<16x128xbf16>
    %c2_5 = arith.constant 2 : index
    %c0_6 = arith.constant 0 : index
    %c0_7 = arith.constant 0 : index
    %4 = vector.load %arg10[%c2_5, %c0_6, %c0_7] : memref<4x1x128xf32, #tpu.memory_space<vmem>>, vector<1x1x128xf32>
    %5 = vector.shape_cast %4 : vector<1x1x128xf32> to vector<1x128xf32>
    %c2_8 = arith.constant 2 : index
    %c0_9 = arith.constant 0 : index
    %c0_10 = arith.constant 0 : index
    %c0_11 = arith.constant 0 : index
    %6 = vector.load %arg11[%c2_8, %c0_9, %c0_10, %c0_11] : memref<4x2x128x128xbf16, #tpu.memory_space<vmem>>, vector<1x2x128x128xbf16>
    %7 = vector.shape_cast %6 : vector<1x2x128x128xbf16> to vector<2x128x128xbf16>
    %c2_12 = arith.constant 2 : index
    %c0_13 = arith.constant 0 : index
    %c0_14 = arith.constant 0 : index
    %c0_15 = arith.constant 0 : index
    %8 = vector.load %arg12[%c2_12, %c0_13, %c0_14, %c0_15] : memref<4x2x1x128xf32, #tpu.memory_space<vmem>>, vector<1x2x1x128xf32>
    %9 = vector.shape_cast %8 : vector<1x2x1x128xf32> to vector<2x1x128xf32>
    %c2_16 = arith.constant 2 : index
    %c0_17 = arith.constant 0 : index
    %c0_18 = arith.constant 0 : index
    %10 = vector.load %arg13[%c2_16, %c0_17, %c0_18] : memref<4x128x16xbf16, #tpu.memory_space<vmem>>, vector<1x128x16xbf16>
    %11 = vector.shape_cast %10 : vector<1x128x16xbf16> to vector<128x16xbf16>
    %c2_19 = arith.constant 2 : index
    %c0_20 = arith.constant 0 : index
    %c0_21 = arith.constant 0 : index
    %12 = vector.load %arg14[%c2_19, %c0_20, %c0_21] : memref<4x1x16xf32, #tpu.memory_space<vmem>>, vector<1x1x16xf32>
    %13 = vector.shape_cast %12 : vector<1x1x16xf32> to vector<1x16xf32>
    %14 = arith.truncf %0 : vector<32x16xf32> to vector<32x16xbf16>
    %cst = arith.constant dense<0.000000e+00> : vector<32x128xf32>
    %15 = tpu.matmul %14, %3, %cst {dimension_numbers = #tpu.dot_dimension_numbers<[1], [0], [0], [1], [0, 0, 1, 1], [], []>} : vector<32x16xbf16>, vector<16x128xbf16>, vector<32x128xf32> -> vector<32x128xf32>
    %16 = vector.broadcast %5 : vector<1x128xf32> to vector<32x128xf32>
    %17 = arith.addf %15, %16 : vector<32x128xf32>
    %cst_22 = arith.constant 0.00999999977 : f32
    %18 = vector.broadcast %cst_22 : f32 to vector<32x128xf32>
    %19 = arith.mulf %18, %17 : vector<32x128xf32>
    %20 = arith.maximumf %17, %19 : vector<32x128xf32>
    %21 = arith.truncf %20 : vector<32x128xf32> to vector<32x128xbf16>
    %22 = vector.extract_strided_slice %7 {offsets = [0, 0, 0], sizes = [1, 128, 128], strides = [1, 1, 1]} : vector<2x128x128xbf16> to vector<1x128x128xbf16>
    %23 = vector.shape_cast %22 : vector<1x128x128xbf16> to vector<128x128xbf16>
    %cst_23 = arith.constant dense<0.000000e+00> : vector<32x128xf32>
    %24 = tpu.matmul %21, %23, %cst_23 {dimension_numbers = #tpu.dot_dimension_numbers<[1], [0], [0], [1], [0, 0, 1, 1], [], []>} : vector<32x128xbf16>, vector<128x128xbf16>, vector<32x128xf32> -> vector<32x128xf32>
    %25 = vector.extract_strided_slice %9 {offsets = [0, 0, 0], sizes = [1, 1, 128], strides = [1, 1, 1]} : vector<2x1x128xf32> to vector<1x1x128xf32>
    %26 = vector.shape_cast %25 : vector<1x1x128xf32> to vector<1x128xf32>
    %27 = vector.broadcast %26 : vector<1x128xf32> to vector<32x128xf32>
    %28 = arith.addf %24, %27 : vector<32x128xf32>
    %cst_24 = arith.constant 0.00999999977 : f32
    %29 = vector.broadcast %cst_24 : f32 to vector<32x128xf32>
    %30 = arith.mulf %29, %28 : vector<32x128xf32>
    %31 = arith.maximumf %28, %30 : vector<32x128xf32>
    %32 = arith.truncf %31 : vector<32x128xf32> to vector<32x128xbf16>
    %33 = vector.extract_strided_slice %7 {offsets = [1, 0, 0], sizes = [1, 128, 128], strides = [1, 1, 1]} : vector<2x128x128xbf16> to vector<1x128x128xbf16>
    %34 = vector.shape_cast %33 : vector<1x128x128xbf16> to vector<128x128xbf16>
    %cst_25 = arith.constant dense<0.000000e+00> : vector<32x128xf32>
    %35 = tpu.matmul %32, %34, %cst_25 {dimension_numbers = #tpu.dot_dimension_numbers<[1], [0], [0], [1], [0, 0, 1, 1], [], []>} : vector<32x128xbf16>, vector<128x128xbf16>, vector<32x128xf32> -> vector<32x128xf32>
    %36 = vector.extract_strided_slice %9 {offsets = [1, 0, 0], sizes = [1, 1, 128], strides = [1, 1, 1]} : vector<2x1x128xf32> to vector<1x1x128xf32>
    %37 = vector.shape_cast %36 : vector<1x1x128xf32> to vector<1x128xf32>
    %38 = vector.broadcast %37 : vector<1x128xf32> to vector<32x128xf32>
    %39 = arith.addf %35, %38 : vector<32x128xf32>
    %cst_26 = arith.constant 0.00999999977 : f32
    %40 = vector.broadcast %cst_26 : f32 to vector<32x128xf32>
    %41 = arith.mulf %40, %39 : vector<32x128xf32>
    %42 = arith.maximumf %39, %41 : vector<32x128xf32>
    %43 = arith.truncf %42 : vector<32x128xf32> to vector<32x128xbf16>
    %cst_27 = arith.constant dense<0.000000e+00> : vector<32x16xf32>
    %44 = tpu.matmul %43, %11, %cst_27 {dimension_numbers = #tpu.dot_dimension_numbers<[1], [0], [0], [1], [0, 0, 1, 1], [], []>} : vector<32x128xbf16>, vector<128x16xbf16>, vector<32x16xf32> -> vector<32x16xf32>
    %45 = vector.broadcast %13 : vector<1x16xf32> to vector<32x16xf32>
    %46 = arith.addf %44, %45 : vector<32x16xf32>
    %47 = math.tanh %46 : vector<32x16xf32>
    %cst_28 = arith.constant 5.000000e-01 : f32
    %48 = vector.broadcast %cst_28 : f32 to vector<32x16xf32>
    %49 = arith.mulf %48, %47 : vector<32x16xf32>
    %50 = math.exp %49 : vector<32x16xf32>
    %51 = arith.mulf %1, %50 : vector<32x16xf32>
    %c0_29 = arith.constant 0 : index
    %c0_30 = arith.constant 0 : index
    %c0_31 = arith.constant 0 : index
    %52 = vector.load %arg9[%c0_29, %c0_30, %c0_31] : memref<4x16x128xbf16, #tpu.memory_space<vmem>>, vector<1x16x128xbf16>
    %53 = vector.shape_cast %52 : vector<1x16x128xbf16> to vector<16x128xbf16>
    %c0_32 = arith.constant 0 : index
    %c0_33 = arith.constant 0 : index
    %c0_34 = arith.constant 0 : index
    %54 = vector.load %arg10[%c0_32, %c0_33, %c0_34] : memref<4x1x128xf32, #tpu.memory_space<vmem>>, vector<1x1x128xf32>
    %55 = vector.shape_cast %54 : vector<1x1x128xf32> to vector<1x128xf32>
    %c0_35 = arith.constant 0 : index
    %c0_36 = arith.constant 0 : index
    %c0_37 = arith.constant 0 : index
    %c0_38 = arith.constant 0 : index
    %56 = vector.load %arg11[%c0_35, %c0_36, %c0_37, %c0_38] : memref<4x2x128x128xbf16, #tpu.memory_space<vmem>>, vector<1x2x128x128xbf16>
    %57 = vector.shape_cast %56 : vector<1x2x128x128xbf16> to vector<2x128x128xbf16>
    %c0_39 = arith.constant 0 : index
    %c0_40 = arith.constant 0 : index
    %c0_41 = arith.constant 0 : index
    %c0_42 = arith.constant 0 : index
    %58 = vector.load %arg12[%c0_39, %c0_40, %c0_41, %c0_42] : memref<4x2x1x128xf32, #tpu.memory_space<vmem>>, vector<1x2x1x128xf32>
    %59 = vector.shape_cast %58 : vector<1x2x1x128xf32> to vector<2x1x128xf32>
    %c0_43 = arith.constant 0 : index
    %c0_44 = arith.constant 0 : index
    %c0_45 = arith.constant 0 : index
    %60 = vector.load %arg13[%c0_43, %c0_44, %c0_45] : memref<4x128x16xbf16, #tpu.memory_space<vmem>>, vector<1x128x16xbf16>
    %61 = vector.shape_cast %60 : vector<1x128x16xbf16> to vector<128x16xbf16>
    %c0_46 = arith.constant 0 : index
    %c0_47 = arith.constant 0 : index
    %c0_48 = arith.constant 0 : index
    %62 = vector.load %arg14[%c0_46, %c0_47, %c0_48] : memref<4x1x16xf32, #tpu.memory_space<vmem>>, vector<1x1x16xf32>
    %63 = vector.shape_cast %62 : vector<1x1x16xf32> to vector<1x16xf32>
    %64 = arith.truncf %0 : vector<32x16xf32> to vector<32x16xbf16>
    %cst_49 = arith.constant dense<0.000000e+00> : vector<32x128xf32>
    %65 = tpu.matmul %64, %53, %cst_49 {dimension_numbers = #tpu.dot_dimension_numbers<[1], [0], [0], [1], [0, 0, 1, 1], [], []>} : vector<32x16xbf16>, vector<16x128xbf16>, vector<32x128xf32> -> vector<32x128xf32>
    %66 = vector.broadcast %55 : vector<1x128xf32> to vector<32x128xf32>
    %67 = arith.addf %65, %66 : vector<32x128xf32>
    %cst_50 = arith.constant 0.00999999977 : f32
    %68 = vector.broadcast %cst_50 : f32 to vector<32x128xf32>
    %69 = arith.mulf %68, %67 : vector<32x128xf32>
    %70 = arith.maximumf %67, %69 : vector<32x128xf32>
    %71 = arith.truncf %70 : vector<32x128xf32> to vector<32x128xbf16>
    %72 = vector.extract_strided_slice %57 {offsets = [0, 0, 0], sizes = [1, 128, 128], strides = [1, 1, 1]} : vector<2x128x128xbf16> to vector<1x128x128xbf16>
    %73 = vector.shape_cast %72 : vector<1x128x128xbf16> to vector<128x128xbf16>
    %cst_51 = arith.constant dense<0.000000e+00> : vector<32x128xf32>
    %74 = tpu.matmul %71, %73, %cst_51 {dimension_numbers = #tpu.dot_dimension_numbers<[1], [0], [0], [1], [0, 0, 1, 1], [], []>} : vector<32x128xbf16>, vector<128x128xbf16>, vector<32x128xf32> -> vector<32x128xf32>
    %75 = vector.extract_strided_slice %59 {offsets = [0, 0, 0], sizes = [1, 1, 128], strides = [1, 1, 1]} : vector<2x1x128xf32> to vector<1x1x128xf32>
    %76 = vector.shape_cast %75 : vector<1x1x128xf32> to vector<1x128xf32>
    %77 = vector.broadcast %76 : vector<1x128xf32> to vector<32x128xf32>
    %78 = arith.addf %74, %77 : vector<32x128xf32>
    %cst_52 = arith.constant 0.00999999977 : f32
    %79 = vector.broadcast %cst_52 : f32 to vector<32x128xf32>
    %80 = arith.mulf %79, %78 : vector<32x128xf32>
    %81 = arith.maximumf %78, %80 : vector<32x128xf32>
    %82 = arith.truncf %81 : vector<32x128xf32> to vector<32x128xbf16>
    %83 = vector.extract_strided_slice %57 {offsets = [1, 0, 0], sizes = [1, 128, 128], strides = [1, 1, 1]} : vector<2x128x128xbf16> to vector<1x128x128xbf16>
    %84 = vector.shape_cast %83 : vector<1x128x128xbf16> to vector<128x128xbf16>
    %cst_53 = arith.constant dense<0.000000e+00> : vector<32x128xf32>
    %85 = tpu.matmul %82, %84, %cst_53 {dimension_numbers = #tpu.dot_dimension_numbers<[1], [0], [0], [1], [0, 0, 1, 1], [], []>} : vector<32x128xbf16>, vector<128x128xbf16>, vector<32x128xf32> -> vector<32x128xf32>
    %86 = vector.extract_strided_slice %59 {offsets = [1, 0, 0], sizes = [1, 1, 128], strides = [1, 1, 1]} : vector<2x1x128xf32> to vector<1x1x128xf32>
    %87 = vector.shape_cast %86 : vector<1x1x128xf32> to vector<1x128xf32>
    %88 = vector.broadcast %87 : vector<1x128xf32> to vector<32x128xf32>
    %89 = arith.addf %85, %88 : vector<32x128xf32>
    %cst_54 = arith.constant 0.00999999977 : f32
    %90 = vector.broadcast %cst_54 : f32 to vector<32x128xf32>
    %91 = arith.mulf %90, %89 : vector<32x128xf32>
    %92 = arith.maximumf %89, %91 : vector<32x128xf32>
    %93 = arith.truncf %92 : vector<32x128xf32> to vector<32x128xbf16>
    %cst_55 = arith.constant dense<0.000000e+00> : vector<32x16xf32>
    %94 = tpu.matmul %93, %61, %cst_55 {dimension_numbers = #tpu.dot_dimension_numbers<[1], [0], [0], [1], [0, 0, 1, 1], [], []>} : vector<32x128xbf16>, vector<128x16xbf16>, vector<32x16xf32> -> vector<32x16xf32>
    %95 = vector.broadcast %63 : vector<1x16xf32> to vector<32x16xf32>
    %96 = arith.addf %94, %95 : vector<32x16xf32>
    %cst_56 = arith.constant 3.750000e-01 : f32
    %97 = vector.broadcast %cst_56 : f32 to vector<32x16xf32>
    %98 = arith.mulf %97, %96 : vector<32x16xf32>
    %99 = arith.subf %51, %98 : vector<32x16xf32>
    %100 = vector.extract_strided_slice %0 {offsets = [0, 0], sizes = [32, 8], strides = [1, 1]} : vector<32x16xf32> to vector<32x8xf32>
    %101 = vector.extract_strided_slice %0 {offsets = [0, 8], sizes = [32, 8], strides = [1, 1]} : vector<32x16xf32> to vector<32x8xf32>
    %102 = vector.extract_strided_slice %99 {offsets = [0, 0], sizes = [32, 8], strides = [1, 1]} : vector<32x16xf32> to vector<32x8xf32>
    %103 = vector.extract_strided_slice %99 {offsets = [0, 8], sizes = [32, 8], strides = [1, 1]} : vector<32x16xf32> to vector<32x8xf32>
    %c0_57 = arith.constant 0 : index
    %c0_58 = arith.constant 0 : index
    %c0_59 = arith.constant 0 : index
    %104 = vector.load %arg3[%c0_57, %c0_58, %c0_59] : memref<6x8x128xbf16, #tpu.memory_space<vmem>>, vector<1x8x128xbf16>
    %105 = vector.shape_cast %104 : vector<1x8x128xbf16> to vector<8x128xbf16>
    %c0_60 = arith.constant 0 : index
    %c0_61 = arith.constant 0 : index
    %c0_62 = arith.constant 0 : index
    %106 = vector.load %arg4[%c0_60, %c0_61, %c0_62] : memref<6x1x128xf32, #tpu.memory_space<vmem>>, vector<1x1x128xf32>
    %107 = vector.shape_cast %106 : vector<1x1x128xf32> to vector<1x128xf32>
    %c0_63 = arith.constant 0 : index
    %c0_64 = arith.constant 0 : index
    %c0_65 = arith.constant 0 : index
    %c0_66 = arith.constant 0 : index
    %108 = vector.load %arg5[%c0_63, %c0_64, %c0_65, %c0_66] : memref<6x2x128x128xbf16, #tpu.memory_space<vmem>>, vector<1x2x128x128xbf16>
    %109 = vector.shape_cast %108 : vector<1x2x128x128xbf16> to vector<2x128x128xbf16>
    %c0_67 = arith.constant 0 : index
    %c0_68 = arith.constant 0 : index
    %c0_69 = arith.constant 0 : index
    %c0_70 = arith.constant 0 : index
    %110 = vector.load %arg6[%c0_67, %c0_68, %c0_69, %c0_70] : memref<6x2x1x128xf32, #tpu.memory_space<vmem>>, vector<1x2x1x128xf32>
    %111 = vector.shape_cast %110 : vector<1x2x1x128xf32> to vector<2x1x128xf32>
    %c0_71 = arith.constant 0 : index
    %c0_72 = arith.constant 0 : index
    %c0_73 = arith.constant 0 : index
    %112 = vector.load %arg7[%c0_71, %c0_72, %c0_73] : memref<6x128x8xbf16, #tpu.memory_space<vmem>>, vector<1x128x8xbf16>
    %113 = vector.shape_cast %112 : vector<1x128x8xbf16> to vector<128x8xbf16>
    %c0_74 = arith.constant 0 : index
    %c0_75 = arith.constant 0 : index
    %c0_76 = arith.constant 0 : index
    %114 = vector.load %arg8[%c0_74, %c0_75, %c0_76] : memref<6x1x8xf32, #tpu.memory_space<vmem>>, vector<1x1x8xf32>
    %115 = vector.shape_cast %114 : vector<1x1x8xf32> to vector<1x8xf32>
    %116 = arith.truncf %100 : vector<32x8xf32> to vector<32x8xbf16>
    %cst_77 = arith.constant dense<0.000000e+00> : vector<32x128xf32>
    %117 = tpu.matmul %116, %105, %cst_77 {dimension_numbers = #tpu.dot_dimension_numbers<[1], [0], [0], [1], [0, 0, 1, 1], [], []>} : vector<32x8xbf16>, vector<8x128xbf16>, vector<32x128xf32> -> vector<32x128xf32>
    %118 = vector.broadcast %107 : vector<1x128xf32> to vector<32x128xf32>
    %119 = arith.addf %117, %118 : vector<32x128xf32>
    %cst_78 = arith.constant 0.00999999977 : f32
    %120 = vector.broadcast %cst_78 : f32 to vector<32x128xf32>
    %121 = arith.mulf %120, %119 : vector<32x128xf32>
    %122 = arith.maximumf %119, %121 : vector<32x128xf32>
    %123 = arith.truncf %122 : vector<32x128xf32> to vector<32x128xbf16>
    %124 = vector.extract_strided_slice %109 {offsets = [0, 0, 0], sizes = [1, 128, 128], strides = [1, 1, 1]} : vector<2x128x128xbf16> to vector<1x128x128xbf16>
    %125 = vector.shape_cast %124 : vector<1x128x128xbf16> to vector<128x128xbf16>
    %cst_79 = arith.constant dense<0.000000e+00> : vector<32x128xf32>
    %126 = tpu.matmul %123, %125, %cst_79 {dimension_numbers = #tpu.dot_dimension_numbers<[1], [0], [0], [1], [0, 0, 1, 1], [], []>} : vector<32x128xbf16>, vector<128x128xbf16>, vector<32x128xf32> -> vector<32x128xf32>
    %127 = vector.extract_strided_slice %111 {offsets = [0, 0, 0], sizes = [1, 1, 128], strides = [1, 1, 1]} : vector<2x1x128xf32> to vector<1x1x128xf32>
    %128 = vector.shape_cast %127 : vector<1x1x128xf32> to vector<1x128xf32>
    %129 = vector.broadcast %128 : vector<1x128xf32> to vector<32x128xf32>
    %130 = arith.addf %126, %129 : vector<32x128xf32>
    %cst_80 = arith.constant 0.00999999977 : f32
    %131 = vector.broadcast %cst_80 : f32 to vector<32x128xf32>
    %132 = arith.mulf %131, %130 : vector<32x128xf32>
    %133 = arith.maximumf %130, %132 : vector<32x128xf32>
    %134 = arith.truncf %133 : vector<32x128xf32> to vector<32x128xbf16>
    %135 = vector.extract_strided_slice %109 {offsets = [1, 0, 0], sizes = [1, 128, 128], strides = [1, 1, 1]} : vector<2x128x128xbf16> to vector<1x128x128xbf16>
    %136 = vector.shape_cast %135 : vector<1x128x128xbf16> to vector<128x128xbf16>
    %cst_81 = arith.constant dense<0.000000e+00> : vector<32x128xf32>
    %137 = tpu.matmul %134, %136, %cst_81 {dimension_numbers = #tpu.dot_dimension_numbers<[1], [0], [0], [1], [0, 0, 1, 1], [], []>} : vector<32x128xbf16>, vector<128x128xbf16>, vector<32x128xf32> -> vector<32x128xf32>
    %138 = vector.extract_strided_slice %111 {offsets = [1, 0, 0], sizes = [1, 1, 128], strides = [1, 1, 1]} : vector<2x1x128xf32> to vector<1x1x128xf32>
    %139 = vector.shape_cast %138 : vector<1x1x128xf32> to vector<1x128xf32>
    %140 = vector.broadcast %139 : vector<1x128xf32> to vector<32x128xf32>
    %141 = arith.addf %137, %140 : vector<32x128xf32>
    %cst_82 = arith.constant 0.00999999977 : f32
    %142 = vector.broadcast %cst_82 : f32 to vector<32x128xf32>
    %143 = arith.mulf %142, %141 : vector<32x128xf32>
    %144 = arith.maximumf %141, %143 : vector<32x128xf32>
    %145 = arith.truncf %144 : vector<32x128xf32> to vector<32x128xbf16>
    %cst_83 = arith.constant dense<0.000000e+00> : vector<32x8xf32>
    %146 = tpu.matmul %145, %113, %cst_83 {dimension_numbers = #tpu.dot_dimension_numbers<[1], [0], [0], [1], [0, 0, 1, 1], [], []>} : vector<32x128xbf16>, vector<128x8xbf16>, vector<32x8xf32> -> vector<32x8xf32>
    %147 = vector.broadcast %115 : vector<1x8xf32> to vector<32x8xf32>
    %148 = arith.addf %146, %147 : vector<32x8xf32>
    %149 = math.tanh %148 : vector<32x8xf32>
    %150 = math.exp %149 : vector<32x8xf32>
    %151 = arith.mulf %101, %150 : vector<32x8xf32>
    %c2_84 = arith.constant 2 : index
    %c0_85 = arith.constant 0 : index
    %c0_86 = arith.constant 0 : index
    %152 = vector.load %arg3[%c2_84, %c0_85, %c0_86] : memref<6x8x128xbf16, #tpu.memory_space<vmem>>, vector<1x8x128xbf16>
    %153 = vector.shape_cast %152 : vector<1x8x128xbf16> to vector<8x128xbf16>
    %c2_87 = arith.constant 2 : index
    %c0_88 = arith.constant 0 : index
    %c0_89 = arith.constant 0 : index
    %154 = vector.load %arg4[%c2_87, %c0_88, %c0_89] : memref<6x1x128xf32, #tpu.memory_space<vmem>>, vector<1x1x128xf32>
    %155 = vector.shape_cast %154 : vector<1x1x128xf32> to vector<1x128xf32>
    %c2_90 = arith.constant 2 : index
    %c0_91 = arith.constant 0 : index
    %c0_92 = arith.constant 0 : index
    %c0_93 = arith.constant 0 : index
    %156 = vector.load %arg5[%c2_90, %c0_91, %c0_92, %c0_93] : memref<6x2x128x128xbf16, #tpu.memory_space<vmem>>, vector<1x2x128x128xbf16>
    %157 = vector.shape_cast %156 : vector<1x2x128x128xbf16> to vector<2x128x128xbf16>
    %c2_94 = arith.constant 2 : index
    %c0_95 = arith.constant 0 : index
    %c0_96 = arith.constant 0 : index
    %c0_97 = arith.constant 0 : index
    %158 = vector.load %arg6[%c2_94, %c0_95, %c0_96, %c0_97] : memref<6x2x1x128xf32, #tpu.memory_space<vmem>>, vector<1x2x1x128xf32>
    %159 = vector.shape_cast %158 : vector<1x2x1x128xf32> to vector<2x1x128xf32>
    %c2_98 = arith.constant 2 : index
    %c0_99 = arith.constant 0 : index
    %c0_100 = arith.constant 0 : index
    %160 = vector.load %arg7[%c2_98, %c0_99, %c0_100] : memref<6x128x8xbf16, #tpu.memory_space<vmem>>, vector<1x128x8xbf16>
    %161 = vector.shape_cast %160 : vector<1x128x8xbf16> to vector<128x8xbf16>
    %c2_101 = arith.constant 2 : index
    %c0_102 = arith.constant 0 : index
    %c0_103 = arith.constant 0 : index
    %162 = vector.load %arg8[%c2_101, %c0_102, %c0_103] : memref<6x1x8xf32, #tpu.memory_space<vmem>>, vector<1x1x8xf32>
    %163 = vector.shape_cast %162 : vector<1x1x8xf32> to vector<1x8xf32>
    %164 = arith.truncf %100 : vector<32x8xf32> to vector<32x8xbf16>
    %cst_104 = arith.constant dense<0.000000e+00> : vector<32x128xf32>
    %165 = tpu.matmul %164, %153, %cst_104 {dimension_numbers = #tpu.dot_dimension_numbers<[1], [0], [0], [1], [0, 0, 1, 1], [], []>} : vector<32x8xbf16>, vector<8x128xbf16>, vector<32x128xf32> -> vector<32x128xf32>
    %166 = vector.broadcast %155 : vector<1x128xf32> to vector<32x128xf32>
    %167 = arith.addf %165, %166 : vector<32x128xf32>
    %cst_105 = arith.constant 0.00999999977 : f32
    %168 = vector.broadcast %cst_105 : f32 to vector<32x128xf32>
    %169 = arith.mulf %168, %167 : vector<32x128xf32>
    %170 = arith.maximumf %167, %169 : vector<32x128xf32>
    %171 = arith.truncf %170 : vector<32x128xf32> to vector<32x128xbf16>
    %172 = vector.extract_strided_slice %157 {offsets = [0, 0, 0], sizes = [1, 128, 128], strides = [1, 1, 1]} : vector<2x128x128xbf16> to vector<1x128x128xbf16>
    %173 = vector.shape_cast %172 : vector<1x128x128xbf16> to vector<128x128xbf16>
    %cst_106 = arith.constant dense<0.000000e+00> : vector<32x128xf32>
    %174 = tpu.matmul %171, %173, %cst_106 {dimension_numbers = #tpu.dot_dimension_numbers<[1], [0], [0], [1], [0, 0, 1, 1], [], []>} : vector<32x128xbf16>, vector<128x128xbf16>, vector<32x128xf32> -> vector<32x128xf32>
    %175 = vector.extract_strided_slice %159 {offsets = [0, 0, 0], sizes = [1, 1, 128], strides = [1, 1, 1]} : vector<2x1x128xf32> to vector<1x1x128xf32>
    %176 = vector.shape_cast %175 : vector<1x1x128xf32> to vector<1x128xf32>
    %177 = vector.broadcast %176 : vector<1x128xf32> to vector<32x128xf32>
    %178 = arith.addf %174, %177 : vector<32x128xf32>
    %cst_107 = arith.constant 0.00999999977 : f32
    %179 = vector.broadcast %cst_107 : f32 to vector<32x128xf32>
    %180 = arith.mulf %179, %178 : vector<32x128xf32>
    %181 = arith.maximumf %178, %180 : vector<32x128xf32>
    %182 = arith.truncf %181 : vector<32x128xf32> to vector<32x128xbf16>
    %183 = vector.extract_strided_slice %157 {offsets = [1, 0, 0], sizes = [1, 128, 128], strides = [1, 1, 1]} : vector<2x128x128xbf16> to vector<1x128x128xbf16>
    %184 = vector.shape_cast %183 : vector<1x128x128xbf16> to vector<128x128xbf16>
    %cst_108 = arith.constant dense<0.000000e+00> : vector<32x128xf32>
    %185 = tpu.matmul %182, %184, %cst_108 {dimension_numbers = #tpu.dot_dimension_numbers<[1], [0], [0], [1], [0, 0, 1, 1], [], []>} : vector<32x128xbf16>, vector<128x128xbf16>, vector<32x128xf32> -> vector<32x128xf32>
    %186 = vector.extract_strided_slice %159 {offsets = [1, 0, 0], sizes = [1, 1, 128], strides = [1, 1, 1]} : vector<2x1x128xf32> to vector<1x1x128xf32>
    %187 = vector.shape_cast %186 : vector<1x1x128xf32> to vector<1x128xf32>
    %188 = vector.broadcast %187 : vector<1x128xf32> to vector<32x128xf32>
    %189 = arith.addf %185, %188 : vector<32x128xf32>
    %cst_109 = arith.constant 0.00999999977 : f32
    %190 = vector.broadcast %cst_109 : f32 to vector<32x128xf32>
    %191 = arith.mulf %190, %189 : vector<32x128xf32>
    %192 = arith.maximumf %189, %191 : vector<32x128xf32>
    %193 = arith.truncf %192 : vector<32x128xf32> to vector<32x128xbf16>
    %cst_110 = arith.constant dense<0.000000e+00> : vector<32x8xf32>
    %194 = tpu.matmul %193, %161, %cst_110 {dimension_numbers = #tpu.dot_dimension_numbers<[1], [0], [0], [1], [0, 0, 1, 1], [], []>} : vector<32x128xbf16>, vector<128x8xbf16>, vector<32x8xf32> -> vector<32x8xf32>
    %195 = vector.broadcast %163 : vector<1x8xf32> to vector<32x8xf32>
    %196 = arith.addf %194, %195 : vector<32x8xf32>
    %197 = arith.addf %151, %196 : vector<32x8xf32>
    %c4 = arith.constant 4 : index
    %c0_111 = arith.constant 0 : index
    %c0_112 = arith.constant 0 : index
    %198 = vector.load %arg3[%c4, %c0_111, %c0_112] : memref<6x8x128xbf16, #tpu.memory_space<vmem>>, vector<1x8x128xbf16>
    %199 = vector.shape_cast %198 : vector<1x8x128xbf16> to vector<8x128xbf16>
    %c4_113 = arith.constant 4 : index
    %c0_114 = arith.constant 0 : index
    %c0_115 = arith.constant 0 : index
    %200 = vector.load %arg4[%c4_113, %c0_114, %c0_115] : memref<6x1x128xf32, #tpu.memory_space<vmem>>, vector<1x1x128xf32>
    %201 = vector.shape_cast %200 : vector<1x1x128xf32> to vector<1x128xf32>
    %c4_116 = arith.constant 4 : index
    %c0_117 = arith.constant 0 : index
    %c0_118 = arith.constant 0 : index
    %c0_119 = arith.constant 0 : index
    %202 = vector.load %arg5[%c4_116, %c0_117, %c0_118, %c0_119] : memref<6x2x128x128xbf16, #tpu.memory_space<vmem>>, vector<1x2x128x128xbf16>
    %203 = vector.shape_cast %202 : vector<1x2x128x128xbf16> to vector<2x128x128xbf16>
    %c4_120 = arith.constant 4 : index
    %c0_121 = arith.constant 0 : index
    %c0_122 = arith.constant 0 : index
    %c0_123 = arith.constant 0 : index
    %204 = vector.load %arg6[%c4_120, %c0_121, %c0_122, %c0_123] : memref<6x2x1x128xf32, #tpu.memory_space<vmem>>, vector<1x2x1x128xf32>
    %205 = vector.shape_cast %204 : vector<1x2x1x128xf32> to vector<2x1x128xf32>
    %c4_124 = arith.constant 4 : index
    %c0_125 = arith.constant 0 : index
    %c0_126 = arith.constant 0 : index
    %206 = vector.load %arg7[%c4_124, %c0_125, %c0_126] : memref<6x128x8xbf16, #tpu.memory_space<vmem>>, vector<1x128x8xbf16>
    %207 = vector.shape_cast %206 : vector<1x128x8xbf16> to vector<128x8xbf16>
    %c4_127 = arith.constant 4 : index
    %c0_128 = arith.constant 0 : index
    %c0_129 = arith.constant 0 : index
    %208 = vector.load %arg8[%c4_127, %c0_128, %c0_129] : memref<6x1x8xf32, #tpu.memory_space<vmem>>, vector<1x1x8xf32>
    %209 = vector.shape_cast %208 : vector<1x1x8xf32> to vector<1x8xf32>
    %210 = arith.truncf %100 : vector<32x8xf32> to vector<32x8xbf16>
    %cst_130 = arith.constant dense<0.000000e+00> : vector<32x128xf32>
    %211 = tpu.matmul %210, %199, %cst_130 {dimension_numbers = #tpu.dot_dimension_numbers<[1], [0], [0], [1], [0, 0, 1, 1], [], []>} : vector<32x8xbf16>, vector<8x128xbf16>, vector<32x128xf32> -> vector<32x128xf32>
    %212 = vector.broadcast %201 : vector<1x128xf32> to vector<32x128xf32>
    %213 = arith.addf %211, %212 : vector<32x128xf32>
    %cst_131 = arith.constant 0.00999999977 : f32
    %214 = vector.broadcast %cst_131 : f32 to vector<32x128xf32>
    %215 = arith.mulf %214, %213 : vector<32x128xf32>
    %216 = arith.maximumf %213, %215 : vector<32x128xf32>
    %217 = arith.truncf %216 : vector<32x128xf32> to vector<32x128xbf16>
    %218 = vector.extract_strided_slice %203 {offsets = [0, 0, 0], sizes = [1, 128, 128], strides = [1, 1, 1]} : vector<2x128x128xbf16> to vector<1x128x128xbf16>
    %219 = vector.shape_cast %218 : vector<1x128x128xbf16> to vector<128x128xbf16>
    %cst_132 = arith.constant dense<0.000000e+00> : vector<32x128xf32>
    %220 = tpu.matmul %217, %219, %cst_132 {dimension_numbers = #tpu.dot_dimension_numbers<[1], [0], [0], [1], [0, 0, 1, 1], [], []>} : vector<32x128xbf16>, vector<128x128xbf16>, vector<32x128xf32> -> vector<32x128xf32>
    %221 = vector.extract_strided_slice %205 {offsets = [0, 0, 0], sizes = [1, 1, 128], strides = [1, 1, 1]} : vector<2x1x128xf32> to vector<1x1x128xf32>
    %222 = vector.shape_cast %221 : vector<1x1x128xf32> to vector<1x128xf32>
    %223 = vector.broadcast %222 : vector<1x128xf32> to vector<32x128xf32>
    %224 = arith.addf %220, %223 : vector<32x128xf32>
    %cst_133 = arith.constant 0.00999999977 : f32
    %225 = vector.broadcast %cst_133 : f32 to vector<32x128xf32>
    %226 = arith.mulf %225, %224 : vector<32x128xf32>
    %227 = arith.maximumf %224, %226 : vector<32x128xf32>
    %228 = arith.truncf %227 : vector<32x128xf32> to vector<32x128xbf16>
    %229 = vector.extract_strided_slice %203 {offsets = [1, 0, 0], sizes = [1, 128, 128], strides = [1, 1, 1]} : vector<2x128x128xbf16> to vector<1x128x128xbf16>
    %230 = vector.shape_cast %229 : vector<1x128x128xbf16> to vector<128x128xbf16>
    %cst_134 = arith.constant dense<0.000000e+00> : vector<32x128xf32>
    %231 = tpu.matmul %228, %230, %cst_134 {dimension_numbers = #tpu.dot_dimension_numbers<[1], [0], [0], [1], [0, 0, 1, 1], [], []>} : vector<32x128xbf16>, vector<128x128xbf16>, vector<32x128xf32> -> vector<32x128xf32>
    %232 = vector.extract_strided_slice %205 {offsets = [1, 0, 0], sizes = [1, 1, 128], strides = [1, 1, 1]} : vector<2x1x128xf32> to vector<1x1x128xf32>
    %233 = vector.shape_cast %232 : vector<1x1x128xf32> to vector<1x128xf32>
    %234 = vector.broadcast %233 : vector<1x128xf32> to vector<32x128xf32>
    %235 = arith.addf %231, %234 : vector<32x128xf32>
    %cst_135 = arith.constant 0.00999999977 : f32
    %236 = vector.broadcast %cst_135 : f32 to vector<32x128xf32>
    %237 = arith.mulf %236, %235 : vector<32x128xf32>
    %238 = arith.maximumf %235, %237 : vector<32x128xf32>
    %239 = arith.truncf %238 : vector<32x128xf32> to vector<32x128xbf16>
    %cst_136 = arith.constant dense<0.000000e+00> : vector<32x8xf32>
    %240 = tpu.matmul %239, %207, %cst_136 {dimension_numbers = #tpu.dot_dimension_numbers<[1], [0], [0], [1], [0, 0, 1, 1], [], []>} : vector<32x128xbf16>, vector<128x8xbf16>, vector<32x8xf32> -> vector<32x8xf32>
    %241 = vector.broadcast %209 : vector<1x8xf32> to vector<32x8xf32>
    %242 = arith.addf %240, %241 : vector<32x8xf32>
    %243 = math.tanh %242 : vector<32x8xf32>
    %244 = math.exp %243 : vector<32x8xf32>
    %cst_137 = arith.constant 7.500000e-01 : f32
    %245 = vector.broadcast %cst_137 : f32 to vector<32x8xf32>
    %246 = arith.mulf %244, %245 : vector<32x8xf32>
    %247 = arith.mulf %246, %103 : vector<32x8xf32>
    %248 = arith.addf %197, %247 : vector<32x8xf32>
    %c1 = arith.constant 1 : index
    %c0_138 = arith.constant 0 : index
    %c0_139 = arith.constant 0 : index
    %249 = vector.load %arg3[%c1, %c0_138, %c0_139] : memref<6x8x128xbf16, #tpu.memory_space<vmem>>, vector<1x8x128xbf16>
    %250 = vector.shape_cast %249 : vector<1x8x128xbf16> to vector<8x128xbf16>
    %c1_140 = arith.constant 1 : index
    %c0_141 = arith.constant 0 : index
    %c0_142 = arith.constant 0 : index
    %251 = vector.load %arg4[%c1_140, %c0_141, %c0_142] : memref<6x1x128xf32, #tpu.memory_space<vmem>>, vector<1x1x128xf32>
    %252 = vector.shape_cast %251 : vector<1x1x128xf32> to vector<1x128xf32>
    %c1_143 = arith.constant 1 : index
    %c0_144 = arith.constant 0 : index
    %c0_145 = arith.constant 0 : index
    %c0_146 = arith.constant 0 : index
    %253 = vector.load %arg5[%c1_143, %c0_144, %c0_145, %c0_146] : memref<6x2x128x128xbf16, #tpu.memory_space<vmem>>, vector<1x2x128x128xbf16>
    %254 = vector.shape_cast %253 : vector<1x2x128x128xbf16> to vector<2x128x128xbf16>
    %c1_147 = arith.constant 1 : index
    %c0_148 = arith.constant 0 : index
    %c0_149 = arith.constant 0 : index
    %c0_150 = arith.constant 0 : index
    %255 = vector.load %arg6[%c1_147, %c0_148, %c0_149, %c0_150] : memref<6x2x1x128xf32, #tpu.memory_space<vmem>>, vector<1x2x1x128xf32>
    %256 = vector.shape_cast %255 : vector<1x2x1x128xf32> to vector<2x1x128xf32>
    %c1_151 = arith.constant 1 : index
    %c0_152 = arith.constant 0 : index
    %c0_153 = arith.constant 0 : index
    %257 = vector.load %arg7[%c1_151, %c0_152, %c0_153] : memref<6x128x8xbf16, #tpu.memory_space<vmem>>, vector<1x128x8xbf16>
    %258 = vector.shape_cast %257 : vector<1x128x8xbf16> to vector<128x8xbf16>
    %c1_154 = arith.constant 1 : index
    %c0_155 = arith.constant 0 : index
    %c0_156 = arith.constant 0 : index
    %259 = vector.load %arg8[%c1_154, %c0_155, %c0_156] : memref<6x1x8xf32, #tpu.memory_space<vmem>>, vector<1x1x8xf32>
    %260 = vector.shape_cast %259 : vector<1x1x8xf32> to vector<1x8xf32>
    %261 = arith.truncf %248 : vector<32x8xf32> to vector<32x8xbf16>
    %cst_157 = arith.constant dense<0.000000e+00> : vector<32x128xf32>
    %262 = tpu.matmul %261, %250, %cst_157 {dimension_numbers = #tpu.dot_dimension_numbers<[1], [0], [0], [1], [0, 0, 1, 1], [], []>} : vector<32x8xbf16>, vector<8x128xbf16>, vector<32x128xf32> -> vector<32x128xf32>
    %263 = vector.broadcast %252 : vector<1x128xf32> to vector<32x128xf32>
    %264 = arith.addf %262, %263 : vector<32x128xf32>
    %cst_158 = arith.constant 0.00999999977 : f32
    %265 = vector.broadcast %cst_158 : f32 to vector<32x128xf32>
    %266 = arith.mulf %265, %264 : vector<32x128xf32>
    %267 = arith.maximumf %264, %266 : vector<32x128xf32>
    %268 = arith.truncf %267 : vector<32x128xf32> to vector<32x128xbf16>
    %269 = vector.extract_strided_slice %254 {offsets = [0, 0, 0], sizes = [1, 128, 128], strides = [1, 1, 1]} : vector<2x128x128xbf16> to vector<1x128x128xbf16>
    %270 = vector.shape_cast %269 : vector<1x128x128xbf16> to vector<128x128xbf16>
    %cst_159 = arith.constant dense<0.000000e+00> : vector<32x128xf32>
    %271 = tpu.matmul %268, %270, %cst_159 {dimension_numbers = #tpu.dot_dimension_numbers<[1], [0], [0], [1], [0, 0, 1, 1], [], []>} : vector<32x128xbf16>, vector<128x128xbf16>, vector<32x128xf32> -> vector<32x128xf32>
    %272 = vector.extract_strided_slice %256 {offsets = [0, 0, 0], sizes = [1, 1, 128], strides = [1, 1, 1]} : vector<2x1x128xf32> to vector<1x1x128xf32>
    %273 = vector.shape_cast %272 : vector<1x1x128xf32> to vector<1x128xf32>
    %274 = vector.broadcast %273 : vector<1x128xf32> to vector<32x128xf32>
    %275 = arith.addf %271, %274 : vector<32x128xf32>
    %cst_160 = arith.constant 0.00999999977 : f32
    %276 = vector.broadcast %cst_160 : f32 to vector<32x128xf32>
    %277 = arith.mulf %276, %275 : vector<32x128xf32>
    %278 = arith.maximumf %275, %277 : vector<32x128xf32>
    %279 = arith.truncf %278 : vector<32x128xf32> to vector<32x128xbf16>
    %280 = vector.extract_strided_slice %254 {offsets = [1, 0, 0], sizes = [1, 128, 128], strides = [1, 1, 1]} : vector<2x128x128xbf16> to vector<1x128x128xbf16>
    %281 = vector.shape_cast %280 : vector<1x128x128xbf16> to vector<128x128xbf16>
    %cst_161 = arith.constant dense<0.000000e+00> : vector<32x128xf32>
    %282 = tpu.matmul %279, %281, %cst_161 {dimension_numbers = #tpu.dot_dimension_numbers<[1], [0], [0], [1], [0, 0, 1, 1], [], []>} : vector<32x128xbf16>, vector<128x128xbf16>, vector<32x128xf32> -> vector<32x128xf32>
    %283 = vector.extract_strided_slice %256 {offsets = [1, 0, 0], sizes = [1, 1, 128], strides = [1, 1, 1]} : vector<2x1x128xf32> to vector<1x1x128xf32>
    %284 = vector.shape_cast %283 : vector<1x1x128xf32> to vector<1x128xf32>
    %285 = vector.broadcast %284 : vector<1x128xf32> to vector<32x128xf32>
    %286 = arith.addf %282, %285 : vector<32x128xf32>
    %cst_162 = arith.constant 0.00999999977 : f32
    %287 = vector.broadcast %cst_162 : f32 to vector<32x128xf32>
    %288 = arith.mulf %287, %286 : vector<32x128xf32>
    %289 = arith.maximumf %286, %288 : vector<32x128xf32>
    %290 = arith.truncf %289 : vector<32x128xf32> to vector<32x128xbf16>
    %cst_163 = arith.constant dense<0.000000e+00> : vector<32x8xf32>
    %291 = tpu.matmul %290, %258, %cst_163 {dimension_numbers = #tpu.dot_dimension_numbers<[1], [0], [0], [1], [0, 0, 1, 1], [], []>} : vector<32x128xbf16>, vector<128x8xbf16>, vector<32x8xf32> -> vector<32x8xf32>
    %292 = vector.broadcast %260 : vector<1x8xf32> to vector<32x8xf32>
    %293 = arith.addf %291, %292 : vector<32x8xf32>
    %294 = math.tanh %293 : vector<32x8xf32>
    %295 = math.exp %294 : vector<32x8xf32>
    %296 = arith.mulf %100, %295 : vector<32x8xf32>
    %c3 = arith.constant 3 : index
    %c0_164 = arith.constant 0 : index
    %c0_165 = arith.constant 0 : index
    %297 = vector.load %arg3[%c3, %c0_164, %c0_165] : memref<6x8x128xbf16, #tpu.memory_space<vmem>>, vector<1x8x128xbf16>
    %298 = vector.shape_cast %297 : vector<1x8x128xbf16> to vector<8x128xbf16>
    %c3_166 = arith.constant 3 : index
    %c0_167 = arith.constant 0 : index
    %c0_168 = arith.constant 0 : index
    %299 = vector.load %arg4[%c3_166, %c0_167, %c0_168] : memref<6x1x128xf32, #tpu.memory_space<vmem>>, vector<1x1x128xf32>
    %300 = vector.shape_cast %299 : vector<1x1x128xf32> to vector<1x128xf32>
    %c3_169 = arith.constant 3 : index
    %c0_170 = arith.constant 0 : index
    %c0_171 = arith.constant 0 : index
    %c0_172 = arith.constant 0 : index
    %301 = vector.load %arg5[%c3_169, %c0_170, %c0_171, %c0_172] : memref<6x2x128x128xbf16, #tpu.memory_space<vmem>>, vector<1x2x128x128xbf16>
    %302 = vector.shape_cast %301 : vector<1x2x128x128xbf16> to vector<2x128x128xbf16>
    %c3_173 = arith.constant 3 : index
    %c0_174 = arith.constant 0 : index
    %c0_175 = arith.constant 0 : index
    %c0_176 = arith.constant 0 : index
    %303 = vector.load %arg6[%c3_173, %c0_174, %c0_175, %c0_176] : memref<6x2x1x128xf32, #tpu.memory_space<vmem>>, vector<1x2x1x128xf32>
    %304 = vector.shape_cast %303 : vector<1x2x1x128xf32> to vector<2x1x128xf32>
    %c3_177 = arith.constant 3 : index
    %c0_178 = arith.constant 0 : index
    %c0_179 = arith.constant 0 : index
    %305 = vector.load %arg7[%c3_177, %c0_178, %c0_179] : memref<6x128x8xbf16, #tpu.memory_space<vmem>>, vector<1x128x8xbf16>
    %306 = vector.shape_cast %305 : vector<1x128x8xbf16> to vector<128x8xbf16>
    %c3_180 = arith.constant 3 : index
    %c0_181 = arith.constant 0 : index
    %c0_182 = arith.constant 0 : index
    %307 = vector.load %arg8[%c3_180, %c0_181, %c0_182] : memref<6x1x8xf32, #tpu.memory_space<vmem>>, vector<1x1x8xf32>
    %308 = vector.shape_cast %307 : vector<1x1x8xf32> to vector<1x8xf32>
    %309 = arith.truncf %248 : vector<32x8xf32> to vector<32x8xbf16>
    %cst_183 = arith.constant dense<0.000000e+00> : vector<32x128xf32>
    %310 = tpu.matmul %309, %298, %cst_183 {dimension_numbers = #tpu.dot_dimension_numbers<[1], [0], [0], [1], [0, 0, 1, 1], [], []>} : vector<32x8xbf16>, vector<8x128xbf16>, vector<32x128xf32> -> vector<32x128xf32>
    %311 = vector.broadcast %300 : vector<1x128xf32> to vector<32x128xf32>
    %312 = arith.addf %310, %311 : vector<32x128xf32>
    %cst_184 = arith.constant 0.00999999977 : f32
    %313 = vector.broadcast %cst_184 : f32 to vector<32x128xf32>
    %314 = arith.mulf %313, %312 : vector<32x128xf32>
    %315 = arith.maximumf %312, %314 : vector<32x128xf32>
    %316 = arith.truncf %315 : vector<32x128xf32> to vector<32x128xbf16>
    %317 = vector.extract_strided_slice %302 {offsets = [0, 0, 0], sizes = [1, 128, 128], strides = [1, 1, 1]} : vector<2x128x128xbf16> to vector<1x128x128xbf16>
    %318 = vector.shape_cast %317 : vector<1x128x128xbf16> to vector<128x128xbf16>
    %cst_185 = arith.constant dense<0.000000e+00> : vector<32x128xf32>
    %319 = tpu.matmul %316, %318, %cst_185 {dimension_numbers = #tpu.dot_dimension_numbers<[1], [0], [0], [1], [0, 0, 1, 1], [], []>} : vector<32x128xbf16>, vector<128x128xbf16>, vector<32x128xf32> -> vector<32x128xf32>
    %320 = vector.extract_strided_slice %304 {offsets = [0, 0, 0], sizes = [1, 1, 128], strides = [1, 1, 1]} : vector<2x1x128xf32> to vector<1x1x128xf32>
    %321 = vector.shape_cast %320 : vector<1x1x128xf32> to vector<1x128xf32>
    %322 = vector.broadcast %321 : vector<1x128xf32> to vector<32x128xf32>
    %323 = arith.addf %319, %322 : vector<32x128xf32>
    %cst_186 = arith.constant 0.00999999977 : f32
    %324 = vector.broadcast %cst_186 : f32 to vector<32x128xf32>
    %325 = arith.mulf %324, %323 : vector<32x128xf32>
    %326 = arith.maximumf %323, %325 : vector<32x128xf32>
    %327 = arith.truncf %326 : vector<32x128xf32> to vector<32x128xbf16>
    %328 = vector.extract_strided_slice %302 {offsets = [1, 0, 0], sizes = [1, 128, 128], strides = [1, 1, 1]} : vector<2x128x128xbf16> to vector<1x128x128xbf16>
    %329 = vector.shape_cast %328 : vector<1x128x128xbf16> to vector<128x128xbf16>
    %cst_187 = arith.constant dense<0.000000e+00> : vector<32x128xf32>
    %330 = tpu.matmul %327, %329, %cst_187 {dimension_numbers = #tpu.dot_dimension_numbers<[1], [0], [0], [1], [0, 0, 1, 1], [], []>} : vector<32x128xbf16>, vector<128x128xbf16>, vector<32x128xf32> -> vector<32x128xf32>
    %331 = vector.extract_strided_slice %304 {offsets = [1, 0, 0], sizes = [1, 1, 128], strides = [1, 1, 1]} : vector<2x1x128xf32> to vector<1x1x128xf32>
    %332 = vector.shape_cast %331 : vector<1x1x128xf32> to vector<1x128xf32>
    %333 = vector.broadcast %332 : vector<1x128xf32> to vector<32x128xf32>
    %334 = arith.addf %330, %333 : vector<32x128xf32>
    %cst_188 = arith.constant 0.00999999977 : f32
    %335 = vector.broadcast %cst_188 : f32 to vector<32x128xf32>
    %336 = arith.mulf %335, %334 : vector<32x128xf32>
    %337 = arith.maximumf %334, %336 : vector<32x128xf32>
    %338 = arith.truncf %337 : vector<32x128xf32> to vector<32x128xbf16>
    %cst_189 = arith.constant dense<0.000000e+00> : vector<32x8xf32>
    %339 = tpu.matmul %338, %306, %cst_189 {dimension_numbers = #tpu.dot_dimension_numbers<[1], [0], [0], [1], [0, 0, 1, 1], [], []>} : vector<32x128xbf16>, vector<128x8xbf16>, vector<32x8xf32> -> vector<32x8xf32>
    %340 = vector.broadcast %308 : vector<1x8xf32> to vector<32x8xf32>
    %341 = arith.addf %339, %340 : vector<32x8xf32>
    %342 = arith.addf %296, %341 : vector<32x8xf32>
    %c5 = arith.constant 5 : index
    %c0_190 = arith.constant 0 : index
    %c0_191 = arith.constant 0 : index
    %343 = vector.load %arg3[%c5, %c0_190, %c0_191] : memref<6x8x128xbf16, #tpu.memory_space<vmem>>, vector<1x8x128xbf16>
    %344 = vector.shape_cast %343 : vector<1x8x128xbf16> to vector<8x128xbf16>
    %c5_192 = arith.constant 5 : index
    %c0_193 = arith.constant 0 : index
    %c0_194 = arith.constant 0 : index
    %345 = vector.load %arg4[%c5_192, %c0_193, %c0_194] : memref<6x1x128xf32, #tpu.memory_space<vmem>>, vector<1x1x128xf32>
    %346 = vector.shape_cast %345 : vector<1x1x128xf32> to vector<1x128xf32>
    %c5_195 = arith.constant 5 : index
    %c0_196 = arith.constant 0 : index
    %c0_197 = arith.constant 0 : index
    %c0_198 = arith.constant 0 : index
    %347 = vector.load %arg5[%c5_195, %c0_196, %c0_197, %c0_198] : memref<6x2x128x128xbf16, #tpu.memory_space<vmem>>, vector<1x2x128x128xbf16>
    %348 = vector.shape_cast %347 : vector<1x2x128x128xbf16> to vector<2x128x128xbf16>
    %c5_199 = arith.constant 5 : index
    %c0_200 = arith.constant 0 : index
    %c0_201 = arith.constant 0 : index
    %c0_202 = arith.constant 0 : index
    %349 = vector.load %arg6[%c5_199, %c0_200, %c0_201, %c0_202] : memref<6x2x1x128xf32, #tpu.memory_space<vmem>>, vector<1x2x1x128xf32>
    %350 = vector.shape_cast %349 : vector<1x2x1x128xf32> to vector<2x1x128xf32>
    %c5_203 = arith.constant 5 : index
    %c0_204 = arith.constant 0 : index
    %c0_205 = arith.constant 0 : index
    %351 = vector.load %arg7[%c5_203, %c0_204, %c0_205] : memref<6x128x8xbf16, #tpu.memory_space<vmem>>, vector<1x128x8xbf16>
    %352 = vector.shape_cast %351 : vector<1x128x8xbf16> to vector<128x8xbf16>
    %c5_206 = arith.constant 5 : index
    %c0_207 = arith.constant 0 : index
    %c0_208 = arith.constant 0 : index
    %353 = vector.load %arg8[%c5_206, %c0_207, %c0_208] : memref<6x1x8xf32, #tpu.memory_space<vmem>>, vector<1x1x8xf32>
    %354 = vector.shape_cast %353 : vector<1x1x8xf32> to vector<1x8xf32>
    %355 = arith.truncf %248 : vector<32x8xf32> to vector<32x8xbf16>
    %cst_209 = arith.constant dense<0.000000e+00> : vector<32x128xf32>
    %356 = tpu.matmul %355, %344, %cst_209 {dimension_numbers = #tpu.dot_dimension_numbers<[1], [0], [0], [1], [0, 0, 1, 1], [], []>} : vector<32x8xbf16>, vector<8x128xbf16>, vector<32x128xf32> -> vector<32x128xf32>
    %357 = vector.broadcast %346 : vector<1x128xf32> to vector<32x128xf32>
    %358 = arith.addf %356, %357 : vector<32x128xf32>
    %cst_210 = arith.constant 0.00999999977 : f32
    %359 = vector.broadcast %cst_210 : f32 to vector<32x128xf32>
    %360 = arith.mulf %359, %358 : vector<32x128xf32>
    %361 = arith.maximumf %358, %360 : vector<32x128xf32>
    %362 = arith.truncf %361 : vector<32x128xf32> to vector<32x128xbf16>
    %363 = vector.extract_strided_slice %348 {offsets = [0, 0, 0], sizes = [1, 128, 128], strides = [1, 1, 1]} : vector<2x128x128xbf16> to vector<1x128x128xbf16>
    %364 = vector.shape_cast %363 : vector<1x128x128xbf16> to vector<128x128xbf16>
    %cst_211 = arith.constant dense<0.000000e+00> : vector<32x128xf32>
    %365 = tpu.matmul %362, %364, %cst_211 {dimension_numbers = #tpu.dot_dimension_numbers<[1], [0], [0], [1], [0, 0, 1, 1], [], []>} : vector<32x128xbf16>, vector<128x128xbf16>, vector<32x128xf32> -> vector<32x128xf32>
    %366 = vector.extract_strided_slice %350 {offsets = [0, 0, 0], sizes = [1, 1, 128], strides = [1, 1, 1]} : vector<2x1x128xf32> to vector<1x1x128xf32>
    %367 = vector.shape_cast %366 : vector<1x1x128xf32> to vector<1x128xf32>
    %368 = vector.broadcast %367 : vector<1x128xf32> to vector<32x128xf32>
    %369 = arith.addf %365, %368 : vector<32x128xf32>
    %cst_212 = arith.constant 0.00999999977 : f32
    %370 = vector.broadcast %cst_212 : f32 to vector<32x128xf32>
    %371 = arith.mulf %370, %369 : vector<32x128xf32>
    %372 = arith.maximumf %369, %371 : vector<32x128xf32>
    %373 = arith.truncf %372 : vector<32x128xf32> to vector<32x128xbf16>
    %374 = vector.extract_strided_slice %348 {offsets = [1, 0, 0], sizes = [1, 128, 128], strides = [1, 1, 1]} : vector<2x128x128xbf16> to vector<1x128x128xbf16>
    %375 = vector.shape_cast %374 : vector<1x128x128xbf16> to vector<128x128xbf16>
    %cst_213 = arith.constant dense<0.000000e+00> : vector<32x128xf32>
    %376 = tpu.matmul %373, %375, %cst_213 {dimension_numbers = #tpu.dot_dimension_numbers<[1], [0], [0], [1], [0, 0, 1, 1], [], []>} : vector<32x128xbf16>, vector<128x128xbf16>, vector<32x128xf32> -> vector<32x128xf32>
    %377 = vector.extract_strided_slice %350 {offsets = [1, 0, 0], sizes = [1, 1, 128], strides = [1, 1, 1]} : vector<2x1x128xf32> to vector<1x1x128xf32>
    %378 = vector.shape_cast %377 : vector<1x1x128xf32> to vector<1x128xf32>
    %379 = vector.broadcast %378 : vector<1x128xf32> to vector<32x128xf32>
    %380 = arith.addf %376, %379 : vector<32x128xf32>
    %cst_214 = arith.constant 0.00999999977 : f32
    %381 = vector.broadcast %cst_214 : f32 to vector<32x128xf32>
    %382 = arith.mulf %381, %380 : vector<32x128xf32>
    %383 = arith.maximumf %380, %382 : vector<32x128xf32>
    %384 = arith.truncf %383 : vector<32x128xf32> to vector<32x128xbf16>
    %cst_215 = arith.constant dense<0.000000e+00> : vector<32x8xf32>
    %385 = tpu.matmul %384, %352, %cst_215 {dimension_numbers = #tpu.dot_dimension_numbers<[1], [0], [0], [1], [0, 0, 1, 1], [], []>} : vector<32x128xbf16>, vector<128x8xbf16>, vector<32x8xf32> -> vector<32x8xf32>
    %386 = vector.broadcast %354 : vector<1x8xf32> to vector<32x8xf32>
    %387 = arith.addf %385, %386 : vector<32x8xf32>
    %388 = math.tanh %387 : vector<32x8xf32>
    %389 = math.exp %388 : vector<32x8xf32>
    %cst_216 = arith.constant 7.500000e-01 : f32
    %390 = vector.broadcast %cst_216 : f32 to vector<32x8xf32>
    %391 = arith.mulf %389, %390 : vector<32x8xf32>
    %392 = arith.mulf %391, %102 : vector<32x8xf32>
    %393 = arith.addf %342, %392 : vector<32x8xf32>
    %394 = tpu.concatenate %248, %393 in 1 : vector<32x8xf32>, vector<32x8xf32> -> vector<32x16xf32>
    %395 = tpu.concatenate %103, %102 in 1 : vector<32x8xf32>, vector<32x8xf32> -> vector<32x16xf32>
    %c3_217 = arith.constant 3 : index
    %c0_218 = arith.constant 0 : index
    %c0_219 = arith.constant 0 : index
    %396 = vector.load %arg9[%c3_217, %c0_218, %c0_219] : memref<4x16x128xbf16, #tpu.memory_space<vmem>>, vector<1x16x128xbf16>
    %397 = vector.shape_cast %396 : vector<1x16x128xbf16> to vector<16x128xbf16>
    %c3_220 = arith.constant 3 : index
    %c0_221 = arith.constant 0 : index
    %c0_222 = arith.constant 0 : index
    %398 = vector.load %arg10[%c3_220, %c0_221, %c0_222] : memref<4x1x128xf32, #tpu.memory_space<vmem>>, vector<1x1x128xf32>
    %399 = vector.shape_cast %398 : vector<1x1x128xf32> to vector<1x128xf32>
    %c3_223 = arith.constant 3 : index
    %c0_224 = arith.constant 0 : index
    %c0_225 = arith.constant 0 : index
    %c0_226 = arith.constant 0 : index
    %400 = vector.load %arg11[%c3_223, %c0_224, %c0_225, %c0_226] : memref<4x2x128x128xbf16, #tpu.memory_space<vmem>>, vector<1x2x128x128xbf16>
    %401 = vector.shape_cast %400 : vector<1x2x128x128xbf16> to vector<2x128x128xbf16>
    %c3_227 = arith.constant 3 : index
    %c0_228 = arith.constant 0 : index
    %c0_229 = arith.constant 0 : index
    %c0_230 = arith.constant 0 : index
    %402 = vector.load %arg12[%c3_227, %c0_228, %c0_229, %c0_230] : memref<4x2x1x128xf32, #tpu.memory_space<vmem>>, vector<1x2x1x128xf32>
    %403 = vector.shape_cast %402 : vector<1x2x1x128xf32> to vector<2x1x128xf32>
    %c3_231 = arith.constant 3 : index
    %c0_232 = arith.constant 0 : index
    %c0_233 = arith.constant 0 : index
    %404 = vector.load %arg13[%c3_231, %c0_232, %c0_233] : memref<4x128x16xbf16, #tpu.memory_space<vmem>>, vector<1x128x16xbf16>
    %405 = vector.shape_cast %404 : vector<1x128x16xbf16> to vector<128x16xbf16>
    %c3_234 = arith.constant 3 : index
    %c0_235 = arith.constant 0 : index
    %c0_236 = arith.constant 0 : index
    %406 = vector.load %arg14[%c3_234, %c0_235, %c0_236] : memref<4x1x16xf32, #tpu.memory_space<vmem>>, vector<1x1x16xf32>
    %407 = vector.shape_cast %406 : vector<1x1x16xf32> to vector<1x16xf32>
    %408 = arith.truncf %394 : vector<32x16xf32> to vector<32x16xbf16>
    %cst_237 = arith.constant dense<0.000000e+00> : vector<32x128xf32>
    %409 = tpu.matmul %408, %397, %cst_237 {dimension_numbers = #tpu.dot_dimension_numbers<[1], [0], [0], [1], [0, 0, 1, 1], [], []>} : vector<32x16xbf16>, vector<16x128xbf16>, vector<32x128xf32> -> vector<32x128xf32>
    %410 = vector.broadcast %399 : vector<1x128xf32> to vector<32x128xf32>
    %411 = arith.addf %409, %410 : vector<32x128xf32>
    %cst_238 = arith.constant 0.00999999977 : f32
    %412 = vector.broadcast %cst_238 : f32 to vector<32x128xf32>
    %413 = arith.mulf %412, %411 : vector<32x128xf32>
    %414 = arith.maximumf %411, %413 : vector<32x128xf32>
    %415 = arith.truncf %414 : vector<32x128xf32> to vector<32x128xbf16>
    %416 = vector.extract_strided_slice %401 {offsets = [0, 0, 0], sizes = [1, 128, 128], strides = [1, 1, 1]} : vector<2x128x128xbf16> to vector<1x128x128xbf16>
    %417 = vector.shape_cast %416 : vector<1x128x128xbf16> to vector<128x128xbf16>
    %cst_239 = arith.constant dense<0.000000e+00> : vector<32x128xf32>
    %418 = tpu.matmul %415, %417, %cst_239 {dimension_numbers = #tpu.dot_dimension_numbers<[1], [0], [0], [1], [0, 0, 1, 1], [], []>} : vector<32x128xbf16>, vector<128x128xbf16>, vector<32x128xf32> -> vector<32x128xf32>
    %419 = vector.extract_strided_slice %403 {offsets = [0, 0, 0], sizes = [1, 1, 128], strides = [1, 1, 1]} : vector<2x1x128xf32> to vector<1x1x128xf32>
    %420 = vector.shape_cast %419 : vector<1x1x128xf32> to vector<1x128xf32>
    %421 = vector.broadcast %420 : vector<1x128xf32> to vector<32x128xf32>
    %422 = arith.addf %418, %421 : vector<32x128xf32>
    %cst_240 = arith.constant 0.00999999977 : f32
    %423 = vector.broadcast %cst_240 : f32 to vector<32x128xf32>
    %424 = arith.mulf %423, %422 : vector<32x128xf32>
    %425 = arith.maximumf %422, %424 : vector<32x128xf32>
    %426 = arith.truncf %425 : vector<32x128xf32> to vector<32x128xbf16>
    %427 = vector.extract_strided_slice %401 {offsets = [1, 0, 0], sizes = [1, 128, 128], strides = [1, 1, 1]} : vector<2x128x128xbf16> to vector<1x128x128xbf16>
    %428 = vector.shape_cast %427 : vector<1x128x128xbf16> to vector<128x128xbf16>
    %cst_241 = arith.constant dense<0.000000e+00> : vector<32x128xf32>
    %429 = tpu.matmul %426, %428, %cst_241 {dimension_numbers = #tpu.dot_dimension_numbers<[1], [0], [0], [1], [0, 0, 1, 1], [], []>} : vector<32x128xbf16>, vector<128x128xbf16>, vector<32x128xf32> -> vector<32x128xf32>
    %430 = vector.extract_strided_slice %403 {offsets = [1, 0, 0], sizes = [1, 1, 128], strides = [1, 1, 1]} : vector<2x1x128xf32> to vector<1x1x128xf32>
    %431 = vector.shape_cast %430 : vector<1x1x128xf32> to vector<1x128xf32>
    %432 = vector.broadcast %431 : vector<1x128xf32> to vector<32x128xf32>
    %433 = arith.addf %429, %432 : vector<32x128xf32>
    %cst_242 = arith.constant 0.00999999977 : f32
    %434 = vector.broadcast %cst_242 : f32 to vector<32x128xf32>
    %435 = arith.mulf %434, %433 : vector<32x128xf32>
    %436 = arith.maximumf %433, %435 : vector<32x128xf32>
    %437 = arith.truncf %436 : vector<32x128xf32> to vector<32x128xbf16>
    %cst_243 = arith.constant dense<0.000000e+00> : vector<32x16xf32>
    %438 = tpu.matmul %437, %405, %cst_243 {dimension_numbers = #tpu.dot_dimension_numbers<[1], [0], [0], [1], [0, 0, 1, 1], [], []>} : vector<32x128xbf16>, vector<128x16xbf16>, vector<32x16xf32> -> vector<32x16xf32>
    %439 = vector.broadcast %407 : vector<1x16xf32> to vector<32x16xf32>
    %440 = arith.addf %438, %439 : vector<32x16xf32>
    %441 = math.tanh %440 : vector<32x16xf32>
    %cst_244 = arith.constant 5.000000e-01 : f32
    %442 = vector.broadcast %cst_244 : f32 to vector<32x16xf32>
    %443 = arith.mulf %442, %441 : vector<32x16xf32>
    %444 = math.exp %443 : vector<32x16xf32>
    %445 = arith.mulf %395, %444 : vector<32x16xf32>
    %c1_245 = arith.constant 1 : index
    %c0_246 = arith.constant 0 : index
    %c0_247 = arith.constant 0 : index
    %446 = vector.load %arg9[%c1_245, %c0_246, %c0_247] : memref<4x16x128xbf16, #tpu.memory_space<vmem>>, vector<1x16x128xbf16>
    %447 = vector.shape_cast %446 : vector<1x16x128xbf16> to vector<16x128xbf16>
    %c1_248 = arith.constant 1 : index
    %c0_249 = arith.constant 0 : index
    %c0_250 = arith.constant 0 : index
    %448 = vector.load %arg10[%c1_248, %c0_249, %c0_250] : memref<4x1x128xf32, #tpu.memory_space<vmem>>, vector<1x1x128xf32>
    %449 = vector.shape_cast %448 : vector<1x1x128xf32> to vector<1x128xf32>
    %c1_251 = arith.constant 1 : index
    %c0_252 = arith.constant 0 : index
    %c0_253 = arith.constant 0 : index
    %c0_254 = arith.constant 0 : index
    %450 = vector.load %arg11[%c1_251, %c0_252, %c0_253, %c0_254] : memref<4x2x128x128xbf16, #tpu.memory_space<vmem>>, vector<1x2x128x128xbf16>
    %451 = vector.shape_cast %450 : vector<1x2x128x128xbf16> to vector<2x128x128xbf16>
    %c1_255 = arith.constant 1 : index
    %c0_256 = arith.constant 0 : index
    %c0_257 = arith.constant 0 : index
    %c0_258 = arith.constant 0 : index
    %452 = vector.load %arg12[%c1_255, %c0_256, %c0_257, %c0_258] : memref<4x2x1x128xf32, #tpu.memory_space<vmem>>, vector<1x2x1x128xf32>
    %453 = vector.shape_cast %452 : vector<1x2x1x128xf32> to vector<2x1x128xf32>
    %c1_259 = arith.constant 1 : index
    %c0_260 = arith.constant 0 : index
    %c0_261 = arith.constant 0 : index
    %454 = vector.load %arg13[%c1_259, %c0_260, %c0_261] : memref<4x128x16xbf16, #tpu.memory_space<vmem>>, vector<1x128x16xbf16>
    %455 = vector.shape_cast %454 : vector<1x128x16xbf16> to vector<128x16xbf16>
    %c1_262 = arith.constant 1 : index
    %c0_263 = arith.constant 0 : index
    %c0_264 = arith.constant 0 : index
    %456 = vector.load %arg14[%c1_262, %c0_263, %c0_264] : memref<4x1x16xf32, #tpu.memory_space<vmem>>, vector<1x1x16xf32>
    %457 = vector.shape_cast %456 : vector<1x1x16xf32> to vector<1x16xf32>
    %458 = arith.truncf %394 : vector<32x16xf32> to vector<32x16xbf16>
    %cst_265 = arith.constant dense<0.000000e+00> : vector<32x128xf32>
    %459 = tpu.matmul %458, %447, %cst_265 {dimension_numbers = #tpu.dot_dimension_numbers<[1], [0], [0], [1], [0, 0, 1, 1], [], []>} : vector<32x16xbf16>, vector<16x128xbf16>, vector<32x128xf32> -> vector<32x128xf32>
    %460 = vector.broadcast %449 : vector<1x128xf32> to vector<32x128xf32>
    %461 = arith.addf %459, %460 : vector<32x128xf32>
    %cst_266 = arith.constant 0.00999999977 : f32
    %462 = vector.broadcast %cst_266 : f32 to vector<32x128xf32>
    %463 = arith.mulf %462, %461 : vector<32x128xf32>
    %464 = arith.maximumf %461, %463 : vector<32x128xf32>
    %465 = arith.truncf %464 : vector<32x128xf32> to vector<32x128xbf16>
    %466 = vector.extract_strided_slice %451 {offsets = [0, 0, 0], sizes = [1, 128, 128], strides = [1, 1, 1]} : vector<2x128x128xbf16> to vector<1x128x128xbf16>
    %467 = vector.shape_cast %466 : vector<1x128x128xbf16> to vector<128x128xbf16>
    %cst_267 = arith.constant dense<0.000000e+00> : vector<32x128xf32>
    %468 = tpu.matmul %465, %467, %cst_267 {dimension_numbers = #tpu.dot_dimension_numbers<[1], [0], [0], [1], [0, 0, 1, 1], [], []>} : vector<32x128xbf16>, vector<128x128xbf16>, vector<32x128xf32> -> vector<32x128xf32>
    %469 = vector.extract_strided_slice %453 {offsets = [0, 0, 0], sizes = [1, 1, 128], strides = [1, 1, 1]} : vector<2x1x128xf32> to vector<1x1x128xf32>
    %470 = vector.shape_cast %469 : vector<1x1x128xf32> to vector<1x128xf32>
    %471 = vector.broadcast %470 : vector<1x128xf32> to vector<32x128xf32>
    %472 = arith.addf %468, %471 : vector<32x128xf32>
    %cst_268 = arith.constant 0.00999999977 : f32
    %473 = vector.broadcast %cst_268 : f32 to vector<32x128xf32>
    %474 = arith.mulf %473, %472 : vector<32x128xf32>
    %475 = arith.maximumf %472, %474 : vector<32x128xf32>
    %476 = arith.truncf %475 : vector<32x128xf32> to vector<32x128xbf16>
    %477 = vector.extract_strided_slice %451 {offsets = [1, 0, 0], sizes = [1, 128, 128], strides = [1, 1, 1]} : vector<2x128x128xbf16> to vector<1x128x128xbf16>
    %478 = vector.shape_cast %477 : vector<1x128x128xbf16> to vector<128x128xbf16>
    %cst_269 = arith.constant dense<0.000000e+00> : vector<32x128xf32>
    %479 = tpu.matmul %476, %478, %cst_269 {dimension_numbers = #tpu.dot_dimension_numbers<[1], [0], [0], [1], [0, 0, 1, 1], [], []>} : vector<32x128xbf16>, vector<128x128xbf16>, vector<32x128xf32> -> vector<32x128xf32>
    %480 = vector.extract_strided_slice %453 {offsets = [1, 0, 0], sizes = [1, 1, 128], strides = [1, 1, 1]} : vector<2x1x128xf32> to vector<1x1x128xf32>
    %481 = vector.shape_cast %480 : vector<1x1x128xf32> to vector<1x128xf32>
    %482 = vector.broadcast %481 : vector<1x128xf32> to vector<32x128xf32>
    %483 = arith.addf %479, %482 : vector<32x128xf32>
    %cst_270 = arith.constant 0.00999999977 : f32
    %484 = vector.broadcast %cst_270 : f32 to vector<32x128xf32>
    %485 = arith.mulf %484, %483 : vector<32x128xf32>
    %486 = arith.maximumf %483, %485 : vector<32x128xf32>
    %487 = arith.truncf %486 : vector<32x128xf32> to vector<32x128xbf16>
    %cst_271 = arith.constant dense<0.000000e+00> : vector<32x16xf32>
    %488 = tpu.matmul %487, %455, %cst_271 {dimension_numbers = #tpu.dot_dimension_numbers<[1], [0], [0], [1], [0, 0, 1, 1], [], []>} : vector<32x128xbf16>, vector<128x16xbf16>, vector<32x16xf32> -> vector<32x16xf32>
    %489 = vector.broadcast %457 : vector<1x16xf32> to vector<32x16xf32>
    %490 = arith.addf %488, %489 : vector<32x16xf32>
    %cst_272 = arith.constant 3.750000e-01 : f32
    %491 = vector.broadcast %cst_272 : f32 to vector<32x16xf32>
    %492 = arith.mulf %491, %490 : vector<32x16xf32>
    %493 = arith.subf %445, %492 : vector<32x16xf32>
    %c0_273 = arith.constant 0 : index
    %c0_274 = arith.constant 0 : index
    %494 = vector.load %arg15[%c0_273, %c0_274] : memref<32x16xf32, #tpu.memory_space<vmem>>, vector<32x16xf32>
    tpu.vector_store %arg15[%c0_273, %c0_274], %394 {strides = array<i32>} : memref<32x16xf32, #tpu.memory_space<vmem>>, vector<32x16xf32>,
    %c0_275 = arith.constant 0 : index
    %c0_276 = arith.constant 0 : index
    %495 = vector.load %arg16[%c0_275, %c0_276] : memref<32x16xf32, #tpu.memory_space<vmem>>, vector<32x16xf32>
    tpu.vector_store %arg16[%c0_275, %c0_276], %493 {strides = array<i32>} : memref<32x16xf32, #tpu.memory_space<vmem>>, vector<32x16xf32>,
    %496 = arith.addf %47, %441 : vector<32x16xf32>
    %cst_277 = arith.constant dense<0.000000e+00> : vector<32xf32>
    %497 = vector.multi_reduction <add>, %496, %cst_277 [1] : vector<32x16xf32> to vector<32xf32>
    %498 = vector.shape_cast %497 : vector<32xf32> to vector<32x1xf32>
    %cst_278 = arith.constant 5.000000e-01 : f32
    %499 = vector.broadcast %cst_278 : f32 to vector<32x1xf32>
    %500 = arith.mulf %499, %498 : vector<32x1xf32>
    %501 = arith.addf %149, %294 : vector<32x8xf32>
    %cst_279 = arith.constant dense<0.000000e+00> : vector<32xf32>
    %502 = vector.multi_reduction <add>, %501, %cst_279 [1] : vector<32x8xf32> to vector<32xf32>
    %503 = vector.shape_cast %502 : vector<32xf32> to vector<32x1xf32>
    %504 = arith.addf %500, %503 : vector<32x1xf32>
    %505 = vector.shape_cast %504 : vector<32x1xf32> to vector<32x1xf32>
    %506 = vector.broadcast %505 : vector<32x1xf32> to vector<32x128xf32>
    %c0_280 = arith.constant 0 : index
    %c0_281 = arith.constant 0 : index
    %507 = vector.load %arg17[%c0_280, %c0_281] : memref<32x128xf32, #tpu.memory_space<vmem>>, vector<32x128xf32>
    tpu.vector_store %arg17[%c0_280, %c0_281], %506 {strides = array<i32>} : memref<32x128xf32, #tpu.memory_space<vmem>>, vector<32x128xf32>,
    return
  }
  func.func @transform_0(%arg0: i32) -> (i32, i32) {
    %c0_i32 = arith.constant 0 : i32
    %c0_i32_0 = arith.constant 0 : i32
    return %arg0, %c0_i32 : i32, i32
  }
  func.func @transform_1(%arg0: i32) -> (i32, i32) {
    %c0_i32 = arith.constant 0 : i32
    %c0_i32_0 = arith.constant 0 : i32
    return %arg0, %c0_i32 : i32, i32
  }
  func.func @transform_2(%arg0: i32) -> (i32, i32, i32) {
    %c0_i32 = arith.constant 0 : i32
    %c0_i32_0 = arith.constant 0 : i32
    %c0_i32_1 = arith.constant 0 : i32
    %c0_i32_2 = arith.constant 0 : i32
    return %c0_i32, %c0_i32_0, %c0_i32_1 : i32, i32, i32
  }
  func.func @transform_3(%arg0: i32) -> (i32, i32, i32) {
    %c0_i32 = arith.constant 0 : i32
    %c0_i32_0 = arith.constant 0 : i32
    %c0_i32_1 = arith.constant 0 : i32
    %c0_i32_2 = arith.constant 0 : i32
    return %c0_i32, %c0_i32_0, %c0_i32_1 : i32, i32, i32
  }
  func.func @transform_4(%arg0: i32) -> (i32, i32, i32, i32) {
    %c0_i32 = arith.constant 0 : i32
    %c0_i32_0 = arith.constant 0 : i32
    %c0_i32_1 = arith.constant 0 : i32
    %c0_i32_2 = arith.constant 0 : i32
    %c0_i32_3 = arith.constant 0 : i32
    return %c0_i32, %c0_i32_0, %c0_i32_1, %c0_i32_2 : i32, i32, i32, i32
  }
  func.func @transform_5(%arg0: i32) -> (i32, i32, i32, i32) {
    %c0_i32 = arith.constant 0 : i32
    %c0_i32_0 = arith.constant 0 : i32
    %c0_i32_1 = arith.constant 0 : i32
    %c0_i32_2 = arith.constant 0 : i32
    %c0_i32_3 = arith.constant 0 : i32
    return %c0_i32, %c0_i32_0, %c0_i32_1, %c0_i32_2 : i32, i32, i32, i32
  }
  func.func @transform_6(%arg0: i32) -> (i32, i32, i32) {
    %c0_i32 = arith.constant 0 : i32
    %c0_i32_0 = arith.constant 0 : i32
    %c0_i32_1 = arith.constant 0 : i32
    %c0_i32_2 = arith.constant 0 : i32
    return %c0_i32, %c0_i32_0, %c0_i32_1 : i32, i32, i32
  }
  func.func @transform_7(%arg0: i32) -> (i32, i32, i32) {
    %c0_i32 = arith.constant 0 : i32
    %c0_i32_0 = arith.constant 0 : i32
    %c0_i32_1 = arith.constant 0 : i32
    %c0_i32_2 = arith.constant 0 : i32
    return %c0_i32, %c0_i32_0, %c0_i32_1 : i32, i32, i32
  }
  func.func @transform_8(%arg0: i32) -> (i32, i32, i32) {
    %c0_i32 = arith.constant 0 : i32
    %c0_i32_0 = arith.constant 0 : i32
    %c0_i32_1 = arith.constant 0 : i32
    %c0_i32_2 = arith.constant 0 : i32
    return %c0_i32, %c0_i32_0, %c0_i32_1 : i32, i32, i32
  }
  func.func @transform_9(%arg0: i32) -> (i32, i32, i32) {
    %c0_i32 = arith.constant 0 : i32
    %c0_i32_0 = arith.constant 0 : i32
    %c0_i32_1 = arith.constant 0 : i32
    %c0_i32_2 = arith.constant 0 : i32
    return %c0_i32, %c0_i32_0, %c0_i32_1 : i32, i32, i32
  }
  func.func @transform_10(%arg0: i32) -> (i32, i32, i32, i32) {
    %c0_i32 = arith.constant 0 : i32
    %c0_i32_0 = arith.constant 0 : i32
    %c0_i32_1 = arith.constant 0 : i32
    %c0_i32_2 = arith.constant 0 : i32
    %c0_i32_3 = arith.constant 0 : i32
    return %c0_i32, %c0_i32_0, %c0_i32_1, %c0_i32_2 : i32, i32, i32, i32
  }
  func.func @transform_11(%arg0: i32) -> (i32, i32, i32, i32) {
    %c0_i32 = arith.constant 0 : i32
    %c0_i32_0 = arith.constant 0 : i32
    %c0_i32_1 = arith.constant 0 : i32
    %c0_i32_2 = arith.constant 0 : i32
    %c0_i32_3 = arith.constant 0 : i32
    return %c0_i32, %c0_i32_0, %c0_i32_1, %c0_i32_2 : i32, i32, i32, i32
  }
  func.func @transform_12(%arg0: i32) -> (i32, i32, i32) {
    %c0_i32 = arith.constant 0 : i32
    %c0_i32_0 = arith.constant 0 : i32
    %c0_i32_1 = arith.constant 0 : i32
    %c0_i32_2 = arith.constant 0 : i32
    return %c0_i32, %c0_i32_0, %c0_i32_1 : i32, i32, i32
  }
  func.func @transform_13(%arg0: i32) -> (i32, i32, i32) {
    %c0_i32 = arith.constant 0 : i32
    %c0_i32_0 = arith.constant 0 : i32
    %c0_i32_1 = arith.constant 0 : i32
    %c0_i32_2 = arith.constant 0 : i32
    return %c0_i32, %c0_i32_0, %c0_i32_1 : i32, i32, i32
  }
  func.func @transform_14(%arg0: i32) -> (i32, i32) {
    %c0_i32 = arith.constant 0 : i32
    %c0_i32_0 = arith.constant 0 : i32
    return %arg0, %c0_i32 : i32, i32
  }
  func.func @transform_15(%arg0: i32) -> (i32, i32) {
    %c0_i32 = arith.constant 0 : i32
    %c0_i32_0 = arith.constant 0 : i32
    return %arg0, %c0_i32 : i32, i32
  }
  func.func @transform_16(%arg0: i32) -> (i32, i32) {
    %c0_i32 = arith.constant 0 : i32
    %c0_i32_0 = arith.constant 0 : i32
    return %arg0, %c0_i32 : i32, i32
  }
}

</mosaic_0001>

<llo_original>
// kernel: tpu_custom_call.1
$region0: #{tpu_custom_call.1}
  #allocation0 [shape = 'u32[]', space=smem, size = 0x4, offset = 0x4, fixed_abs, tag = 'smem constant byte address 0x4 - core index']
  #allocation1 [shape = 'u32[144,128]{1,0:T(1,128)}', space=vmem, size = 0x12000, scoped, tag = 'internal scratch']
  %s0 = inlined_call_operand.vmem [shape: f32[64,16], index: 0, kind: input, shape index: {}]
  %s1 = inlined_call_operand.vmem [shape: f32[64,16], index: 1, kind: input, shape index: {}]
  %s2 = inlined_call_operand.vmem [shape: bf16[6,8,128], index: 2, kind: input, shape index: {}]
  %s3 = inlined_call_operand.hbm [shape: f32[6,1,128], index: 3, kind: input, shape index: {}]
  %s4 = inlined_call_operand.vmem [shape: bf16[6,2,128,128], index: 4, kind: input, shape index: {}]
  %s5 = inlined_call_operand.vmem [shape: f32[6,2,1,128], index: 5, kind: input, shape index: {}]
  %s6 = inlined_call_operand.vmem [shape: bf16[6,128,8], index: 6, kind: input, shape index: {}]
  %s7 = inlined_call_operand.hbm [shape: f32[6,1,8], index: 7, kind: input, shape index: {}]
  %s8 = inlined_call_operand.vmem [shape: bf16[4,16,128], index: 8, kind: input, shape index: {}]
  %s9 = inlined_call_operand.vmem [shape: f32[4,1,128], index: 9, kind: input, shape index: {}]
  %s10 = inlined_call_operand.hbm [shape: bf16[4,2,128,128], index: 10, kind: input, shape index: {}]
  %s11 = inlined_call_operand.vmem [shape: f32[4,2,1,128], index: 11, kind: input, shape index: {}]
  %s12 = inlined_call_operand.vmem [shape: bf16[4,128,16], index: 12, kind: input, shape index: {}]
  %s13 = inlined_call_operand.vmem [shape: f32[4,1,16], index: 13, kind: input, shape index: {}]
  %s14 = inlined_call_operand.vmem [shape: f32[64,16], index: 14, kind: output, shape index: {0}]
  %s15 = inlined_call_operand.vmem [shape: f32[64,16], index: 15, kind: output, shape index: {1}]
  %s16 = inlined_call_operand.hbm [shape: f32[64,128], index: 16, kind: output, shape index: {2}]
  %17 = xla_tuple %s14, %s15, %s16
  %s18 = sld [smem:[#allocation0]]
  $region117: #{tpu_custom_call.1} parent=0
    _
  %s20 = ssub.s32 1, %s18
  %s21 = scalar_select 0, %s20, %s18
  $region1: #{tpu_custom_call.1} parent=0
    #allocation2 [shape = 'u8[3072]{0}', space=vmem, size = 0xc00, scoped, tag = 'input window, operand 3, single buffered']
    #allocation3 [shape = 's32[2]{0}', space=sflag, size = 0x8, scoped, tag = 'scoped memory for tpu_custom_call.1']
    #allocation4 [shape = 's32[2]{0}', space=sflag, size = 0x8, scoped, tag = 'scoped memory for tpu_custom_call.1']
    #allocation5 [shape = 'u8[3072]{0}', space=vmem, size = 0xc00, scoped, tag = 'input window, operand 7, single buffered']
    #allocation6 [shape = 's32[1]{0}', space=sflag, size = 0x4, scoped, tag = 'scoped memory for tpu_custom_call.1']
    #allocation7 [shape = 'u8[262144]{0}', space=vmem, size = 0x40000, scoped, tag = 'input window, operand 10, single buffered']
    #allocation8 [shape = 'u8[32768]{0}', space=vmem, size = 0x8000, scoped, tag = 'output window, operand 2']
    %22 = vsyncpa [#allocation3], 0
    %23 = vsyncpa [#allocation6], 0
    %24 = vsyncpa [#allocation4], 0
    %s25 = scalar_lea.sflag [#allocation4], 1
    %26 = vsyncpa %s25, 0
    loop: start=0, step=1, limit=4
    $region2: #{tpu_custom_call.1} parent=1 // loop_pre_header
      _
    $region3: #{tpu_custom_call.1} parent=1 // loop_header
      %s28 = sphi 0, %s32
      %p29 = scmp.ge.s32.totalorder %s28, 4
      %s38 = sphi 0, %s40
      %s41 = sphi 0, %s38
      %s42 = sphi 0, %s41
      %s58 = sphi 0, %s42
      %s64 = sphi 0, %s66
      %s67 = sphi 0, %s64
      %s68 = sphi 0, %s67
      %s84 = sphi 0, %s68
      %s88 = sphi 0, %s88
      %s90 = sphi 0, %s88
      %s91 = sphi 0, %s90
      %s105 = sphi 0, %s91
      %s109 = sphi 0, %s109
      %s111 = sphi 0, %s109
      %s112 = sphi 0, %s111
      %s126 = sphi 0, %s112
      %s130 = sphi 0, %s130
      %s132 = sphi 0, %s130
      %s133 = sphi 0, %s132
      %s147 = sphi 0, %s133
      %s151 = sphi 0, %s151
      %s153 = sphi 0, %s151
      %s154 = sphi 0, %s153
      %s168 = sphi 0, %s154
      %s172 = sphi 0, %s172
      %s174 = sphi 0, %s172
      %s175 = sphi 0, %s174
      %s189 = sphi 0, %s175
      %s193 = sphi 0, %s193
      %s195 = sphi 0, %s193
      %s196 = sphi 0, %s195
      %s210 = sphi 0, %s196
      %s214 = sphi 0, %s214
      %s216 = sphi 0, %s214
      %s217 = sphi 0, %s216
      %s231 = sphi 0, %s217
      %s235 = sphi 0, %s235
      %s237 = sphi 0, %s235
      %s238 = sphi 0, %s237
      %s252 = sphi 0, %s238
      %s256 = sphi 0, %s256
      %s258 = sphi 0, %s256
      %s259 = sphi 0, %s258
      %s273 = sphi 0, %s259
      %s277 = sphi 0, %s277
      %s279 = sphi 0, %s277
      %s280 = sphi 0, %s279
      %s294 = sphi 0, %s280
      %s298 = sphi 0, %s298
      %s300 = sphi 0, %s298
      %s301 = sphi 0, %s300
      %s315 = sphi 0, %s301
      %s319 = sphi 0, %s319
      %s321 = sphi 0, %s319
      %s322 = sphi 0, %s321
      %s336 = sphi 0, %s322
      %s342 = sphi 0, %s344
      %s345 = sphi 0, %s342
      %s346 = sphi 0, %s345
      %s362 = sphi 0, %s346
      %s368 = sphi 0, %s370
      %s371 = sphi 0, %s368
      %s372 = sphi 0, %s371
      %s388 = sphi 0, %s372
      %s394 = sphi 0, %s396
      %s397 = sphi 0, %s394
      %s398 = sphi 0, %s397
      %s414 = sphi 0, %s398
    $region4: #{tpu_custom_call.1} parent=1 // loop_header_branch
      %31 = sbr.rel (%p29) target = $region8
    $region5: #{tpu_custom_call.1} parent=1 // loop_body
      %s33 = ssub.s32 %s28, 1
      %s34 = ssub.s32 %s28, 2
      %s35 = sadd.s32 %s28, 1
      %s36 = ssub.s32 %s28, %s35
      %p37 = scmp.eq.s32.totalorder %s36, 0
      %s39 = sadd.s32 %s38, 1
      %s40 = scalar_select %p37, %s38, %s39
      %p43 = pneg %p37
      %p44 = scmp.eq.s32.totalorder %s28, 1
      %p45 = por %p43, %p44
      %p46 = scmp.ne.s32.totalorder %s38, %s41
      %p47 = scmp.eq.s32.totalorder %s28, 0
      %p48 = por %p46, %p47
      %p49 = scmp.ne.s32.totalorder %s38, %s41
      %p50 = scmp.eq.s32.totalorder %s33, 1
      %p51 = por %p49, %p50
      %p52 = scmp.ne.s32.totalorder %s41, %s42
      %p53 = scmp.eq.s32.totalorder %s33, 0
      %p54 = por %p52, %p53
      %p55 = scmp.ne.s32.totalorder %s41, %s42
      %p56 = scmp.eq.s32.totalorder %s34, 1
      %p57 = por %p55, %p56
      %p59 = scmp.ne.s32.totalorder %s42, %s58
      %p60 = scmp.eq.s32.totalorder %s34, 0
      %p61 = por %p59, %p60
      %s62 = ssub.s32 %s28, %s35
      %p63 = scmp.eq.s32.totalorder %s62, 0
      %s65 = sadd.s32 %s64, 1
      %s66 = scalar_select %p63, %s64, %s65
      %p69 = pneg %p63
      %p70 = scmp.eq.s32.totalorder %s28, 1
      %p71 = por %p69, %p70
      %p72 = scmp.ne.s32.totalorder %s64, %s67
      %p73 = scmp.eq.s32.totalorder %s28, 0
      %p74 = por %p72, %p73
      %p75 = scmp.ne.s32.totalorder %s64, %s67
      %p76 = scmp.eq.s32.totalorder %s33, 1
      %p77 = por %p75, %p76
      %p78 = scmp.ne.s32.totalorder %s67, %s68
      %p79 = scmp.eq.s32.totalorder %s33, 0
      %p80 = por %p78, %p79
      %p81 = scmp.ne.s32.totalorder %s67, %s68
      %p82 = scmp.eq.s32.totalorder %s34, 1
      %p83 = por %p81, %p82
      %p85 = scmp.ne.s32.totalorder %s68, %s84
      %p86 = scmp.eq.s32.totalorder %s34, 0
      %p87 = por %p85, %p86
      %s89 = sadd.s32 %s88, 1
      %p92 = scmp.eq.s32.totalorder %s28, 1
      %p93 = scmp.ne.s32.totalorder %s88, %s90
      %p94 = scmp.eq.s32.totalorder %s28, 0
      %p95 = por %p93, %p94
      %p96 = scmp.ne.s32.totalorder %s88, %s90
      %p97 = scmp.eq.s32.totalorder %s33, 1
      %p98 = por %p96, %p97
      %p99 = scmp.ne.s32.totalorder %s90, %s91
      %p100 = scmp.eq.s32.totalorder %s33, 0
      %p101 = por %p99, %p100
      %p102 = scmp.ne.s32.totalorder %s90, %s91
      %p103 = scmp.eq.s32.totalorder %s34, 1
      %p104 = por %p102, %p103
      %p106 = scmp.ne.s32.totalorder %s91, %s105
      %p107 = scmp.eq.s32.totalorder %s34, 0
      %p108 = por %p106, %p107
      %s110 = sadd.s32 %s109, 1
      %p113 = scmp.eq.s32.totalorder %s28, 1
      %p114 = scmp.ne.s32.totalorder %s109, %s111
      %p115 = scmp.eq.s32.totalorder %s28, 0
      %p116 = por %p114, %p115
      %p117 = scmp.ne.s32.totalorder %s109, %s111
      %p118 = scmp.eq.s32.totalorder %s33, 1
      %p119 = por %p117, %p118
      %p120 = scmp.ne.s32.totalorder %s111, %s112
      %p121 = scmp.eq.s32.totalorder %s33, 0
      %p122 = por %p120, %p121
      %p123 = scmp.ne.s32.totalorder %s111, %s112
      %p124 = scmp.eq.s32.totalorder %s34, 1
      %p125 = por %p123, %p124
      %p127 = scmp.ne.s32.totalorder %s112, %s126
      %p128 = scmp.eq.s32.totalorder %s34, 0
      %p129 = por %p127, %p128
      %s131 = sadd.s32 %s130, 1
      %p134 = scmp.eq.s32.totalorder %s28, 1
      %p135 = scmp.ne.s32.totalorder %s130, %s132
      %p136 = scmp.eq.s32.totalorder %s28, 0
      %p137 = por %p135, %p136
      %p138 = scmp.ne.s32.totalorder %s130, %s132
      %p139 = scmp.eq.s32.totalorder %s33, 1
      %p140 = por %p138, %p139
      %p141 = scmp.ne.s32.totalorder %s132, %s133
      %p142 = scmp.eq.s32.totalorder %s33, 0
      %p143 = por %p141, %p142
      %p144 = scmp.ne.s32.totalorder %s132, %s133
      %p145 = scmp.eq.s32.totalorder %s34, 1
      %p146 = por %p144, %p145
      %p148 = scmp.ne.s32.totalorder %s133, %s147
      %p149 = scmp.eq.s32.totalorder %s34, 0
      %p150 = por %p148, %p149
      %s152 = sadd.s32 %s151, 1
      %p155 = scmp.eq.s32.totalorder %s28, 1
      %p156 = scmp.ne.s32.totalorder %s151, %s153
      %p157 = scmp.eq.s32.totalorder %s28, 0
      %p158 = por %p156, %p157
      %p159 = scmp.ne.s32.totalorder %s151, %s153
      %p160 = scmp.eq.s32.totalorder %s33, 1
      %p161 = por %p159, %p160
      %p162 = scmp.ne.s32.totalorder %s153, %s154
      %p163 = scmp.eq.s32.totalorder %s33, 0
      %p164 = por %p162, %p163
      %p165 = scmp.ne.s32.totalorder %s153, %s154
      %p166 = scmp.eq.s32.totalorder %s34, 1
      %p167 = por %p165, %p166
      %p169 = scmp.ne.s32.totalorder %s154, %s168
      %p170 = scmp.eq.s32.totalorder %s34, 0
      %p171 = por %p169, %p170
      %s173 = sadd.s32 %s172, 1
      %p176 = scmp.eq.s32.totalorder %s28, 1
      %p177 = scmp.ne.s32.totalorder %s172, %s174
      %p178 = scmp.eq.s32.totalorder %s28, 0
      %p179 = por %p177, %p178
      %p180 = scmp.ne.s32.totalorder %s172, %s174
      %p181 = scmp.eq.s32.totalorder %s33, 1
      %p182 = por %p180, %p181
      %p183 = scmp.ne.s32.totalorder %s174, %s175
      %p184 = scmp.eq.s32.totalorder %s33, 0
      %p185 = por %p183, %p184
      %p186 = scmp.ne.s32.totalorder %s174, %s175
      %p187 = scmp.eq.s32.totalorder %s34, 1
      %p188 = por %p186, %p187
      %p190 = scmp.ne.s32.totalorder %s175, %s189
      %p191 = scmp.eq.s32.totalorder %s34, 0
      %p192 = por %p190, %p191
      %s194 = sadd.s32 %s193, 1
      %p197 = scmp.eq.s32.totalorder %s28, 1
      %p198 = scmp.ne.s32.totalorder %s193, %s195
      %p199 = scmp.eq.s32.totalorder %s28, 0
      %p200 = por %p198, %p199
      %p201 = scmp.ne.s32.totalorder %s193, %s195
      %p202 = scmp.eq.s32.totalorder %s33, 1
      %p203 = por %p201, %p202
      %p204 = scmp.ne.s32.totalorder %s195, %s196
      %p205 = scmp.eq.s32.totalorder %s33, 0
      %p206 = por %p204, %p205
      %p207 = scmp.ne.s32.totalorder %s195, %s196
      %p208 = scmp.eq.s32.totalorder %s34, 1
      %p209 = por %p207, %p208
      %p211 = scmp.ne.s32.totalorder %s196, %s210
      %p212 = scmp.eq.s32.totalorder %s34, 0
      %p213 = por %p211, %p212
      %s215 = sadd.s32 %s214, 1
      %p218 = scmp.eq.s32.totalorder %s28, 1
      %p219 = scmp.ne.s32.totalorder %s214, %s216
      %p220 = scmp.eq.s32.totalorder %s28, 0
      %p221 = por %p219, %p220
      %p222 = scmp.ne.s32.totalorder %s214, %s216
      %p223 = scmp.eq.s32.totalorder %s33, 1
      %p224 = por %p222, %p223
      %p225 = scmp.ne.s32.totalorder %s216, %s217
      %p226 = scmp.eq.s32.totalorder %s33, 0
      %p227 = por %p225, %p226
      %p228 = scmp.ne.s32.totalorder %s216, %s217
      %p229 = scmp.eq.s32.totalorder %s34, 1
      %p230 = por %p228, %p229
      %p232 = scmp.ne.s32.totalorder %s217, %s231
      %p233 = scmp.eq.s32.totalorder %s34, 0
      %p234 = por %p232, %p233
      %s236 = sadd.s32 %s235, 1
      %p239 = scmp.eq.s32.totalorder %s28, 1
      %p240 = scmp.ne.s32.totalorder %s235, %s237
      %p241 = scmp.eq.s32.totalorder %s28, 0
      %p242 = por %p240, %p241
      %p243 = scmp.ne.s32.totalorder %s235, %s237
      %p244 = scmp.eq.s32.totalorder %s33, 1
      %p245 = por %p243, %p244
      %p246 = scmp.ne.s32.totalorder %s237, %s238
      %p247 = scmp.eq.s32.totalorder %s33, 0
      %p248 = por %p246, %p247
      %p249 = scmp.ne.s32.totalorder %s237, %s238
      %p250 = scmp.eq.s32.totalorder %s34, 1
      %p251 = por %p249, %p250
      %p253 = scmp.ne.s32.totalorder %s238, %s252
      %p254 = scmp.eq.s32.totalorder %s34, 0
      %p255 = por %p253, %p254
      %s257 = sadd.s32 %s256, 1
      %p260 = scmp.eq.s32.totalorder %s28, 1
      %p261 = scmp.ne.s32.totalorder %s256, %s258
      %p262 = scmp.eq.s32.totalorder %s28, 0
      %p263 = por %p261, %p262
      %p264 = scmp.ne.s32.totalorder %s256, %s258
      %p265 = scmp.eq.s32.totalorder %s33, 1
      %p266 = por %p264, %p265
      %p267 = scmp.ne.s32.totalorder %s258, %s259
      %p268 = scmp.eq.s32.totalorder %s33, 0
      %p269 = por %p267, %p268
      %p270 = scmp.ne.s32.totalorder %s258, %s259
      %p271 = scmp.eq.s32.totalorder %s34, 1
      %p272 = por %p270, %p271
      %p274 = scmp.ne.s32.totalorder %s259, %s273
      %p275 = scmp.eq.s32.totalorder %s34, 0
      %p276 = por %p274, %p275
      %s278 = sadd.s32 %s277, 1
      %p281 = scmp.eq.s32.totalorder %s28, 1
      %p282 = scmp.ne.s32.totalorder %s277, %s279
      %p283 = scmp.eq.s32.totalorder %s28, 0
      %p284 = por %p282, %p283
      %p285 = scmp.ne.s32.totalorder %s277, %s279
      %p286 = scmp.eq.s32.totalorder %s33, 1
      %p287 = por %p285, %p286
      %p288 = scmp.ne.s32.totalorder %s279, %s280
      %p289 = scmp.eq.s32.totalorder %s33, 0
      %p290 = por %p288, %p289
      %p291 = scmp.ne.s32.totalorder %s279, %s280
      %p292 = scmp.eq.s32.totalorder %s34, 1
      %p293 = por %p291, %p292
      %p295 = scmp.ne.s32.totalorder %s280, %s294
      %p296 = scmp.eq.s32.totalorder %s34, 0
      %p297 = por %p295, %p296
      %s299 = sadd.s32 %s298, 1
      %p302 = scmp.eq.s32.totalorder %s28, 1
      %p303 = scmp.ne.s32.totalorder %s298, %s300
      %p304 = scmp.eq.s32.totalorder %s28, 0
      %p305 = por %p303, %p304
      %p306 = scmp.ne.s32.totalorder %s298, %s300
      %p307 = scmp.eq.s32.totalorder %s33, 1
      %p308 = por %p306, %p307
      %p309 = scmp.ne.s32.totalorder %s300, %s301
      %p310 = scmp.eq.s32.totalorder %s33, 0
      %p311 = por %p309, %p310
      %p312 = scmp.ne.s32.totalorder %s300, %s301
      %p313 = scmp.eq.s32.totalorder %s34, 1
      %p314 = por %p312, %p313
      %p316 = scmp.ne.s32.totalorder %s301, %s315
      %p317 = scmp.eq.s32.totalorder %s34, 0
      %p318 = por %p316, %p317
      %s320 = sadd.s32 %s319, 1
      %p323 = scmp.eq.s32.totalorder %s28, 1
      %p324 = scmp.ne.s32.totalorder %s319, %s321
      %p325 = scmp.eq.s32.totalorder %s28, 0
      %p326 = por %p324, %p325
      %p327 = scmp.ne.s32.totalorder %s319, %s321
      %p328 = scmp.eq.s32.totalorder %s33, 1
      %p329 = por %p327, %p328
      %p330 = scmp.ne.s32.totalorder %s321, %s322
      %p331 = scmp.eq.s32.totalorder %s33, 0
      %p332 = por %p330, %p331
      %p333 = scmp.ne.s32.totalorder %s321, %s322
      %p334 = scmp.eq.s32.totalorder %s34, 1
      %p335 = por %p333, %p334
      %p337 = scmp.ne.s32.totalorder %s322, %s336
      %p338 = scmp.eq.s32.totalorder %s34, 0
      %p339 = por %p337, %p338
      %s340 = ssub.s32 %s28, %s35
      %p341 = scmp.eq.s32.totalorder %s340, 0
      %s343 = sadd.s32 %s342, 1
      %s344 = scalar_select %p341, %s342, %s343
      %p347 = pneg %p341
      %p348 = scmp.eq.s32.totalorder %s28, 1
      %p349 = por %p347, %p348
      %p350 = scmp.ne.s32.totalorder %s342, %s345
      %p351 = scmp.eq.s32.totalorder %s28, 0
      %p352 = por %p350, %p351
      %p353 = scmp.ne.s32.totalorder %s342, %s345
      %p354 = scmp.eq.s32.totalorder %s33, 1
      %p355 = por %p353, %p354
      %p356 = scmp.ne.s32.totalorder %s345, %s346
      %p357 = scmp.eq.s32.totalorder %s33, 0
      %p358 = por %p356, %p357
      %p359 = scmp.ne.s32.totalorder %s345, %s346
      %p360 = scmp.eq.s32.totalorder %s34, 1
      %p361 = por %p359, %p360
      %p363 = scmp.ne.s32.totalorder %s346, %s362
      %p364 = scmp.eq.s32.totalorder %s34, 0
      %p365 = por %p363, %p364
      %s366 = ssub.s32 %s28, %s35
      %p367 = scmp.eq.s32.totalorder %s366, 0
      %s369 = sadd.s32 %s368, 1
      %s370 = scalar_select %p367, %s368, %s369
      %p373 = pneg %p367
      %p374 = scmp.eq.s32.totalorder %s28, 1
      %p375 = por %p373, %p374
      %p376 = scmp.ne.s32.totalorder %s368, %s371
      %p377 = scmp.eq.s32.totalorder %s28, 0
      %p378 = por %p376, %p377
      %p379 = scmp.ne.s32.totalorder %s368, %s371
      %p380 = scmp.eq.s32.totalorder %s33, 1
      %p381 = por %p379, %p380
      %p382 = scmp.ne.s32.totalorder %s371, %s372
      %p383 = scmp.eq.s32.totalorder %s33, 0
      %p384 = por %p382, %p383
      %p385 = scmp.ne.s32.totalorder %s371, %s372
      %p386 = scmp.eq.s32.totalorder %s34, 1
      %p387 = por %p385, %p386
      %p389 = scmp.ne.s32.totalorder %s372, %s388
      %p390 = scmp.eq.s32.totalorder %s34, 0
      %p391 = por %p389, %p390
      %s392 = ssub.s32 %s28, %s35
      %p393 = scmp.eq.s32.totalorder %s392, 0
      %s395 = sadd.s32 %s394, 1
      %s396 = scalar_select %p393, %s394, %s395
      %p399 = pneg %p393
      %p400 = scmp.eq.s32.totalorder %s28, 1
      %p401 = por %p399, %p400
      %p402 = scmp.ne.s32.totalorder %s394, %s397
      %p403 = scmp.eq.s32.totalorder %s28, 0
      %p404 = por %p402, %p403
      %p405 = scmp.ne.s32.totalorder %s394, %s397
      %p406 = scmp.eq.s32.totalorder %s33, 1
      %p407 = por %p405, %p406
      %p408 = scmp.ne.s32.totalorder %s397, %s398
      %p409 = scmp.eq.s32.totalorder %s33, 0
      %p410 = por %p408, %p409
      %p411 = scmp.ne.s32.totalorder %s397, %s398
      %p412 = scmp.eq.s32.totalorder %s34, 1
      %p413 = por %p411, %p412
      %p415 = scmp.ne.s32.totalorder %s398, %s414
      %p416 = scmp.eq.s32.totalorder %s34, 0
      %p417 = por %p415, %p416
      %p418 = scmp.le.s32.totalorder 1, %s28
      %p419 = scmp.lt.s32.totalorder %s28, 3
      %p420 = pnand %p418, %p419
      %p421 = pneg %p420
      // Predicated region
      $region9: #{tpu_custom_call.1} parent=5 // pred_check
        _
      $region10: #{tpu_custom_call.1} parent=5 // pred_check_branch
        %423 = sbr.rel (%p420) target = $region12
      $region11: #{tpu_custom_call.1} parent=5 // pred_region
        %s424 = ssub.s32 %s28, 1
        // Predicated region
        $region13: #{tpu_custom_call.1} parent=11 // pred_check
          %p425 = pneg %p101
        $region14: #{tpu_custom_call.1} parent=11 // pred_check_branch
          %427 = sbr.rel (%p425) target = $region16
        $region15: #{tpu_custom_call.1} parent=11 // pred_region
          _
        $region16: #{tpu_custom_call.1} parent=11 // pred_fallthru
          _
        // Predicated region
        $region17: #{tpu_custom_call.1} parent=11 // pred_check
          %p428 = pneg %p122
        $region18: #{tpu_custom_call.1} parent=11 // pred_check_branch
          %430 = sbr.rel (%p428) target = $region20
        $region19: #{tpu_custom_call.1} parent=11 // pred_region
          %s432 = ssub.s32 96, 96
          %433 = vsyncadd [#allocation3], %s432
          %s434 = sshll.u32 [#allocation2], 4
          %s435 = int_to_ptr.vmem [resolvable:$true] %s434
          %440 = dma.hbm_to_vmem [thread:$0]  %s3, 96, %s435, [#allocation3], 16, 16, 1
        $region20: #{tpu_custom_call.1} parent=11 // pred_fallthru
          _
        // Predicated region
        $region21: #{tpu_custom_call.1} parent=11 // pred_check
          %p441 = pneg %p143
        $region22: #{tpu_custom_call.1} parent=11 // pred_check_branch
          %443 = sbr.rel (%p441) target = $region24
        $region23: #{tpu_custom_call.1} parent=11 // pred_region
          _
        $region24: #{tpu_custom_call.1} parent=11 // pred_fallthru
          _
        // Predicated region
        $region25: #{tpu_custom_call.1} parent=11 // pred_check
          %p444 = pneg %p164
        $region26: #{tpu_custom_call.1} parent=11 // pred_check_branch
          %446 = sbr.rel (%p444) target = $region28
        $region27: #{tpu_custom_call.1} parent=11 // pred_region
          _
        $region28: #{tpu_custom_call.1} parent=11 // pred_fallthru
          _
        // Predicated region
        $region29: #{tpu_custom_call.1} parent=11 // pred_check
          %p447 = pneg %p185
        $region30: #{tpu_custom_call.1} parent=11 // pred_check_branch
          %449 = sbr.rel (%p447) target = $region32
        $region31: #{tpu_custom_call.1} parent=11 // pred_region
          _
        $region32: #{tpu_custom_call.1} parent=11 // pred_fallthru
          _
        // Predicated region
        $region33: #{tpu_custom_call.1} parent=11 // pred_check
          %p450 = pneg %p206
        $region34: #{tpu_custom_call.1} parent=11 // pred_check_branch
          %452 = sbr.rel (%p450) target = $region36
        $region35: #{tpu_custom_call.1} parent=11 // pred_region
          %s454 = ssub.s32 96, 96
          %455 = vsyncadd [#allocation6], %s454
          %s456 = sshll.u32 [#allocation5], 4
          %s457 = int_to_ptr.vmem [resolvable:$true] %s456
          %462 = dma.hbm_to_vmem [thread:$0]  %s7, 96, %s457, [#allocation6], 16, 16, 1
        $region36: #{tpu_custom_call.1} parent=11 // pred_fallthru
          _
        // Predicated region
        $region37: #{tpu_custom_call.1} parent=11 // pred_check
          %p463 = pneg %p227
        $region38: #{tpu_custom_call.1} parent=11 // pred_check_branch
          %465 = sbr.rel (%p463) target = $region40
        $region39: #{tpu_custom_call.1} parent=11 // pred_region
          _
        $region40: #{tpu_custom_call.1} parent=11 // pred_fallthru
          _
        // Predicated region
        $region41: #{tpu_custom_call.1} parent=11 // pred_check
          %p466 = pneg %p248
        $region42: #{tpu_custom_call.1} parent=11 // pred_check_branch
          %468 = sbr.rel (%p466) target = $region44
        $region43: #{tpu_custom_call.1} parent=11 // pred_region
          _
        $region44: #{tpu_custom_call.1} parent=11 // pred_fallthru
          _
        // Predicated region
        $region45: #{tpu_custom_call.1} parent=11 // pred_check
          %p469 = pneg %p269
        $region46: #{tpu_custom_call.1} parent=11 // pred_check_branch
          %471 = sbr.rel (%p469) target = $region48
        $region47: #{tpu_custom_call.1} parent=11 // pred_region
          %s473 = ssub.s32 8192, 8192
          %474 = vsyncadd [#allocation6], %s473
          %s475 = sshll.u32 [#allocation7], 4
          %s476 = int_to_ptr.vmem [resolvable:$true] %s475
          %481 = dma.hbm_to_vmem [thread:$0]  %s10, 8192, %s476, [#allocation6], 64, 64, 4
        $region48: #{tpu_custom_call.1} parent=11 // pred_fallthru
          _
        // Predicated region
        $region49: #{tpu_custom_call.1} parent=11 // pred_check
          %p482 = pneg %p290
        $region50: #{tpu_custom_call.1} parent=11 // pred_check_branch
          %484 = sbr.rel (%p482) target = $region52
        $region51: #{tpu_custom_call.1} parent=11 // pred_region
          _
        $region52: #{tpu_custom_call.1} parent=11 // pred_fallthru
          _
        // Predicated region
        $region53: #{tpu_custom_call.1} parent=11 // pred_check
          %p485 = pneg %p311
        $region54: #{tpu_custom_call.1} parent=11 // pred_check_branch
          %487 = sbr.rel (%p485) target = $region56
        $region55: #{tpu_custom_call.1} parent=11 // pred_region
          _
        $region56: #{tpu_custom_call.1} parent=11 // pred_fallthru
          _
        // Predicated region
        $region57: #{tpu_custom_call.1} parent=11 // pred_check
          %p488 = pneg %p332
        $region58: #{tpu_custom_call.1} parent=11 // pred_check_branch
          %490 = sbr.rel (%p488) target = $region60
        $region59: #{tpu_custom_call.1} parent=11 // pred_region
          _
        $region60: #{tpu_custom_call.1} parent=11 // pred_fallthru
          _
      $region12: #{tpu_custom_call.1} parent=5 // pred_fallthru
        _
      %p491 = scmp.lt.s32.totalorder %s28, 2
      // Predicated region
      $region61: #{tpu_custom_call.1} parent=5 // pred_check
        %p492 = pneg %p491
      $region62: #{tpu_custom_call.1} parent=5 // pred_check_branch
        %494 = sbr.rel (%p492) target = $region64
      $region63: #{tpu_custom_call.1} parent=5 // pred_region
        // Predicated region
        $region65: #{tpu_custom_call.1} parent=63 // pred_check
          %p495 = pneg %p48
        $region66: #{tpu_custom_call.1} parent=63 // pred_check_branch
          %497 = sbr.rel (%p495) target = $region68
        $region67: #{tpu_custom_call.1} parent=63 // pred_region
          %s498 = smul.u32 4, %s28
          %p499 = scmp.lt.s32.totalorder %s498, 7
          %s500 = scalar_select %p499, %s498, 7
          %s501 = smul.addr %s500, 8
          %s502 = scalar_lea.vmem %s0, %s501
          %s503 = smul.u32 4, %s28
        $region68: #{tpu_custom_call.1} parent=63 // pred_fallthru
          _
        // Predicated region
        $region69: #{tpu_custom_call.1} parent=63 // pred_check
          %p504 = pneg %p74
        $region70: #{tpu_custom_call.1} parent=63 // pred_check_branch
          %506 = sbr.rel (%p504) target = $region72
        $region71: #{tpu_custom_call.1} parent=63 // pred_region
          %s507 = smul.u32 4, %s28
          %p508 = scmp.lt.s32.totalorder %s507, 7
          %s509 = scalar_select %p508, %s507, 7
          %s510 = smul.addr %s509, 8
          %s511 = scalar_lea.vmem %s1, %s510
          %s512 = smul.u32 4, %s28
        $region72: #{tpu_custom_call.1} parent=63 // pred_fallthru
          _
      $region64: #{tpu_custom_call.1} parent=5 // pred_fallthru
        _
      %p513 = scmp.le.s32.totalorder 1, %s28
      %p514 = scmp.lt.s32.totalorder %s28, 3
      %p515 = pnand %p513, %p514
      %p516 = pneg %p515
      // Predicated region
      $region73: #{tpu_custom_call.1} parent=5 // pred_check
        _
      $region74: #{tpu_custom_call.1} parent=5 // pred_check_branch
        %518 = sbr.rel (%p515) target = $region76
      $region75: #{tpu_custom_call.1} parent=5 // pred_region
        %s519 = ssub.s32 %s28, 1
        // Predicated region
        $region77: #{tpu_custom_call.1} parent=75 // pred_check
          %p520 = pneg %p122
        $region78: #{tpu_custom_call.1} parent=75 // pred_check_branch
          %522 = sbr.rel (%p520) target = $region80
        $region79: #{tpu_custom_call.1} parent=75 // pred_region
          %523 = dma.done [#allocation3], 96
        $region80: #{tpu_custom_call.1} parent=75 // pred_fallthru
          _
        // Predicated region
        $region81: #{tpu_custom_call.1} parent=75 // pred_check
          %p524 = pneg %p206
        $region82: #{tpu_custom_call.1} parent=75 // pred_check_branch
          %526 = sbr.rel (%p524) target = $region84
        $region83: #{tpu_custom_call.1} parent=75 // pred_region
          %527 = dma.done [#allocation6], 96
        $region84: #{tpu_custom_call.1} parent=75 // pred_fallthru
          _
        // Predicated region
        $region85: #{tpu_custom_call.1} parent=75 // pred_check
          %p528 = pneg %p269
        $region86: #{tpu_custom_call.1} parent=75 // pred_check_branch
          %530 = sbr.rel (%p528) target = $region88
        $region87: #{tpu_custom_call.1} parent=75 // pred_region
          %531 = dma.done [#allocation6], 8192
        $region88: #{tpu_custom_call.1} parent=75 // pred_fallthru
          _
        %s532 = smul.u32 4, %s33
        %p533 = scmp.lt.s32.totalorder %s532, 7
        %s534 = scalar_select %p533, %s532, 7
        %s535 = smul.addr %s534, 8
        %s536 = scalar_lea.vmem %s0, %s535
        %p537 = pneg %p54
        %p538 = pneg %p51
        %s539 = smul.u32 4, %s33
        %p540 = scmp.lt.s32.totalorder %s539, 7
        %s541 = scalar_select %p540, %s539, 7
        %s542 = smul.addr %s541, 8
        %s543 = scalar_lea.vmem %s1, %s542
        %p544 = pneg %p80
        %p545 = pneg %p77
        %p546 = pneg %p101
        %p547 = pneg %p98
        %p548 = pneg %p122
        %p549 = pneg %p119
        %p550 = pneg %p143
        %p551 = pneg %p140
        %p552 = pneg %p164
        %p553 = pneg %p161
        %p554 = pneg %p185
        %p555 = pneg %p182
        %p556 = pneg %p206
        %p557 = pneg %p203
        %p558 = pneg %p227
        %p559 = pneg %p224
        %p560 = pneg %p248
        %p561 = pneg %p245
        %p562 = pneg %p269
        %p563 = pneg %p266
        %p564 = pneg %p290
        %p565 = pneg %p287
        %p566 = pneg %p311
        %p567 = pneg %p308
        %p568 = pneg %p332
        %p569 = pneg %p329
        %p570 = pneg %p358
        %p571 = pneg %p355
        %s572 = smul.u32 4, %s33
        %p573 = scmp.lt.s32.totalorder %s572, 7
        %s574 = scalar_select %p573, %s572, 7
        %s575 = smul.addr %s574, 8
        %s576 = scalar_lea.vmem %s14, %s575
        %p577 = pneg %p384
        %p578 = pneg %p381
        %s579 = smul.u32 4, %s33
        %p580 = scmp.lt.s32.totalorder %s579, 7
        %s581 = scalar_select %p580, %s579, 7
        %s582 = smul.addr %s581, 8
        %s583 = scalar_lea.vmem %s15, %s582
        %p584 = pneg %p410
        %p585 = pneg %p407
        %s586 = sand.u32 %s397, 1
        %s587 = scalar_lea.sflag [#allocation4], %s586
        %s588 = sand.u32 %s397, 1
        %s589 = smul.addr %s588, 32
        %s590 = scalar_lea.vmem [#allocation8], %s589
        %s591 = smul.u32 4, %s33
        %p592 = scmp.lt.s32.totalorder %s591, 7
        %s593 = scalar_select %p592, %s591, 7
        %s594 = smul.addr %s593, 8
        %s595 = scalar_lea.vmem %s0, %s594
        %s596 = smul.u32 4, %s33
        %s597 = smul.u32 4, %s33
        %p598 = scmp.lt.s32.totalorder %s597, 7
        %s599 = scalar_select %p598, %s597, 7
        %s600 = smul.addr %s599, 8
        %s601 = scalar_lea.vmem %s1, %s600
        %s602 = smul.u32 4, %s33
        %s603 = smul.u32 4, %s33
        %p604 = scmp.lt.s32.totalorder %s603, 7
        %s605 = scalar_select %p604, %s603, 7
        %s606 = smul.addr %s605, 8
        %s607 = scalar_lea.vmem %s14, %s606
        %s608 = smul.u32 4, %s33
        %s609 = smul.u32 4, %s33
        %p610 = scmp.lt.s32.totalorder %s609, 7
        %s611 = scalar_select %p610, %s609, 7
        %s612 = smul.addr %s611, 8
        %s613 = scalar_lea.vmem %s15, %s612
        %s614 = smul.u32 4, %s33
        %s615 = smul.u32 4, %s33
        %v617 = vld [vmem:[%s595] sm:$0xff]
        %v618 = vld [vmem:[%s595 + $0x8] sm:$0xff]
        %v619 = vld [vmem:[%s595 + $0x10] sm:$0xff]
        %v620 = vld [vmem:[%s595 + $0x18] sm:$0xff]
        %v621 = vld [vmem:[%s601] sm:$0xff]
        %v622 = vld [vmem:[%s601 + $0x8] sm:$0xff]
        %v623 = vld [vmem:[%s601 + $0x10] sm:$0xff]
        %v624 = vld [vmem:[%s601 + $0x18] sm:$0xff]
        %s625 = scalar_lea.vmem %s8, 16
        %v626 = vld [vmem:[%s625] sm:$0xf]
        %v627 = vld [vmem:[%s625 + $0x4] sm:$0xf]
        %s628 = scalar_lea.vmem %s9, 2
        %v629 = vld [vmem:[%s628] sm:$0x1]
        %s630 = scalar_lea.vmem [#allocation7], 256
        %v631 = vld [vmem:[%s630] sm:$0xf]
        %v632 = vld [vmem:[%s630 + $0x4] sm:$0xf]
        %v633 = vld [vmem:[%s630 + $0x8] sm:$0xf]
        %v634 = vld [vmem:[%s630 + $0xc] sm:$0xf]
        %v635 = vld [vmem:[%s630 + $0x10] sm:$0xf]
        %v636 = vld [vmem:[%s630 + $0x14] sm:$0xf]
        %v637 = vld [vmem:[%s630 + $0x18] sm:$0xf]
        %v638 = vld [vmem:[%s630 + $0x1c] sm:$0xf]
        %v639 = vld [vmem:[%s630 + $0x20] sm:$0xf]
        %v640 = vld [vmem:[%s630 + $0x24] sm:$0xf]
        %v641 = vld [vmem:[%s630 + $0x28] sm:$0xf]
        %v642 = vld [vmem:[%s630 + $0x2c] sm:$0xf]
        %v643 = vld [vmem:[%s630 + $0x30] sm:$0xf]
        %v644 = vld [vmem:[%s630 + $0x34] sm:$0xf]
        %v645 = vld [vmem:[%s630 + $0x38] sm:$0xf]
        %v646 = vld [vmem:[%s630 + $0x3c] sm:$0xf]
        %v647 = vld [vmem:[%s630 + $0x40] sm:$0xf]
        %v648 = vld [vmem:[%s630 + $0x44] sm:$0xf]
        %v649 = vld [vmem:[%s630 + $0x48] sm:$0xf]
        %v650 = vld [vmem:[%s630 + $0x4c] sm:$0xf]
        %v651 = vld [vmem:[%s630 + $0x50] sm:$0xf]
        %v652 = vld [vmem:[%s630 + $0x54] sm:$0xf]
        %v653 = vld [vmem:[%s630 + $0x58] sm:$0xf]
        %v654 = vld [vmem:[%s630 + $0x5c] sm:$0xf]
        %v655 = vld [vmem:[%s630 + $0x60] sm:$0xf]
        %v656 = vld [vmem:[%s630 + $0x64] sm:$0xf]
        %v657 = vld [vmem:[%s630 + $0x68] sm:$0xf]
        %v658 = vld [vmem:[%s630 + $0x6c] sm:$0xf]
        %v659 = vld [vmem:[%s630 + $0x70] sm:$0xf]
        %v660 = vld [vmem:[%s630 + $0x74] sm:$0xf]
        %v661 = vld [vmem:[%s630 + $0x78] sm:$0xf]
        %v662 = vld [vmem:[%s630 + $0x7c] sm:$0xf]
        %s663 = scalar_lea.vmem %s11, 4
        %v664 = vld [vmem:[%s663] sm:$0x1]
        %v665 = vld [vmem:[%s663 + $0x1] sm:$0x1]
        %s666 = scalar_lea.vmem %s12, 128
        %v667 = vld [vmem:[%s666] sm:$0xf]
        %v668 = vld [vmem:[%s666 + $0x4] sm:$0xf]
        %v669 = vld [vmem:[%s666 + $0x8] sm:$0xf]
        %v670 = vld [vmem:[%s666 + $0xc] sm:$0xf]
        %v671 = vld [vmem:[%s666 + $0x10] sm:$0xf]
        %v672 = vld [vmem:[%s666 + $0x14] sm:$0xf]
        %v673 = vld [vmem:[%s666 + $0x18] sm:$0xf]
        %v674 = vld [vmem:[%s666 + $0x1c] sm:$0xf]
        %v675 = vld [vmem:[%s666 + $0x20] sm:$0xf]
        %v676 = vld [vmem:[%s666 + $0x24] sm:$0xf]
        %v677 = vld [vmem:[%s666 + $0x28] sm:$0xf]
        %v678 = vld [vmem:[%s666 + $0x2c] sm:$0xf]
        %v679 = vld [vmem:[%s666 + $0x30] sm:$0xf]
        %v680 = vld [vmem:[%s666 + $0x34] sm:$0xf]
        %v681 = vld [vmem:[%s666 + $0x38] sm:$0xf]
        %v682 = vld [vmem:[%s666 + $0x3c] sm:$0xf]
        %s683 = scalar_lea.vmem %s13, 2
        %v684 = vld [vmem:[%s683] sm:$0x1]
        %v685 = vpack.c.bf16 %v618, %v617
        %v686 = vpack.c.bf16 %v620, %v619
        %v688 = vlaneseq
        %v689 = vshrl.u32 %v688, 7
        %v690 = vsub.s32 0, %v689
        %v691 = vrot.slane %v629, %v690
        %v695 = vunpack.c.l.b16 %v626
        %v696 = vunpack.c.l.b16 %v627
        %v697 = vpack.c.b16 %v696, %v695
        %vm699 = vcmask 130048
        %v701 = vsel %vm699, %v685, 0
        %v704 = vsel %vm699, %v686, 0
        %706 = vmatprep.subr.bf16.mxu0 0
        %707 = vmatpush1.bf16.msra.mxu0 %v697
        %708 = vmatprep.subr.bf16.mxu0 0
        %709 = vmatpush1.bf16.msra.mxu0 0
        %710 = vmatprep.subr.bf16.mxu0 0
        %711 = vmatpush1.bf16.msra.mxu0 0
        %712 = vmatprep.subr.bf16.mxu0 0
        %713 = vmatpush1.bf16.msra.mxu0 0
        %714 = vmatprep.subr.bf16.mxu0 0
        %715 = vmatpush1.bf16.msra.mxu0 0
        %716 = vmatprep.subr.bf16.mxu0 0
        %717 = vmatpush1.bf16.msra.mxu0 0
        %718 = vmatprep.subr.bf16.mxu0 0
        %719 = vmatpush1.bf16.msra.mxu0 0
        %720 = vmatprep.subr.bf16.mxu0 0
        %721 = vmatpush1.bf16.msra.mxu0 0
        %722 = vmatprep.subr.bf16.mxu0 0
        %723 = vmatpush1.bf16.msra.mxu0 0
        %724 = vmatprep.subr.bf16.mxu0 0
        %725 = vmatpush1.bf16.msra.mxu0 0
        %726 = vmatprep.subr.bf16.mxu0 0
        %727 = vmatpush1.bf16.msra.mxu0 0
        %728 = vmatprep.subr.bf16.mxu0 0
        %729 = vmatpush1.bf16.msra.mxu0 0
        %730 = vmatprep.subr.bf16.mxu0 0
        %731 = vmatpush1.bf16.msra.mxu0 0
        %732 = vmatprep.subr.bf16.mxu0 0
        %733 = vmatpush1.bf16.msra.mxu0 0
        %734 = vmatprep.subr.bf16.mxu0 0
        %735 = vmatpush1.bf16.msra.mxu0 0
        %736 = vmatprep.subr.bf16.mxu0 0
        %737 = vmatpush1.bf16.msra.mxu0 0
        %738 = vmatprep.mubr.bf16.mxu0 0
        %739 = vmatmul.mubr.bf16.gmra.mrb[0].mxu0 %v701
        %v740 = vpop.f32.mrb[0].mxu0
        %v741 = vadd.f32 %v691, %v740
        %v742 = vpop.f32.mrb[0].mxu0
        %v743 = vpop.f32.mrb[0].mxu0
        %v744 = vadd.f32 %v691, %v743
        %v745 = vpop.f32.mrb[0].mxu0
        %746 = vmatprep.mubr.bf16.mxu0 0
        %747 = vmatmul.mubr.bf16.gmra.mrb[0].mxu0 %v704
        %v748 = vpop.f32.mrb[0].mxu0
        %v749 = vadd.f32 %v691, %v748
        %v750 = vpop.f32.mrb[0].mxu0
        %v751 = vpop.f32.mrb[0].mxu0
        %v752 = vadd.f32 %v691, %v751
        %v753 = vpop.f32.mrb[0].mxu0
        %754 = vdwg.mxu0
        %v755 = vmul.f32 %v741, 0.01
        %v756 = vmul.f32 %v744, 0.01
        %v757 = vmul.f32 %v749, 0.01
        %v758 = vmul.f32 %v752, 0.01
        %v759 = vmax.f32 %v741, %v755
        %v760 = vmax.f32 %v744, %v756
        %v761 = vmax.f32 %v749, %v757
        %v762 = vmax.f32 %v752, %v758
        %v763 = vpack.c.bf16 %v760, %v759
        %v764 = vpack.c.bf16 %v762, %v761
        %v766 = vlaneseq
        %v767 = vshrl.u32 %v766, 7
        %v768 = vsub.s32 0, %v767
        %v769 = vrot.slane %v664, %v768
        %v787 = vunpack.c.l.b16 %v631
        %v788 = vunpack.c.l.b16 %v632
        %v789 = vunpack.c.l.b16 %v633
        %v790 = vunpack.c.l.b16 %v634
        %v791 = vunpack.c.l.b16 %v635
        %v792 = vunpack.c.l.b16 %v636
        %v793 = vunpack.c.l.b16 %v637
        %v794 = vunpack.c.l.b16 %v638
        %v795 = vunpack.c.l.b16 %v639
        %v796 = vunpack.c.l.b16 %v640
        %v797 = vunpack.c.l.b16 %v641
        %v798 = vunpack.c.l.b16 %v642
        %v799 = vunpack.c.l.b16 %v643
        %v800 = vunpack.c.l.b16 %v644
        %v801 = vunpack.c.l.b16 %v645
        %v802 = vunpack.c.l.b16 %v646
        %v803 = vpack.c.b16 %v788, %v787
        %v804 = vpack.c.b16 %v790, %v789
        %v805 = vpack.c.b16 %v792, %v791
        %v806 = vpack.c.b16 %v794, %v793
        %v807 = vpack.c.b16 %v796, %v795
        %v808 = vpack.c.b16 %v798, %v797
        %v809 = vpack.c.b16 %v800, %v799
        %v810 = vpack.c.b16 %v802, %v801
        %819 = vmatprep.subr.bf16.mxu0 0
        %820 = vmatpush1.bf16.msra.mxu0 %v803
        %821 = vmatprep.subr.bf16.mxu0 0
        %822 = vmatpush1.bf16.msra.mxu0 %v804
        %823 = vmatprep.subr.bf16.mxu0 0
        %824 = vmatpush1.bf16.msra.mxu0 %v805
        %825 = vmatprep.subr.bf16.mxu0 0
        %826 = vmatpush1.bf16.msra.mxu0 %v806
        %827 = vmatprep.subr.bf16.mxu0 0
        %828 = vmatpush1.bf16.msra.mxu0 %v807
        %829 = vmatprep.subr.bf16.mxu0 0
        %830 = vmatpush1.bf16.msra.mxu0 %v808
        %831 = vmatprep.subr.bf16.mxu0 0
        %832 = vmatpush1.bf16.msra.mxu0 %v809
        %833 = vmatprep.subr.bf16.mxu0 0
        %834 = vmatpush1.bf16.msra.mxu0 %v810
        %835 = vmatprep.subr.bf16.mxu0 0
        %836 = vmatpush1.bf16.msra.mxu0 0
        %837 = vmatprep.subr.bf16.mxu0 0
        %838 = vmatpush1.bf16.msra.mxu0 0
        %839 = vmatprep.subr.bf16.mxu0 0
        %840 = vmatpush1.bf16.msra.mxu0 0
        %841 = vmatprep.subr.bf16.mxu0 0
        %842 = vmatpush1.bf16.msra.mxu0 0
        %843 = vmatprep.subr.bf16.mxu0 0
        %844 = vmatpush1.bf16.msra.mxu0 0
        %845 = vmatprep.subr.bf16.mxu0 0
        %846 = vmatpush1.bf16.msra.mxu0 0
        %847 = vmatprep.subr.bf16.mxu0 0
        %848 = vmatpush1.bf16.msra.mxu0 0
        %849 = vmatprep.subr.bf16.mxu0 0
        %850 = vmatpush1.bf16.msra.mxu0 0
        %851 = vmatprep.mubr.bf16.mxu0 0
        %852 = vmatmul.mubr.bf16.gmra.mrb[0].mxu0 %v763
        %v853 = vpop.f32.mrb[0].mxu0
        %v854 = vadd.f32 %v769, %v853
        %v855 = vpop.f32.mrb[0].mxu0
        %v856 = vpop.f32.mrb[0].mxu0
        %v857 = vadd.f32 %v769, %v856
        %v858 = vpop.f32.mrb[0].mxu0
        %859 = vmatprep.mubr.bf16.mxu0 0
        %860 = vmatmul.mubr.bf16.gmra.mrb[0].mxu0 %v764
        %v861 = vpop.f32.mrb[0].mxu0
        %v862 = vadd.f32 %v769, %v861
        %v863 = vpop.f32.mrb[0].mxu0
        %v864 = vpop.f32.mrb[0].mxu0
        %v865 = vadd.f32 %v769, %v864
        %v866 = vpop.f32.mrb[0].mxu0
        %867 = vdwg.mxu0
        %v868 = vmul.f32 %v854, 0.01
        %v869 = vmul.f32 %v857, 0.01
        %v870 = vmul.f32 %v862, 0.01
        %v871 = vmul.f32 %v865, 0.01
        %v872 = vmax.f32 %v854, %v868
        %v873 = vmax.f32 %v857, %v869
        %v874 = vmax.f32 %v862, %v870
        %v875 = vmax.f32 %v865, %v871
        %v876 = vpack.c.bf16 %v873, %v872
        %v877 = vpack.c.bf16 %v875, %v874
        %v879 = vlaneseq
        %v880 = vshrl.u32 %v879, 7
        %v881 = vsub.s32 0, %v880
        %v882 = vrot.slane %v665, %v881
        %v900 = vunpack.c.l.b16 %v647
        %v901 = vunpack.c.l.b16 %v648
        %v902 = vunpack.c.l.b16 %v649
        %v903 = vunpack.c.l.b16 %v650
        %v904 = vunpack.c.l.b16 %v651
        %v905 = vunpack.c.l.b16 %v652
        %v906 = vunpack.c.l.b16 %v653
        %v907 = vunpack.c.l.b16 %v654
        %v908 = vunpack.c.l.b16 %v655
        %v909 = vunpack.c.l.b16 %v656
        %v910 = vunpack.c.l.b16 %v657
        %v911 = vunpack.c.l.b16 %v658
        %v912 = vunpack.c.l.b16 %v659
        %v913 = vunpack.c.l.b16 %v660
        %v914 = vunpack.c.l.b16 %v661
        %v915 = vunpack.c.l.b16 %v662
        %v916 = vpack.c.b16 %v901, %v900
        %v917 = vpack.c.b16 %v903, %v902
        %v918 = vpack.c.b16 %v905, %v904
        %v919 = vpack.c.b16 %v907, %v906
        %v920 = vpack.c.b16 %v909, %v908
        %v921 = vpack.c.b16 %v911, %v910
        %v922 = vpack.c.b16 %v913, %v912
        %v923 = vpack.c.b16 %v915, %v914
        %932 = vmatprep.subr.bf16.mxu0 0
        %933 = vmatpush1.bf16.msra.mxu0 %v916
        %934 = vmatprep.subr.bf16.mxu0 0
        %935 = vmatpush1.bf16.msra.mxu0 %v917
        %936 = vmatprep.subr.bf16.mxu0 0
        %937 = vmatpush1.bf16.msra.mxu0 %v918
        %938 = vmatprep.subr.bf16.mxu0 0
        %939 = vmatpush1.bf16.msra.mxu0 %v919
        %940 = vmatprep.subr.bf16.mxu0 0
        %941 = vmatpush1.bf16.msra.mxu0 %v920
        %942 = vmatprep.subr.bf16.mxu0 0
        %943 = vmatpush1.bf16.msra.mxu0 %v921
        %944 = vmatprep.subr.bf16.mxu0 0
        %945 = vmatpush1.bf16.msra.mxu0 %v922
        %946 = vmatprep.subr.bf16.mxu0 0
        %947 = vmatpush1.bf16.msra.mxu0 %v923
        %948 = vmatprep.subr.bf16.mxu0 0
        %949 = vmatpush1.bf16.msra.mxu0 0
        %950 = vmatprep.subr.bf16.mxu0 0
        %951 = vmatpush1.bf16.msra.mxu0 0
        %952 = vmatprep.subr.bf16.mxu0 0
        %953 = vmatpush1.bf16.msra.mxu0 0
        %954 = vmatprep.subr.bf16.mxu0 0
        %955 = vmatpush1.bf16.msra.mxu0 0
        %956 = vmatprep.subr.bf16.mxu0 0
        %957 = vmatpush1.bf16.msra.mxu0 0
        %958 = vmatprep.subr.bf16.mxu0 0
        %959 = vmatpush1.bf16.msra.mxu0 0
        %960 = vmatprep.subr.bf16.mxu0 0
        %961 = vmatpush1.bf16.msra.mxu0 0
        %962 = vmatprep.subr.bf16.mxu0 0
        %963 = vmatpush1.bf16.msra.mxu0 0
        %964 = vmatprep.mubr.bf16.mxu0 0
        %965 = vmatmul.mubr.bf16.gmra.mrb[0].mxu0 %v876
        %v966 = vpop.f32.mrb[0].mxu0
        %v967 = vadd.f32 %v882, %v966
        %v968 = vpop.f32.mrb[0].mxu0
        %v969 = vpop.f32.mrb[0].mxu0
        %v970 = vadd.f32 %v882, %v969
        %v971 = vpop.f32.mrb[0].mxu0
        %972 = vmatprep.mubr.bf16.mxu0 0
        %973 = vmatmul.mubr.bf16.gmra.mrb[0].mxu0 %v877
        %v974 = vpop.f32.mrb[0].mxu0
        %v975 = vadd.f32 %v882, %v974
        %v976 = vpop.f32.mrb[0].mxu0
        %v977 = vpop.f32.mrb[0].mxu0
        %v978 = vadd.f32 %v882, %v977
        %v979 = vpop.f32.mrb[0].mxu0
        %980 = vdwg.mxu0
        %v981 = vmul.f32 %v967, 0.01
        %v982 = vmul.f32 %v970, 0.01
        %v983 = vmul.f32 %v975, 0.01
        %v984 = vmul.f32 %v978, 0.01
        %v985 = vmax.f32 %v967, %v981
        %v986 = vmax.f32 %v970, %v982
        %v987 = vmax.f32 %v975, %v983
        %v988 = vmax.f32 %v978, %v984
        %v989 = vpack.c.bf16 %v986, %v985
        %v990 = vpack.c.bf16 %v988, %v987
        %v992 = vlaneseq
        %v993 = vshrl.u32 %v992, 7
        %v994 = vsub.s32 0, %v993
        %v995 = vrot.slane %v684, %v994
        %v1013 = vunpack.c.l.b16 %v667
        %v1014 = vunpack.c.l.b16 %v668
        %v1015 = vunpack.c.l.b16 %v669
        %v1016 = vunpack.c.l.b16 %v670
        %v1017 = vunpack.c.l.b16 %v671
        %v1018 = vunpack.c.l.b16 %v672
        %v1019 = vunpack.c.l.b16 %v673
        %v1020 = vunpack.c.l.b16 %v674
        %v1021 = vunpack.c.l.b16 %v675
        %v1022 = vunpack.c.l.b16 %v676
        %v1023 = vunpack.c.l.b16 %v677
        %v1024 = vunpack.c.l.b16 %v678
        %v1025 = vunpack.c.l.b16 %v679
        %v1026 = vunpack.c.l.b16 %v680
        %v1027 = vunpack.c.l.b16 %v681
        %v1028 = vunpack.c.l.b16 %v682
        %v1029 = vpack.c.b16 %v1014, %v1013
        %v1030 = vpack.c.b16 %v1016, %v1015
        %v1031 = vpack.c.b16 %v1018, %v1017
        %v1032 = vpack.c.b16 %v1020, %v1019
        %v1033 = vpack.c.b16 %v1022, %v1021
        %v1034 = vpack.c.b16 %v1024, %v1023
        %v1035 = vpack.c.b16 %v1026, %v1025
        %v1036 = vpack.c.b16 %v1028, %v1027
        %1045 = vmatprep.subr.bf16.mxu0 0
        %1046 = vmatpush1.bf16.msra.mxu0 %v1029
        %1047 = vmatprep.subr.bf16.mxu0 0
        %1048 = vmatpush1.bf16.msra.mxu0 %v1030
        %1049 = vmatprep.subr.bf16.mxu0 0
        %1050 = vmatpush1.bf16.msra.mxu0 %v1031
        %1051 = vmatprep.subr.bf16.mxu0 0
        %1052 = vmatpush1.bf16.msra.mxu0 %v1032
        %1053 = vmatprep.subr.bf16.mxu0 0
        %1054 = vmatpush1.bf16.msra.mxu0 %v1033
        %1055 = vmatprep.subr.bf16.mxu0 0
        %1056 = vmatpush1.bf16.msra.mxu0 %v1034
        %1057 = vmatprep.subr.bf16.mxu0 0
        %1058 = vmatpush1.bf16.msra.mxu0 %v1035
        %1059 = vmatprep.subr.bf16.mxu0 0
        %1060 = vmatpush1.bf16.msra.mxu0 %v1036
        %1061 = vmatprep.subr.bf16.mxu0 0
        %1062 = vmatpush1.bf16.msra.mxu0 0
        %1063 = vmatprep.subr.bf16.mxu0 0
        %1064 = vmatpush1.bf16.msra.mxu0 0
        %1065 = vmatprep.subr.bf16.mxu0 0
        %1066 = vmatpush1.bf16.msra.mxu0 0
        %1067 = vmatprep.subr.bf16.mxu0 0
        %1068 = vmatpush1.bf16.msra.mxu0 0
        %1069 = vmatprep.subr.bf16.mxu0 0
        %1070 = vmatpush1.bf16.msra.mxu0 0
        %1071 = vmatprep.subr.bf16.mxu0 0
        %1072 = vmatpush1.bf16.msra.mxu0 0
        %1073 = vmatprep.subr.bf16.mxu0 0
        %1074 = vmatpush1.bf16.msra.mxu0 0
        %1075 = vmatprep.subr.bf16.mxu0 0
        %1076 = vmatpush1.bf16.msra.mxu0 0
        %1077 = vmatprep.mubr.bf16.mxu0 0
        %1078 = vmatmul.mubr.bf16.gmra.mrb[0].mxu0 %v989
        %v1079 = vpop.f32.mrb[0].mxu0
        %v1080 = vadd.f32 %v995, %v1079
        %v1081 = vpop.f32.mrb[0].mxu0
        %v1082 = vpop.f32.mrb[0].mxu0
        %v1083 = vadd.f32 %v995, %v1082
        %v1084 = vpop.f32.mrb[0].mxu0
        %1085 = vmatprep.mubr.bf16.mxu0 0
        %1086 = vmatmul.mubr.bf16.gmra.mrb[0].mxu0 %v990
        %v1087 = vpop.f32.mrb[0].mxu0
        %v1088 = vadd.f32 %v995, %v1087
        %v1089 = vpop.f32.mrb[0].mxu0
        %v1090 = vpop.f32.mrb[0].mxu0
        %v1091 = vadd.f32 %v995, %v1090
        %v1092 = vpop.f32.mrb[0].mxu0
        %1093 = vdwg.mxu0
        %v1094 = vtanh.pop %v1080
        %v1095 = vtanh.pop %v1083
        %v1096 = vtanh.pop %v1088
        %v1097 = vtanh.pop %v1091
        %v1098 = vmul.f32 %v1094, 0.5
        %v1099 = vmul.f32 %v1095, 0.5
        %v1100 = vmul.f32 %v1096, 0.5
        %v1101 = vmul.f32 %v1097, 0.5
        %v1102 = vmul.f32 %v1098, 1.442695
        %v1103 = vpow.pop %v1102
        %v1104 = vmul.f32 %v1099, 1.442695
        %v1105 = vpow.pop %v1104
        %v1106 = vmul.f32 %v1100, 1.442695
        %v1107 = vpow.pop %v1106
        %v1108 = vmul.f32 %v1101, 1.442695
        %v1109 = vpow.pop %v1108
        %v1110 = vmul.f32 %v621, %v1103
        %v1111 = vmul.f32 %v622, %v1105
        %v1112 = vmul.f32 %v623, %v1107
        %v1113 = vmul.f32 %v624, %v1109
        %v1114 = vld [vmem:[%s8] sm:$0xf]
        %v1115 = vld [vmem:[%s8 + $0x4] sm:$0xf]
        %v1116 = vld [vmem:[%s9] sm:$0x1]
        %v1117 = vld [vmem:[#allocation7] sm:$0xf]
        %v1118 = vld [vmem:[#allocation7 + $0x4] sm:$0xf]
        %v1119 = vld [vmem:[#allocation7 + $0x8] sm:$0xf]
        %v1120 = vld [vmem:[#allocation7 + $0xc] sm:$0xf]
        %v1121 = vld [vmem:[#allocation7 + $0x10] sm:$0xf]
        %v1122 = vld [vmem:[#allocation7 + $0x14] sm:$0xf]
        %v1123 = vld [vmem:[#allocation7 + $0x18] sm:$0xf]
        %v1124 = vld [vmem:[#allocation7 + $0x1c] sm:$0xf]
        %v1125 = vld [vmem:[#allocation7 + $0x20] sm:$0xf]
        %v1126 = vld [vmem:[#allocation7 + $0x24] sm:$0xf]
        %v1127 = vld [vmem:[#allocation7 + $0x28] sm:$0xf]
        %v1128 = vld [vmem:[#allocation7 + $0x2c] sm:$0xf]
        %v1129 = vld [vmem:[#allocation7 + $0x30] sm:$0xf]
        %v1130 = vld [vmem:[#allocation7 + $0x34] sm:$0xf]
        %v1131 = vld [vmem:[#allocation7 + $0x38] sm:$0xf]
        %v1132 = vld [vmem:[#allocation7 + $0x3c] sm:$0xf]
        %v1133 = vld [vmem:[#allocation7 + $0x40] sm:$0xf]
        %v1134 = vld [vmem:[#allocation7 + $0x44] sm:$0xf]
        %v1135 = vld [vmem:[#allocation7 + $0x48] sm:$0xf]
        %v1136 = vld [vmem:[#allocation7 + $0x4c] sm:$0xf]
        %v1137 = vld [vmem:[#allocation7 + $0x50] sm:$0xf]
        %v1138 = vld [vmem:[#allocation7 + $0x54] sm:$0xf]
        %v1139 = vld [vmem:[#allocation7 + $0x58] sm:$0xf]
        %v1140 = vld [vmem:[#allocation7 + $0x5c] sm:$0xf]
        %v1141 = vld [vmem:[#allocation7 + $0x60] sm:$0xf]
        %v1142 = vld [vmem:[#allocation7 + $0x64] sm:$0xf]
        %v1143 = vld [vmem:[#allocation7 + $0x68] sm:$0xf]
        %v1144 = vld [vmem:[#allocation7 + $0x6c] sm:$0xf]
        %v1145 = vld [vmem:[#allocation7 + $0x70] sm:$0xf]
        %v1146 = vld [vmem:[#allocation7 + $0x74] sm:$0xf]
        %v1147 = vld [vmem:[#allocation7 + $0x78] sm:$0xf]
        %v1148 = vld [vmem:[#allocation7 + $0x7c] sm:$0xf]
        %v1149 = vld [vmem:[%s11] sm:$0x1]
        %v1150 = vld [vmem:[%s11 + $0x1] sm:$0x1]
        %v1151 = vld [vmem:[%s12] sm:$0xf]
        %v1152 = vld [vmem:[%s12 + $0x4] sm:$0xf]
        %v1153 = vld [vmem:[%s12 + $0x8] sm:$0xf]
        %v1154 = vld [vmem:[%s12 + $0xc] sm:$0xf]
        %v1155 = vld [vmem:[%s12 + $0x10] sm:$0xf]
        %v1156 = vld [vmem:[%s12 + $0x14] sm:$0xf]
        %v1157 = vld [vmem:[%s12 + $0x18] sm:$0xf]
        %v1158 = vld [vmem:[%s12 + $0x1c] sm:$0xf]
        %v1159 = vld [vmem:[%s12 + $0x20] sm:$0xf]
        %v1160 = vld [vmem:[%s12 + $0x24] sm:$0xf]
        %v1161 = vld [vmem:[%s12 + $0x28] sm:$0xf]
        %v1162 = vld [vmem:[%s12 + $0x2c] sm:$0xf]
        %v1163 = vld [vmem:[%s12 + $0x30] sm:$0xf]
        %v1164 = vld [vmem:[%s12 + $0x34] sm:$0xf]
        %v1165 = vld [vmem:[%s12 + $0x38] sm:$0xf]
        %v1166 = vld [vmem:[%s12 + $0x3c] sm:$0xf]
        %v1167 = vld [vmem:[%s13] sm:$0x1]
        %v1169 = vlaneseq
        %v1170 = vshrl.u32 %v1169, 7
        %v1171 = vsub.s32 0, %v1170
        %v1172 = vrot.slane %v1116, %v1171
        %v1176 = vunpack.c.l.b16 %v1114
        %v1177 = vunpack.c.l.b16 %v1115
        %v1178 = vpack.c.b16 %v1177, %v1176
        %1180 = vmatprep.subr.bf16.mxu0 0
        %1181 = vmatpush1.bf16.msra.mxu0 %v1178
        %1182 = vmatprep.subr.bf16.mxu0 0
        %1183 = vmatpush1.bf16.msra.mxu0 0
        %1184 = vmatprep.subr.bf16.mxu0 0
        %1185 = vmatpush1.bf16.msra.mxu0 0
        %1186 = vmatprep.subr.bf16.mxu0 0
        %1187 = vmatpush1.bf16.msra.mxu0 0
        %1188 = vmatprep.subr.bf16.mxu0 0
        %1189 = vmatpush1.bf16.msra.mxu0 0
        %1190 = vmatprep.subr.bf16.mxu0 0
        %1191 = vmatpush1.bf16.msra.mxu0 0
        %1192 = vmatprep.subr.bf16.mxu0 0
        %1193 = vmatpush1.bf16.msra.mxu0 0
        %1194 = vmatprep.subr.bf16.mxu0 0
        %1195 = vmatpush1.bf16.msra.mxu0 0
        %1196 = vmatprep.subr.bf16.mxu0 0
        %1197 = vmatpush1.bf16.msra.mxu0 0
        %1198 = vmatprep.subr.bf16.mxu0 0
        %1199 = vmatpush1.bf16.msra.mxu0 0
        %1200 = vmatprep.subr.bf16.mxu0 0
        %1201 = vmatpush1.bf16.msra.mxu0 0
        %1202 = vmatprep.subr.bf16.mxu0 0
        %1203 = vmatpush1.bf16.msra.mxu0 0
        %1204 = vmatprep.subr.bf16.mxu0 0
        %1205 = vmatpush1.bf16.msra.mxu0 0
        %1206 = vmatprep.subr.bf16.mxu0 0
        %1207 = vmatpush1.bf16.msra.mxu0 0
        %1208 = vmatprep.subr.bf16.mxu0 0
        %1209 = vmatpush1.bf16.msra.mxu0 0
        %1210 = vmatprep.subr.bf16.mxu0 0
        %1211 = vmatpush1.bf16.msra.mxu0 0
        %1212 = vmatprep.mubr.bf16.mxu0 0
        %1213 = vmatmul.mubr.bf16.gmra.mrb[0].mxu0 %v701
        %v1214 = vpop.f32.mrb[0].mxu0
        %v1215 = vadd.f32 %v1172, %v1214
        %v1216 = vpop.f32.mrb[0].mxu0
        %v1217 = vpop.f32.mrb[0].mxu0
        %v1218 = vadd.f32 %v1172, %v1217
        %v1219 = vpop.f32.mrb[0].mxu0
        %1220 = vmatprep.mubr.bf16.mxu0 0
        %1221 = vmatmul.mubr.bf16.gmra.mrb[0].mxu0 %v704
        %v1222 = vpop.f32.mrb[0].mxu0
        %v1223 = vadd.f32 %v1172, %v1222
        %v1224 = vpop.f32.mrb[0].mxu0
        %v1225 = vpop.f32.mrb[0].mxu0
        %v1226 = vadd.f32 %v1172, %v1225
        %v1227 = vpop.f32.mrb[0].mxu0
        %1228 = vdwg.mxu0
        %v1229 = vmul.f32 %v1215, 0.01
        %v1230 = vmul.f32 %v1218, 0.01
        %v1231 = vmul.f32 %v1223, 0.01
        %v1232 = vmul.f32 %v1226, 0.01
        %v1233 = vmax.f32 %v1215, %v1229
        %v1234 = vmax.f32 %v1218, %v1230
        %v1235 = vmax.f32 %v1223, %v1231
        %v1236 = vmax.f32 %v1226, %v1232
        %v1237 = vpack.c.bf16 %v1234, %v1233
        %v1238 = vpack.c.bf16 %v1236, %v1235
        %v1240 = vlaneseq
        %v1241 = vshrl.u32 %v1240, 7
        %v1242 = vsub.s32 0, %v1241
        %v1243 = vrot.slane %v1149, %v1242
        %v1261 = vunpack.c.l.b16 %v1117
        %v1262 = vunpack.c.l.b16 %v1118
        %v1263 = vunpack.c.l.b16 %v1119
        %v1264 = vunpack.c.l.b16 %v1120
        %v1265 = vunpack.c.l.b16 %v1121
        %v1266 = vunpack.c.l.b16 %v1122
        %v1267 = vunpack.c.l.b16 %v1123
        %v1268 = vunpack.c.l.b16 %v1124
        %v1269 = vunpack.c.l.b16 %v1125
        %v1270 = vunpack.c.l.b16 %v1126
        %v1271 = vunpack.c.l.b16 %v1127
        %v1272 = vunpack.c.l.b16 %v1128
        %v1273 = vunpack.c.l.b16 %v1129
        %v1274 = vunpack.c.l.b16 %v1130
        %v1275 = vunpack.c.l.b16 %v1131
        %v1276 = vunpack.c.l.b16 %v1132
        %v1277 = vpack.c.b16 %v1262, %v1261
        %v1278 = vpack.c.b16 %v1264, %v1263
        %v1279 = vpack.c.b16 %v1266, %v1265
        %v1280 = vpack.c.b16 %v1268, %v1267
        %v1281 = vpack.c.b16 %v1270, %v1269
        %v1282 = vpack.c.b16 %v1272, %v1271
        %v1283 = vpack.c.b16 %v1274, %v1273
        %v1284 = vpack.c.b16 %v1276, %v1275
        %1293 = vmatprep.subr.bf16.mxu0 0
        %1294 = vmatpush1.bf16.msra.mxu0 %v1277
        %1295 = vmatprep.subr.bf16.mxu0 0
        %1296 = vmatpush1.bf16.msra.mxu0 %v1278
        %1297 = vmatprep.subr.bf16.mxu0 0
        %1298 = vmatpush1.bf16.msra.mxu0 %v1279
        %1299 = vmatprep.subr.bf16.mxu0 0
        %1300 = vmatpush1.bf16.msra.mxu0 %v1280
        %1301 = vmatprep.subr.bf16.mxu0 0
        %1302 = vmatpush1.bf16.msra.mxu0 %v1281
        %1303 = vmatprep.subr.bf16.mxu0 0
        %1304 = vmatpush1.bf16.msra.mxu0 %v1282
        %1305 = vmatprep.subr.bf16.mxu0 0
        %1306 = vmatpush1.bf16.msra.mxu0 %v1283
        %1307 = vmatprep.subr.bf16.mxu0 0
        %1308 = vmatpush1.bf16.msra.mxu0 %v1284
        %1309 = vmatprep.subr.bf16.mxu0 0
        %1310 = vmatpush1.bf16.msra.mxu0 0
        %1311 = vmatprep.subr.bf16.mxu0 0
        %1312 = vmatpush1.bf16.msra.mxu0 0
        %1313 = vmatprep.subr.bf16.mxu0 0
        %1314 = vmatpush1.bf16.msra.mxu0 0
        %1315 = vmatprep.subr.bf16.mxu0 0
        %1316 = vmatpush1.bf16.msra.mxu0 0
        %1317 = vmatprep.subr.bf16.mxu0 0
        %1318 = vmatpush1.bf16.msra.mxu0 0
        %1319 = vmatprep.subr.bf16.mxu0 0
        %1320 = vmatpush1.bf16.msra.mxu0 0
        %1321 = vmatprep.subr.bf16.mxu0 0
        %1322 = vmatpush1.bf16.msra.mxu0 0
        %1323 = vmatprep.subr.bf16.mxu0 0
        %1324 = vmatpush1.bf16.msra.mxu0 0
        %1325 = vmatprep.mubr.bf16.mxu0 0
        %1326 = vmatmul.mubr.bf16.gmra.mrb[0].mxu0 %v1237
        %v1327 = vpop.f32.mrb[0].mxu0
        %v1328 = vadd.f32 %v1243, %v1327
        %v1329 = vpop.f32.mrb[0].mxu0
        %v1330 = vpop.f32.mrb[0].mxu0
        %v1331 = vadd.f32 %v1243, %v1330
        %v1332 = vpop.f32.mrb[0].mxu0
        %1333 = vmatprep.mubr.bf16.mxu0 0
        %1334 = vmatmul.mubr.bf16.gmra.mrb[0].mxu0 %v1238
        %v1335 = vpop.f32.mrb[0].mxu0
        %v1336 = vadd.f32 %v1243, %v1335
        %v1337 = vpop.f32.mrb[0].mxu0
        %v1338 = vpop.f32.mrb[0].mxu0
        %v1339 = vadd.f32 %v1243, %v1338
        %v1340 = vpop.f32.mrb[0].mxu0
        %1341 = vdwg.mxu0
        %v1342 = vmul.f32 %v1328, 0.01
        %v1343 = vmul.f32 %v1331, 0.01
        %v1344 = vmul.f32 %v1336, 0.01
        %v1345 = vmul.f32 %v1339, 0.01
        %v1346 = vmax.f32 %v1328, %v1342
        %v1347 = vmax.f32 %v1331, %v1343
        %v1348 = vmax.f32 %v1336, %v1344
        %v1349 = vmax.f32 %v1339, %v1345
        %v1350 = vpack.c.bf16 %v1347, %v1346
        %v1351 = vpack.c.bf16 %v1349, %v1348
        %v1353 = vlaneseq
        %v1354 = vshrl.u32 %v1353, 7
        %v1355 = vsub.s32 0, %v1354
        %v1356 = vrot.slane %v1150, %v1355
        %v1374 = vunpack.c.l.b16 %v1133
        %v1375 = vunpack.c.l.b16 %v1134
        %v1376 = vunpack.c.l.b16 %v1135
        %v1377 = vunpack.c.l.b16 %v1136
        %v1378 = vunpack.c.l.b16 %v1137
        %v1379 = vunpack.c.l.b16 %v1138
        %v1380 = vunpack.c.l.b16 %v1139
        %v1381 = vunpack.c.l.b16 %v1140
        %v1382 = vunpack.c.l.b16 %v1141
        %v1383 = vunpack.c.l.b16 %v1142
        %v1384 = vunpack.c.l.b16 %v1143
        %v1385 = vunpack.c.l.b16 %v1144
        %v1386 = vunpack.c.l.b16 %v1145
        %v1387 = vunpack.c.l.b16 %v1146
        %v1388 = vunpack.c.l.b16 %v1147
        %v1389 = vunpack.c.l.b16 %v1148
        %v1390 = vpack.c.b16 %v1375, %v1374
        %v1391 = vpack.c.b16 %v1377, %v1376
        %v1392 = vpack.c.b16 %v1379, %v1378
        %v1393 = vpack.c.b16 %v1381, %v1380
        %v1394 = vpack.c.b16 %v1383, %v1382
        %v1395 = vpack.c.b16 %v1385, %v1384
        %v1396 = vpack.c.b16 %v1387, %v1386
        %v1397 = vpack.c.b16 %v1389, %v1388
        %1406 = vmatprep.subr.bf16.mxu0 0
        %1407 = vmatpush1.bf16.msra.mxu0 %v1390
        %1408 = vmatprep.subr.bf16.mxu0 0
        %1409 = vmatpush1.bf16.msra.mxu0 %v1391
        %1410 = vmatprep.subr.bf16.mxu0 0
        %1411 = vmatpush1.bf16.msra.mxu0 %v1392
        %1412 = vmatprep.subr.bf16.mxu0 0
        %1413 = vmatpush1.bf16.msra.mxu0 %v1393
        %1414 = vmatprep.subr.bf16.mxu0 0
        %1415 = vmatpush1.bf16.msra.mxu0 %v1394
        %1416 = vmatprep.subr.bf16.mxu0 0
        %1417 = vmatpush1.bf16.msra.mxu0 %v1395
        %1418 = vmatprep.subr.bf16.mxu0 0
        %1419 = vmatpush1.bf16.msra.mxu0 %v1396
        %1420 = vmatprep.subr.bf16.mxu0 0
        %1421 = vmatpush1.bf16.msra.mxu0 %v1397
        %1422 = vmatprep.subr.bf16.mxu0 0
        %1423 = vmatpush1.bf16.msra.mxu0 0
        %1424 = vmatprep.subr.bf16.mxu0 0
        %1425 = vmatpush1.bf16.msra.mxu0 0
        %1426 = vmatprep.subr.bf16.mxu0 0
        %1427 = vmatpush1.bf16.msra.mxu0 0
        %1428 = vmatprep.subr.bf16.mxu0 0
        %1429 = vmatpush1.bf16.msra.mxu0 0
        %1430 = vmatprep.subr.bf16.mxu0 0
        %1431 = vmatpush1.bf16.msra.mxu0 0
        %1432 = vmatprep.subr.bf16.mxu0 0
        %1433 = vmatpush1.bf16.msra.mxu0 0
        %1434 = vmatprep.subr.bf16.mxu0 0
        %1435 = vmatpush1.bf16.msra.mxu0 0
        %1436 = vmatprep.subr.bf16.mxu0 0
        %1437 = vmatpush1.bf16.msra.mxu0 0
        %1438 = vmatprep.mubr.bf16.mxu0 0
        %1439 = vmatmul.mubr.bf16.gmra.mrb[0].mxu0 %v1350
        %v1440 = vpop.f32.mrb[0].mxu0
        %v1441 = vadd.f32 %v1356, %v1440
        %v1442 = vpop.f32.mrb[0].mxu0
        %v1443 = vpop.f32.mrb[0].mxu0
        %v1444 = vadd.f32 %v1356, %v1443
        %v1445 = vpop.f32.mrb[0].mxu0
        %1446 = vmatprep.mubr.bf16.mxu0 0
        %1447 = vmatmul.mubr.bf16.gmra.mrb[0].mxu0 %v1351
        %v1448 = vpop.f32.mrb[0].mxu0
        %v1449 = vadd.f32 %v1356, %v1448
        %v1450 = vpop.f32.mrb[0].mxu0
        %v1451 = vpop.f32.mrb[0].mxu0
        %v1452 = vadd.f32 %v1356, %v1451
        %v1453 = vpop.f32.mrb[0].mxu0
        %1454 = vdwg.mxu0
        %v1455 = vmul.f32 %v1441, 0.01
        %v1456 = vmul.f32 %v1444, 0.01
        %v1457 = vmul.f32 %v1449, 0.01
        %v1458 = vmul.f32 %v1452, 0.01
        %v1459 = vmax.f32 %v1441, %v1455
        %v1460 = vmax.f32 %v1444, %v1456
        %v1461 = vmax.f32 %v1449, %v1457
        %v1462 = vmax.f32 %v1452, %v1458
        %v1463 = vpack.c.bf16 %v1460, %v1459
        %v1464 = vpack.c.bf16 %v1462, %v1461
        %v1466 = vlaneseq
        %v1467 = vshrl.u32 %v1466, 7
        %v1468 = vsub.s32 0, %v1467
        %v1469 = vrot.slane %v1167, %v1468
        %v1487 = vunpack.c.l.b16 %v1151
        %v1488 = vunpack.c.l.b16 %v1152
        %v1489 = vunpack.c.l.b16 %v1153
        %v1490 = vunpack.c.l.b16 %v1154
        %v1491 = vunpack.c.l.b16 %v1155
        %v1492 = vunpack.c.l.b16 %v1156
        %v1493 = vunpack.c.l.b16 %v1157
        %v1494 = vunpack.c.l.b16 %v1158
        %v1495 = vunpack.c.l.b16 %v1159
        %v1496 = vunpack.c.l.b16 %v1160
        %v1497 = vunpack.c.l.b16 %v1161
        %v1498 = vunpack.c.l.b16 %v1162
        %v1499 = vunpack.c.l.b16 %v1163
        %v1500 = vunpack.c.l.b16 %v1164
        %v1501 = vunpack.c.l.b16 %v1165
        %v1502 = vunpack.c.l.b16 %v1166
        %v1503 = vpack.c.b16 %v1488, %v1487
        %v1504 = vpack.c.b16 %v1490, %v1489
        %v1505 = vpack.c.b16 %v1492, %v1491
        %v1506 = vpack.c.b16 %v1494, %v1493
        %v1507 = vpack.c.b16 %v1496, %v1495
        %v1508 = vpack.c.b16 %v1498, %v1497
        %v1509 = vpack.c.b16 %v1500, %v1499
        %v1510 = vpack.c.b16 %v1502, %v1501
        %1519 = vmatprep.subr.bf16.mxu0 0
        %1520 = vmatpush1.bf16.msra.mxu0 %v1503
        %1521 = vmatprep.subr.bf16.mxu0 0
        %1522 = vmatpush1.bf16.msra.mxu0 %v1504
        %1523 = vmatprep.subr.bf16.mxu0 0
        %1524 = vmatpush1.bf16.msra.mxu0 %v1505
        %1525 = vmatprep.subr.bf16.mxu0 0
        %1526 = vmatpush1.bf16.msra.mxu0 %v1506
        %1527 = vmatprep.subr.bf16.mxu0 0
        %1528 = vmatpush1.bf16.msra.mxu0 %v1507
        %1529 = vmatprep.subr.bf16.mxu0 0
        %1530 = vmatpush1.bf16.msra.mxu0 %v1508
        %1531 = vmatprep.subr.bf16.mxu0 0
        %1532 = vmatpush1.bf16.msra.mxu0 %v1509
        %1533 = vmatprep.subr.bf16.mxu0 0
        %1534 = vmatpush1.bf16.msra.mxu0 %v1510
        %1535 = vmatprep.subr.bf16.mxu0 0
        %1536 = vmatpush1.bf16.msra.mxu0 0
        %1537 = vmatprep.subr.bf16.mxu0 0
        %1538 = vmatpush1.bf16.msra.mxu0 0
        %1539 = vmatprep.subr.bf16.mxu0 0
        %1540 = vmatpush1.bf16.msra.mxu0 0
        %1541 = vmatprep.subr.bf16.mxu0 0
        %1542 = vmatpush1.bf16.msra.mxu0 0
        %1543 = vmatprep.subr.bf16.mxu0 0
        %1544 = vmatpush1.bf16.msra.mxu0 0
        %1545 = vmatprep.subr.bf16.mxu0 0
        %1546 = vmatpush1.bf16.msra.mxu0 0
        %1547 = vmatprep.subr.bf16.mxu0 0
        %1548 = vmatpush1.bf16.msra.mxu0 0
        %1549 = vmatprep.subr.bf16.mxu0 0
        %1550 = vmatpush1.bf16.msra.mxu0 0
        %1551 = vmatprep.mubr.bf16.mxu0 0
        %1552 = vmatmul.mubr.bf16.gmra.mrb[0].mxu0 %v1463
        %v1553 = vpop.f32.mrb[0].mxu0
        %v1554 = vadd.f32 %v1469, %v1553
        %v1555 = vpop.f32.mrb[0].mxu0
        %v1556 = vpop.f32.mrb[0].mxu0
        %v1557 = vadd.f32 %v1469, %v1556
        %v1558 = vpop.f32.mrb[0].mxu0
        %1559 = vmatprep.mubr.bf16.mxu0 0
        %1560 = vmatmul.mubr.bf16.gmra.mrb[0].mxu0 %v1464
        %v1561 = vpop.f32.mrb[0].mxu0
        %v1562 = vadd.f32 %v1469, %v1561
        %v1563 = vpop.f32.mrb[0].mxu0
        %v1564 = vpop.f32.mrb[0].mxu0
        %v1565 = vadd.f32 %v1469, %v1564
        %v1566 = vpop.f32.mrb[0].mxu0
        %1567 = vdwg.mxu0
        %v1568 = vmul.f32 %v1554, 0.375
        %v1569 = vmul.f32 %v1557, 0.375
        %v1570 = vmul.f32 %v1562, 0.375
        %v1571 = vmul.f32 %v1565, 0.375
        %v1572 = vsub.f32 %v1110, %v1568
        %v1573 = vsub.f32 %v1111, %v1569
        %v1574 = vsub.f32 %v1112, %v1570
        %v1575 = vsub.f32 %v1113, %v1571
        %v1576 = vld [vmem:[%s2] sm:$0xf]
        %v1577 = vld [vmem:[#allocation2] sm:$0x1]
        %v1578 = vld [vmem:[%s4] sm:$0xf]
        %v1579 = vld [vmem:[%s4 + $0x4] sm:$0xf]
        %v1580 = vld [vmem:[%s4 + $0x8] sm:$0xf]
        %v1581 = vld [vmem:[%s4 + $0xc] sm:$0xf]
        %v1582 = vld [vmem:[%s4 + $0x10] sm:$0xf]
        %v1583 = vld [vmem:[%s4 + $0x14] sm:$0xf]
        %v1584 = vld [vmem:[%s4 + $0x18] sm:$0xf]
        %v1585 = vld [vmem:[%s4 + $0x1c] sm:$0xf]
        %v1586 = vld [vmem:[%s4 + $0x20] sm:$0xf]
        %v1587 = vld [vmem:[%s4 + $0x24] sm:$0xf]
        %v1588 = vld [vmem:[%s4 + $0x28] sm:$0xf]
        %v1589 = vld [vmem:[%s4 + $0x2c] sm:$0xf]
        %v1590 = vld [vmem:[%s4 + $0x30] sm:$0xf]
        %v1591 = vld [vmem:[%s4 + $0x34] sm:$0xf]
        %v1592 = vld [vmem:[%s4 + $0x38] sm:$0xf]
        %v1593 = vld [vmem:[%s4 + $0x3c] sm:$0xf]
        %v1594 = vld [vmem:[%s4 + $0x40] sm:$0xf]
        %v1595 = vld [vmem:[%s4 + $0x44] sm:$0xf]
        %v1596 = vld [vmem:[%s4 + $0x48] sm:$0xf]
        %v1597 = vld [vmem:[%s4 + $0x4c] sm:$0xf]
        %v1598 = vld [vmem:[%s4 + $0x50] sm:$0xf]
        %v1599 = vld [vmem:[%s4 + $0x54] sm:$0xf]
        %v1600 = vld [vmem:[%s4 + $0x58] sm:$0xf]
        %v1601 = vld [vmem:[%s4 + $0x5c] sm:$0xf]
        %v1602 = vld [vmem:[%s4 + $0x60] sm:$0xf]
        %v1603 = vld [vmem:[%s4 + $0x64] sm:$0xf]
        %v1604 = vld [vmem:[%s4 + $0x68] sm:$0xf]
        %v1605 = vld [vmem:[%s4 + $0x6c] sm:$0xf]
        %v1606 = vld [vmem:[%s4 + $0x70] sm:$0xf]
        %v1607 = vld [vmem:[%s4 + $0x74] sm:$0xf]
        %v1608 = vld [vmem:[%s4 + $0x78] sm:$0xf]
        %v1609 = vld [vmem:[%s4 + $0x7c] sm:$0xf]
        %v1610 = vld [vmem:[%s5] sm:$0x1]
        %v1611 = vld [vmem:[%s5 + $0x1] sm:$0x1]
        %v1612 = vld [vmem:[%s6] sm:$0xf]
        %v1613 = vld [vmem:[%s6 + $0x4] sm:$0xf]
        %v1614 = vld [vmem:[%s6 + $0x8] sm:$0xf]
        %v1615 = vld [vmem:[%s6 + $0xc] sm:$0xf]
        %v1616 = vld [vmem:[%s6 + $0x10] sm:$0xf]
        %v1617 = vld [vmem:[%s6 + $0x14] sm:$0xf]
        %v1618 = vld [vmem:[%s6 + $0x18] sm:$0xf]
        %v1619 = vld [vmem:[%s6 + $0x1c] sm:$0xf]
        %v1620 = vld [vmem:[%s6 + $0x20] sm:$0xf]
        %v1621 = vld [vmem:[%s6 + $0x24] sm:$0xf]
        %v1622 = vld [vmem:[%s6 + $0x28] sm:$0xf]
        %v1623 = vld [vmem:[%s6 + $0x2c] sm:$0xf]
        %v1624 = vld [vmem:[%s6 + $0x30] sm:$0xf]
        %v1625 = vld [vmem:[%s6 + $0x34] sm:$0xf]
        %v1626 = vld [vmem:[%s6 + $0x38] sm:$0xf]
        %v1627 = vld [vmem:[%s6 + $0x3c] sm:$0xf]
        %v1628 = vld [vmem:[#allocation5] sm:$0x1]
        %v1630 = vlaneseq
        %v1631 = vshrl.u32 %v1630, 7
        %v1632 = vsub.s32 0, %v1631
        %v1633 = vrot.slane %v1577, %v1632
        %vm1635 = vcmask 64512
        %v1636 = vsel %vm1635, %v685, 0
        %v1638 = vsel %vm1635, %v686, 0
        %vm1640 = vcmask 1043456
        %v1642 = vsel %vm1640, %v1576, 0
        %1644 = vmatprep.subr.bf16.mxu0 0
        %1645 = vmatpush1.bf16.msra.mxu0 %v1642
        %1646 = vmatprep.subr.bf16.mxu0 0
        %1647 = vmatpush1.bf16.msra.mxu0 0
        %1648 = vmatprep.subr.bf16.mxu0 0
        %1649 = vmatpush1.bf16.msra.mxu0 0
        %1650 = vmatprep.subr.bf16.mxu0 0
        %1651 = vmatpush1.bf16.msra.mxu0 0
        %1652 = vmatprep.subr.bf16.mxu0 0
        %1653 = vmatpush1.bf16.msra.mxu0 0
        %1654 = vmatprep.subr.bf16.mxu0 0
        %1655 = vmatpush1.bf16.msra.mxu0 0
        %1656 = vmatprep.subr.bf16.mxu0 0
        %1657 = vmatpush1.bf16.msra.mxu0 0
        %1658 = vmatprep.subr.bf16.mxu0 0
        %1659 = vmatpush1.bf16.msra.mxu0 0
        %1660 = vmatprep.subr.bf16.mxu0 0
        %1661 = vmatpush1.bf16.msra.mxu0 0
        %1662 = vmatprep.subr.bf16.mxu0 0
        %1663 = vmatpush1.bf16.msra.mxu0 0
        %1664 = vmatprep.subr.bf16.mxu0 0
        %1665 = vmatpush1.bf16.msra.mxu0 0
        %1666 = vmatprep.subr.bf16.mxu0 0
        %1667 = vmatpush1.bf16.msra.mxu0 0
        %1668 = vmatprep.subr.bf16.mxu0 0
        %1669 = vmatpush1.bf16.msra.mxu0 0
        %1670 = vmatprep.subr.bf16.mxu0 0
        %1671 = vmatpush1.bf16.msra.mxu0 0
        %1672 = vmatprep.subr.bf16.mxu0 0
        %1673 = vmatpush1.bf16.msra.mxu0 0
        %1674 = vmatprep.subr.bf16.mxu0 0
        %1675 = vmatpush1.bf16.msra.mxu0 0
        %1676 = vmatprep.mubr.bf16.mxu0 0
        %1677 = vmatmul.mubr.bf16.gmra.mrb[0].mxu0 %v1636
        %v1678 = vpop.f32.mrb[0].mxu0
        %v1679 = vadd.f32 %v1633, %v1678
        %v1680 = vpop.f32.mrb[0].mxu0
        %v1681 = vpop.f32.mrb[0].mxu0
        %v1682 = vadd.f32 %v1633, %v1681
        %v1683 = vpop.f32.mrb[0].mxu0
        %1684 = vmatprep.mubr.bf16.mxu0 0
        %1685 = vmatmul.mubr.bf16.gmra.mrb[0].mxu0 %v1638
        %v1686 = vpop.f32.mrb[0].mxu0
        %v1687 = vadd.f32 %v1633, %v1686
        %v1688 = vpop.f32.mrb[0].mxu0
        %v1689 = vpop.f32.mrb[0].mxu0
        %v1690 = vadd.f32 %v1633, %v1689
        %v1691 = vpop.f32.mrb[0].mxu0
        %1692 = vdwg.mxu0
        %v1693 = vmul.f32 %v1679, 0.01
        %v1694 = vmul.f32 %v1682, 0.01
        %v1695 = vmul.f32 %v1687, 0.01
        %v1696 = vmul.f32 %v1690, 0.01
        %v1697 = vmax.f32 %v1679, %v1693
        %v1698 = vmax.f32 %v1682, %v1694
        %v1699 = vmax.f32 %v1687, %v1695
        %v1700 = vmax.f32 %v1690, %v1696
        %v1701 = vpack.c.bf16 %v1698, %v1697
        %v1702 = vpack.c.bf16 %v1700, %v1699
        %v1704 = vlaneseq
        %v1705 = vshrl.u32 %v1704, 7
        %v1706 = vsub.s32 0, %v1705
        %v1707 = vrot.slane %v1610, %v1706
        %v1725 = vunpack.c.l.b16 %v1578
        %v1726 = vunpack.c.l.b16 %v1579
        %v1727 = vunpack.c.l.b16 %v1580
        %v1728 = vunpack.c.l.b16 %v1581
        %v1729 = vunpack.c.l.b16 %v1582
        %v1730 = vunpack.c.l.b16 %v1583
        %v1731 = vunpack.c.l.b16 %v1584
        %v1732 = vunpack.c.l.b16 %v1585
        %v1733 = vunpack.c.l.b16 %v1586
        %v1734 = vunpack.c.l.b16 %v1587
        %v1735 = vunpack.c.l.b16 %v1588
        %v1736 = vunpack.c.l.b16 %v1589
        %v1737 = vunpack.c.l.b16 %v1590
        %v1738 = vunpack.c.l.b16 %v1591
        %v1739 = vunpack.c.l.b16 %v1592
        %v1740 = vunpack.c.l.b16 %v1593
        %v1741 = vpack.c.b16 %v1726, %v1725
        %v1742 = vpack.c.b16 %v1728, %v1727
        %v1743 = vpack.c.b16 %v1730, %v1729
        %v1744 = vpack.c.b16 %v1732, %v1731
        %v1745 = vpack.c.b16 %v1734, %v1733
        %v1746 = vpack.c.b16 %v1736, %v1735
        %v1747 = vpack.c.b16 %v1738, %v1737
        %v1748 = vpack.c.b16 %v1740, %v1739
        %1757 = vmatprep.subr.bf16.mxu0 0
        %1758 = vmatpush1.bf16.msra.mxu0 %v1741
        %1759 = vmatprep.subr.bf16.mxu0 0
        %1760 = vmatpush1.bf16.msra.mxu0 %v1742
        %1761 = vmatprep.subr.bf16.mxu0 0
        %1762 = vmatpush1.bf16.msra.mxu0 %v1743
        %1763 = vmatprep.subr.bf16.mxu0 0
        %1764 = vmatpush1.bf16.msra.mxu0 %v1744
        %1765 = vmatprep.subr.bf16.mxu0 0
        %1766 = vmatpush1.bf16.msra.mxu0 %v1745
        %1767 = vmatprep.subr.bf16.mxu0 0
        %1768 = vmatpush1.bf16.msra.mxu0 %v1746
        %1769 = vmatprep.subr.bf16.mxu0 0
        %1770 = vmatpush1.bf16.msra.mxu0 %v1747
        %1771 = vmatprep.subr.bf16.mxu0 0
        %1772 = vmatpush1.bf16.msra.mxu0 %v1748
        %1773 = vmatprep.subr.bf16.mxu0 0
        %1774 = vmatpush1.bf16.msra.mxu0 0
        %1775 = vmatprep.subr.bf16.mxu0 0
        %1776 = vmatpush1.bf16.msra.mxu0 0
        %1777 = vmatprep.subr.bf16.mxu0 0
        %1778 = vmatpush1.bf16.msra.mxu0 0
        %1779 = vmatprep.subr.bf16.mxu0 0
        %1780 = vmatpush1.bf16.msra.mxu0 0
        %1781 = vmatprep.subr.bf16.mxu0 0
        %1782 = vmatpush1.bf16.msra.mxu0 0
        %1783 = vmatprep.subr.bf16.mxu0 0
        %1784 = vmatpush1.bf16.msra.mxu0 0
        %1785 = vmatprep.subr.bf16.mxu0 0
        %1786 = vmatpush1.bf16.msra.mxu0 0
        %1787 = vmatprep.subr.bf16.mxu0 0
        %1788 = vmatpush1.bf16.msra.mxu0 0
        %1789 = vmatprep.mubr.bf16.mxu0 0
        %1790 = vmatmul.mubr.bf16.gmra.mrb[0].mxu0 %v1701
        %v1791 = vpop.f32.mrb[0].mxu0
        %v1792 = vadd.f32 %v1707, %v1791
        %v1793 = vpop.f32.mrb[0].mxu0
        %v1794 = vpop.f32.mrb[0].mxu0
        %v1795 = vadd.f32 %v1707, %v1794
        %v1796 = vpop.f32.mrb[0].mxu0
        %1797 = vmatprep.mubr.bf16.mxu0 0
        %1798 = vmatmul.mubr.bf16.gmra.mrb[0].mxu0 %v1702
        %v1799 = vpop.f32.mrb[0].mxu0
        %v1800 = vadd.f32 %v1707, %v1799
        %v1801 = vpop.f32.mrb[0].mxu0
        %v1802 = vpop.f32.mrb[0].mxu0
        %v1803 = vadd.f32 %v1707, %v1802
        %v1804 = vpop.f32.mrb[0].mxu0
        %1805 = vdwg.mxu0
        %v1806 = vmul.f32 %v1792, 0.01
        %v1807 = vmul.f32 %v1795, 0.01
        %v1808 = vmul.f32 %v1800, 0.01
        %v1809 = vmul.f32 %v1803, 0.01
        %v1810 = vmax.f32 %v1792, %v1806
        %v1811 = vmax.f32 %v1795, %v1807
        %v1812 = vmax.f32 %v1800, %v1808
        %v1813 = vmax.f32 %v1803, %v1809
        %v1814 = vpack.c.bf16 %v1811, %v1810
        %v1815 = vpack.c.bf16 %v1813, %v1812
        %v1817 = vlaneseq
        %v1818 = vshrl.u32 %v1817, 7
        %v1819 = vsub.s32 0, %v1818
        %v1820 = vrot.slane %v1611, %v1819
        %v1838 = vunpack.c.l.b16 %v1594
        %v1839 = vunpack.c.l.b16 %v1595
        %v1840 = vunpack.c.l.b16 %v1596
        %v1841 = vunpack.c.l.b16 %v1597
        %v1842 = vunpack.c.l.b16 %v1598
        %v1843 = vunpack.c.l.b16 %v1599
        %v1844 = vunpack.c.l.b16 %v1600
        %v1845 = vunpack.c.l.b16 %v1601
        %v1846 = vunpack.c.l.b16 %v1602
        %v1847 = vunpack.c.l.b16 %v1603
        %v1848 = vunpack.c.l.b16 %v1604
        %v1849 = vunpack.c.l.b16 %v1605
        %v1850 = vunpack.c.l.b16 %v1606
        %v1851 = vunpack.c.l.b16 %v1607
        %v1852 = vunpack.c.l.b16 %v1608
        %v1853 = vunpack.c.l.b16 %v1609
        %v1854 = vpack.c.b16 %v1839, %v1838
        %v1855 = vpack.c.b16 %v1841, %v1840
        %v1856 = vpack.c.b16 %v1843, %v1842
        %v1857 = vpack.c.b16 %v1845, %v1844
        %v1858 = vpack.c.b16 %v1847, %v1846
        %v1859 = vpack.c.b16 %v1849, %v1848
        %v1860 = vpack.c.b16 %v1851, %v1850
        %v1861 = vpack.c.b16 %v1853, %v1852
        %1870 = vmatprep.subr.bf16.mxu0 0
        %1871 = vmatpush1.bf16.msra.mxu0 %v1854
        %1872 = vmatprep.subr.bf16.mxu0 0
        %1873 = vmatpush1.bf16.msra.mxu0 %v1855
        %1874 = vmatprep.subr.bf16.mxu0 0
        %1875 = vmatpush1.bf16.msra.mxu0 %v1856
        %1876 = vmatprep.subr.bf16.mxu0 0
        %1877 = vmatpush1.bf16.msra.mxu0 %v1857
        %1878 = vmatprep.subr.bf16.mxu0 0
        %1879 = vmatpush1.bf16.msra.mxu0 %v1858
        %1880 = vmatprep.subr.bf16.mxu0 0
        %1881 = vmatpush1.bf16.msra.mxu0 %v1859
        %1882 = vmatprep.subr.bf16.mxu0 0
        %1883 = vmatpush1.bf16.msra.mxu0 %v1860
        %1884 = vmatprep.subr.bf16.mxu0 0
        %1885 = vmatpush1.bf16.msra.mxu0 %v1861
        %1886 = vmatprep.subr.bf16.mxu0 0
        %1887 = vmatpush1.bf16.msra.mxu0 0
        %1888 = vmatprep.subr.bf16.mxu0 0
        %1889 = vmatpush1.bf16.msra.mxu0 0
        %1890 = vmatprep.subr.bf16.mxu0 0
        %1891 = vmatpush1.bf16.msra.mxu0 0
        %1892 = vmatprep.subr.bf16.mxu0 0
        %1893 = vmatpush1.bf16.msra.mxu0 0
        %1894 = vmatprep.subr.bf16.mxu0 0
        %1895 = vmatpush1.bf16.msra.mxu0 0
        %1896 = vmatprep.subr.bf16.mxu0 0
        %1897 = vmatpush1.bf16.msra.mxu0 0
        %1898 = vmatprep.subr.bf16.mxu0 0
        %1899 = vmatpush1.bf16.msra.mxu0 0
        %1900 = vmatprep.subr.bf16.mxu0 0
        %1901 = vmatpush1.bf16.msra.mxu0 0
        %1902 = vmatprep.mubr.bf16.mxu0 0
        %1903 = vmatmul.mubr.bf16.gmra.mrb[0].mxu0 %v1814
        %v1904 = vpop.f32.mrb[0].mxu0
        %v1905 = vadd.f32 %v1820, %v1904
        %v1906 = vpop.f32.mrb[0].mxu0
        %v1907 = vpop.f32.mrb[0].mxu0
        %v1908 = vadd.f32 %v1820, %v1907
        %v1909 = vpop.f32.mrb[0].mxu0
        %1910 = vmatprep.mubr.bf16.mxu0 0
        %1911 = vmatmul.mubr.bf16.gmra.mrb[0].mxu0 %v1815
        %v1912 = vpop.f32.mrb[0].mxu0
        %v1913 = vadd.f32 %v1820, %v1912
        %v1914 = vpop.f32.mrb[0].mxu0
        %v1915 = vpop.f32.mrb[0].mxu0
        %v1916 = vadd.f32 %v1820, %v1915
        %v1917 = vpop.f32.mrb[0].mxu0
        %1918 = vdwg.mxu0
        %v1919 = vmul.f32 %v1905, 0.01
        %v1920 = vmul.f32 %v1908, 0.01
        %v1921 = vmul.f32 %v1913, 0.01
        %v1922 = vmul.f32 %v1916, 0.01
        %v1923 = vmax.f32 %v1905, %v1919
        %v1924 = vmax.f32 %v1908, %v1920
        %v1925 = vmax.f32 %v1913, %v1921
        %v1926 = vmax.f32 %v1916, %v1922
        %v1927 = vpack.c.bf16 %v1924, %v1923
        %v1928 = vpack.c.bf16 %v1926, %v1925
        %v1930 = vlaneseq
        %v1931 = vshrl.u32 %v1930, 7
        %v1932 = vsub.s32 0, %v1931
        %v1933 = vrot.slane %v1628, %v1932
        %v1951 = vunpack.c.l.b16 %v1612
        %v1952 = vunpack.c.l.b16 %v1613
        %v1953 = vunpack.c.l.b16 %v1614
        %v1954 = vunpack.c.l.b16 %v1615
        %v1955 = vunpack.c.l.b16 %v1616
        %v1956 = vunpack.c.l.b16 %v1617
        %v1957 = vunpack.c.l.b16 %v1618
        %v1958 = vunpack.c.l.b16 %v1619
        %v1959 = vunpack.c.l.b16 %v1620
        %v1960 = vunpack.c.l.b16 %v1621
        %v1961 = vunpack.c.l.b16 %v1622
        %v1962 = vunpack.c.l.b16 %v1623
        %v1963 = vunpack.c.l.b16 %v1624
        %v1964 = vunpack.c.l.b16 %v1625
        %v1965 = vunpack.c.l.b16 %v1626
        %v1966 = vunpack.c.l.b16 %v1627
        %v1967 = vpack.c.b16 %v1952, %v1951
        %v1968 = vpack.c.b16 %v1954, %v1953
        %v1969 = vpack.c.b16 %v1956, %v1955
        %v1970 = vpack.c.b16 %v1958, %v1957
        %v1971 = vpack.c.b16 %v1960, %v1959
        %v1972 = vpack.c.b16 %v1962, %v1961
        %v1973 = vpack.c.b16 %v1964, %v1963
        %v1974 = vpack.c.b16 %v1966, %v1965
        %1983 = vmatprep.subr.bf16.mxu0 0
        %1984 = vmatpush1.bf16.msra.mxu0 %v1967
        %1985 = vmatprep.subr.bf16.mxu0 0
        %1986 = vmatpush1.bf16.msra.mxu0 %v1968
        %1987 = vmatprep.subr.bf16.mxu0 0
        %1988 = vmatpush1.bf16.msra.mxu0 %v1969
        %1989 = vmatprep.subr.bf16.mxu0 0
        %1990 = vmatpush1.bf16.msra.mxu0 %v1970
        %1991 = vmatprep.subr.bf16.mxu0 0
        %1992 = vmatpush1.bf16.msra.mxu0 %v1971
        %1993 = vmatprep.subr.bf16.mxu0 0
        %1994 = vmatpush1.bf16.msra.mxu0 %v1972
        %1995 = vmatprep.subr.bf16.mxu0 0
        %1996 = vmatpush1.bf16.msra.mxu0 %v1973
        %1997 = vmatprep.subr.bf16.mxu0 0
        %1998 = vmatpush1.bf16.msra.mxu0 %v1974
        %1999 = vmatprep.subr.bf16.mxu0 0
        %2000 = vmatpush1.bf16.msra.mxu0 0
        %2001 = vmatprep.subr.bf16.mxu0 0
        %2002 = vmatpush1.bf16.msra.mxu0 0
        %2003 = vmatprep.subr.bf16.mxu0 0
        %2004 = vmatpush1.bf16.msra.mxu0 0
        %2005 = vmatprep.subr.bf16.mxu0 0
        %2006 = vmatpush1.bf16.msra.mxu0 0
        %2007 = vmatprep.subr.bf16.mxu0 0
        %2008 = vmatpush1.bf16.msra.mxu0 0
        %2009 = vmatprep.subr.bf16.mxu0 0
        %2010 = vmatpush1.bf16.msra.mxu0 0
        %2011 = vmatprep.subr.bf16.mxu0 0
        %2012 = vmatpush1.bf16.msra.mxu0 0
        %2013 = vmatprep.subr.bf16.mxu0 0
        %2014 = vmatpush1.bf16.msra.mxu0 0
        %2015 = vmatprep.mubr.bf16.mxu0 0
        %2016 = vmatmul.mubr.bf16.gmra.mrb[0].mxu0 %v1927
        %v2017 = vpop.f32.mrb[0].mxu0
        %v2018 = vadd.f32 %v1933, %v2017
        %v2019 = vpop.f32.mrb[0].mxu0
        %v2020 = vpop.f32.mrb[0].mxu0
        %v2021 = vadd.f32 %v1933, %v2020
        %v2022 = vpop.f32.mrb[0].mxu0
        %2023 = vmatprep.mubr.bf16.mxu0 0
        %2024 = vmatmul.mubr.bf16.gmra.mrb[0].mxu0 %v1928
        %v2025 = vpop.f32.mrb[0].mxu0
        %v2026 = vadd.f32 %v1933, %v2025
        %v2027 = vpop.f32.mrb[0].mxu0
        %v2028 = vpop.f32.mrb[0].mxu0
        %v2029 = vadd.f32 %v1933, %v2028
        %v2030 = vpop.f32.mrb[0].mxu0
        %2031 = vdwg.mxu0
        %v2032 = vtanh.pop %v2018
        %v2033 = vtanh.pop %v2021
        %v2034 = vtanh.pop %v2026
        %v2035 = vtanh.pop %v2029
        %v2036 = vmul.f32 %v2032, 1.442695
        %v2037 = vpow.pop %v2036
        %v2038 = vmul.f32 %v2033, 1.442695
        %v2039 = vpow.pop %v2038
        %v2040 = vmul.f32 %v2034, 1.442695
        %v2041 = vpow.pop %v2040
        %v2042 = vmul.f32 %v2035, 1.442695
        %v2043 = vpow.pop %v2042
        %2048 = vrot.lane.b32.xlu0 %v2037, 8
        %v2049 = vpop.permute.xlu0 %2048
        %2050 = vrot.lane.b32.xlu0 %v2039, 8
        %v2051 = vpop.permute.xlu0 %2050
        %2052 = vrot.lane.b32.xlu0 %v2041, 8
        %v2053 = vpop.permute.xlu0 %2052
        %2054 = vrot.lane.b32.xlu0 %v2043, 8
        %v2055 = vpop.permute.xlu0 %2054
        %v2060 = vmul.f32 %v617, %v2049
        %v2061 = vmul.f32 %v618, %v2051
        %v2062 = vmul.f32 %v619, %v2053
        %v2063 = vmul.f32 %v620, %v2055
        %s2064 = scalar_lea.vmem %s2, 8
        %v2065 = vld [vmem:[%s2064] sm:$0xf]
        %s2066 = scalar_lea.vmem [#allocation2], 2
        %v2067 = vld [vmem:[%s2066] sm:$0x1]
        %s2068 = scalar_lea.vmem %s4, 256
        %v2069 = vld [vmem:[%s2068] sm:$0xf]
        %v2070 = vld [vmem:[%s2068 + $0x4] sm:$0xf]
        %v2071 = vld [vmem:[%s2068 + $0x8] sm:$0xf]
        %v2072 = vld [vmem:[%s2068 + $0xc] sm:$0xf]
        %v2073 = vld [vmem:[%s2068 + $0x10] sm:$0xf]
        %v2074 = vld [vmem:[%s2068 + $0x14] sm:$0xf]
        %v2075 = vld [vmem:[%s2068 + $0x18] sm:$0xf]
        %v2076 = vld [vmem:[%s2068 + $0x1c] sm:$0xf]
        %v2077 = vld [vmem:[%s2068 + $0x20] sm:$0xf]
        %v2078 = vld [vmem:[%s2068 + $0x24] sm:$0xf]
        %v2079 = vld [vmem:[%s2068 + $0x28] sm:$0xf]
        %v2080 = vld [vmem:[%s2068 + $0x2c] sm:$0xf]
        %v2081 = vld [vmem:[%s2068 + $0x30] sm:$0xf]
        %v2082 = vld [vmem:[%s2068 + $0x34] sm:$0xf]
        %v2083 = vld [vmem:[%s2068 + $0x38] sm:$0xf]
        %v2084 = vld [vmem:[%s2068 + $0x3c] sm:$0xf]
        %v2085 = vld [vmem:[%s2068 + $0x40] sm:$0xf]
        %v2086 = vld [vmem:[%s2068 + $0x44] sm:$0xf]
        %v2087 = vld [vmem:[%s2068 + $0x48] sm:$0xf]
        %v2088 = vld [vmem:[%s2068 + $0x4c] sm:$0xf]
        %v2089 = vld [vmem:[%s2068 + $0x50] sm:$0xf]
        %v2090 = vld [vmem:[%s2068 + $0x54] sm:$0xf]
        %v2091 = vld [vmem:[%s2068 + $0x58] sm:$0xf]
        %v2092 = vld [vmem:[%s2068 + $0x5c] sm:$0xf]
        %v2093 = vld [vmem:[%s2068 + $0x60] sm:$0xf]
        %v2094 = vld [vmem:[%s2068 + $0x64] sm:$0xf]
        %v2095 = vld [vmem:[%s2068 + $0x68] sm:$0xf]
        %v2096 = vld [vmem:[%s2068 + $0x6c] sm:$0xf]
        %v2097 = vld [vmem:[%s2068 + $0x70] sm:$0xf]
        %v2098 = vld [vmem:[%s2068 + $0x74] sm:$0xf]
        %v2099 = vld [vmem:[%s2068 + $0x78] sm:$0xf]
        %v2100 = vld [vmem:[%s2068 + $0x7c] sm:$0xf]
        %s2101 = scalar_lea.vmem %s5, 4
        %v2102 = vld [vmem:[%s2101] sm:$0x1]
        %v2103 = vld [vmem:[%s2101 + $0x1] sm:$0x1]
        %s2104 = scalar_lea.vmem %s6, 128
        %v2105 = vld [vmem:[%s2104] sm:$0xf]
        %v2106 = vld [vmem:[%s2104 + $0x4] sm:$0xf]
        %v2107 = vld [vmem:[%s2104 + $0x8] sm:$0xf]
        %v2108 = vld [vmem:[%s2104 + $0xc] sm:$0xf]
        %v2109 = vld [vmem:[%s2104 + $0x10] sm:$0xf]
        %v2110 = vld [vmem:[%s2104 + $0x14] sm:$0xf]
        %v2111 = vld [vmem:[%s2104 + $0x18] sm:$0xf]
        %v2112 = vld [vmem:[%s2104 + $0x1c] sm:$0xf]
        %v2113 = vld [vmem:[%s2104 + $0x20] sm:$0xf]
        %v2114 = vld [vmem:[%s2104 + $0x24] sm:$0xf]
        %v2115 = vld [vmem:[%s2104 + $0x28] sm:$0xf]
        %v2116 = vld [vmem:[%s2104 + $0x2c] sm:$0xf]
        %v2117 = vld [vmem:[%s2104 + $0x30] sm:$0xf]
        %v2118 = vld [vmem:[%s2104 + $0x34] sm:$0xf]
        %v2119 = vld [vmem:[%s2104 + $0x38] sm:$0xf]
        %v2120 = vld [vmem:[%s2104 + $0x3c] sm:$0xf]
        %s2121 = scalar_lea.vmem [#allocation5], 2
        %v2122 = vld [vmem:[%s2121] sm:$0x1]
        %v2124 = vlaneseq
        %v2125 = vshrl.u32 %v2124, 7
        %v2126 = vsub.s32 0, %v2125
        %v2127 = vrot.slane %v2067, %v2126
        %v2130 = vsel %vm1640, %v2065, 0
        %2132 = vmatprep.subr.bf16.mxu0 0
        %2133 = vmatpush1.bf16.msra.mxu0 %v2130
        %2134 = vmatprep.subr.bf16.mxu0 0
        %2135 = vmatpush1.bf16.msra.mxu0 0
        %2136 = vmatprep.subr.bf16.mxu0 0
        %2137 = vmatpush1.bf16.msra.mxu0 0
        %2138 = vmatprep.subr.bf16.mxu0 0
        %2139 = vmatpush1.bf16.msra.mxu0 0
        %2140 = vmatprep.subr.bf16.mxu0 0
        %2141 = vmatpush1.bf16.msra.mxu0 0
        %2142 = vmatprep.subr.bf16.mxu0 0
        %2143 = vmatpush1.bf16.msra.mxu0 0
        %2144 = vmatprep.subr.bf16.mxu0 0
        %2145 = vmatpush1.bf16.msra.mxu0 0
        %2146 = vmatprep.subr.bf16.mxu0 0
        %2147 = vmatpush1.bf16.msra.mxu0 0
        %2148 = vmatprep.subr.bf16.mxu0 0
        %2149 = vmatpush1.bf16.msra.mxu0 0
        %2150 = vmatprep.subr.bf16.mxu0 0
        %2151 = vmatpush1.bf16.msra.mxu0 0
        %2152 = vmatprep.subr.bf16.mxu0 0
        %2153 = vmatpush1.bf16.msra.mxu0 0
        %2154 = vmatprep.subr.bf16.mxu0 0
        %2155 = vmatpush1.bf16.msra.mxu0 0
        %2156 = vmatprep.subr.bf16.mxu0 0
        %2157 = vmatpush1.bf16.msra.mxu0 0
        %2158 = vmatprep.subr.bf16.mxu0 0
        %2159 = vmatpush1.bf16.msra.mxu0 0
        %2160 = vmatprep.subr.bf16.mxu0 0
        %2161 = vmatpush1.bf16.msra.mxu0 0
        %2162 = vmatprep.subr.bf16.mxu0 0
        %2163 = vmatpush1.bf16.msra.mxu0 0
        %2164 = vmatprep.mubr.bf16.mxu0 0
        %2165 = vmatmul.mubr.bf16.gmra.mrb[0].mxu0 %v1636
        %v2166 = vpop.f32.mrb[0].mxu0
        %v2167 = vadd.f32 %v2127, %v2166
        %v2168 = vpop.f32.mrb[0].mxu0
        %v2169 = vpop.f32.mrb[0].mxu0
        %v2170 = vadd.f32 %v2127, %v2169
        %v2171 = vpop.f32.mrb[0].mxu0
        %2172 = vmatprep.mubr.bf16.mxu0 0
        %2173 = vmatmul.mubr.bf16.gmra.mrb[0].mxu0 %v1638
        %v2174 = vpop.f32.mrb[0].mxu0
        %v2175 = vadd.f32 %v2127, %v2174
        %v2176 = vpop.f32.mrb[0].mxu0
        %v2177 = vpop.f32.mrb[0].mxu0
        %v2178 = vadd.f32 %v2127, %v2177
        %v2179 = vpop.f32.mrb[0].mxu0
        %2180 = vdwg.mxu0
        %v2181 = vmul.f32 %v2167, 0.01
        %v2182 = vmul.f32 %v2170, 0.01
        %v2183 = vmul.f32 %v2175, 0.01
        %v2184 = vmul.f32 %v2178, 0.01
        %v2185 = vmax.f32 %v2167, %v2181
        %v2186 = vmax.f32 %v2170, %v2182
        %v2187 = vmax.f32 %v2175, %v2183
        %v2188 = vmax.f32 %v2178, %v2184
        %v2189 = vpack.c.bf16 %v2186, %v2185
        %v2190 = vpack.c.bf16 %v2188, %v2187
        %v2192 = vlaneseq
        %v2193 = vshrl.u32 %v2192, 7
        %v2194 = vsub.s32 0, %v2193
        %v2195 = vrot.slane %v2102, %v2194
        %v2213 = vunpack.c.l.b16 %v2069
        %v2214 = vunpack.c.l.b16 %v2070
        %v2215 = vunpack.c.l.b16 %v2071
        %v2216 = vunpack.c.l.b16 %v2072
        %v2217 = vunpack.c.l.b16 %v2073
        %v2218 = vunpack.c.l.b16 %v2074
        %v2219 = vunpack.c.l.b16 %v2075
        %v2220 = vunpack.c.l.b16 %v2076
        %v2221 = vunpack.c.l.b16 %v2077
        %v2222 = vunpack.c.l.b16 %v2078
        %v2223 = vunpack.c.l.b16 %v2079
        %v2224 = vunpack.c.l.b16 %v2080
        %v2225 = vunpack.c.l.b16 %v2081
        %v2226 = vunpack.c.l.b16 %v2082
        %v2227 = vunpack.c.l.b16 %v2083
        %v2228 = vunpack.c.l.b16 %v2084
        %v2229 = vpack.c.b16 %v2214, %v2213
        %v2230 = vpack.c.b16 %v2216, %v2215
        %v2231 = vpack.c.b16 %v2218, %v2217
        %v2232 = vpack.c.b16 %v2220, %v2219
        %v2233 = vpack.c.b16 %v2222, %v2221
        %v2234 = vpack.c.b16 %v2224, %v2223
        %v2235 = vpack.c.b16 %v2226, %v2225
        %v2236 = vpack.c.b16 %v2228, %v2227
        %2245 = vmatprep.subr.bf16.mxu0 0
        %2246 = vmatpush1.bf16.msra.mxu0 %v2229
        %2247 = vmatprep.subr.bf16.mxu0 0
        %2248 = vmatpush1.bf16.msra.mxu0 %v2230
        %2249 = vmatprep.subr.bf16.mxu0 0
        %2250 = vmatpush1.bf16.msra.mxu0 %v2231
        %2251 = vmatprep.subr.bf16.mxu0 0
        %2252 = vmatpush1.bf16.msra.mxu0 %v2232
        %2253 = vmatprep.subr.bf16.mxu0 0
        %2254 = vmatpush1.bf16.msra.mxu0 %v2233
        %2255 = vmatprep.subr.bf16.mxu0 0
        %2256 = vmatpush1.bf16.msra.mxu0 %v2234
        %2257 = vmatprep.subr.bf16.mxu0 0
        %2258 = vmatpush1.bf16.msra.mxu0 %v2235
        %2259 = vmatprep.subr.bf16.mxu0 0
        %2260 = vmatpush1.bf16.msra.mxu0 %v2236
        %2261 = vmatprep.subr.bf16.mxu0 0
        %2262 = vmatpush1.bf16.msra.mxu0 0
        %2263 = vmatprep.subr.bf16.mxu0 0
        %2264 = vmatpush1.bf16.msra.mxu0 0
        %2265 = vmatprep.subr.bf16.mxu0 0
        %2266 = vmatpush1.bf16.msra.mxu0 0
        %2267 = vmatprep.subr.bf16.mxu0 0
        %2268 = vmatpush1.bf16.msra.mxu0 0
        %2269 = vmatprep.subr.bf16.mxu0 0
        %2270 = vmatpush1.bf16.msra.mxu0 0
        %2271 = vmatprep.subr.bf16.mxu0 0
        %2272 = vmatpush1.bf16.msra.mxu0 0
        %2273 = vmatprep.subr.bf16.mxu0 0
        %2274 = vmatpush1.bf16.msra.mxu0 0
        %2275 = vmatprep.subr.bf16.mxu0 0
        %2276 = vmatpush1.bf16.msra.mxu0 0
        %2277 = vmatprep.mubr.bf16.mxu0 0
        %2278 = vmatmul.mubr.bf16.gmra.mrb[0].mxu0 %v2189
        %v2279 = vpop.f32.mrb[0].mxu0
        %v2280 = vadd.f32 %v2195, %v2279
        %v2281 = vpop.f32.mrb[0].mxu0
        %v2282 = vpop.f32.mrb[0].mxu0
        %v2283 = vadd.f32 %v2195, %v2282
        %v2284 = vpop.f32.mrb[0].mxu0
        %2285 = vmatprep.mubr.bf16.mxu0 0
        %2286 = vmatmul.mubr.bf16.gmra.mrb[0].mxu0 %v2190
        %v2287 = vpop.f32.mrb[0].mxu0
        %v2288 = vadd.f32 %v2195, %v2287
        %v2289 = vpop.f32.mrb[0].mxu0
        %v2290 = vpop.f32.mrb[0].mxu0
        %v2291 = vadd.f32 %v2195, %v2290
        %v2292 = vpop.f32.mrb[0].mxu0
        %2293 = vdwg.mxu0
        %v2294 = vmul.f32 %v2280, 0.01
        %v2295 = vmul.f32 %v2283, 0.01
        %v2296 = vmul.f32 %v2288, 0.01
        %v2297 = vmul.f32 %v2291, 0.01
        %v2298 = vmax.f32 %v2280, %v2294
        %v2299 = vmax.f32 %v2283, %v2295
        %v2300 = vmax.f32 %v2288, %v2296
        %v2301 = vmax.f32 %v2291, %v2297
        %v2302 = vpack.c.bf16 %v2299, %v2298
        %v2303 = vpack.c.bf16 %v2301, %v2300
        %v2305 = vlaneseq
        %v2306 = vshrl.u32 %v2305, 7
        %v2307 = vsub.s32 0, %v2306
        %v2308 = vrot.slane %v2103, %v2307
        %v2326 = vunpack.c.l.b16 %v2085
        %v2327 = vunpack.c.l.b16 %v2086
        %v2328 = vunpack.c.l.b16 %v2087
        %v2329 = vunpack.c.l.b16 %v2088
        %v2330 = vunpack.c.l.b16 %v2089
        %v2331 = vunpack.c.l.b16 %v2090
        %v2332 = vunpack.c.l.b16 %v2091
        %v2333 = vunpack.c.l.b16 %v2092
        %v2334 = vunpack.c.l.b16 %v2093
        %v2335 = vunpack.c.l.b16 %v2094
        %v2336 = vunpack.c.l.b16 %v2095
        %v2337 = vunpack.c.l.b16 %v2096
        %v2338 = vunpack.c.l.b16 %v2097
        %v2339 = vunpack.c.l.b16 %v2098
        %v2340 = vunpack.c.l.b16 %v2099
        %v2341 = vunpack.c.l.b16 %v2100
        %v2342 = vpack.c.b16 %v2327, %v2326
        %v2343 = vpack.c.b16 %v2329, %v2328
        %v2344 = vpack.c.b16 %v2331, %v2330
        %v2345 = vpack.c.b16 %v2333, %v2332
        %v2346 = vpack.c.b16 %v2335, %v2334
        %v2347 = vpack.c.b16 %v2337, %v2336
        %v2348 = vpack.c.b16 %v2339, %v2338
        %v2349 = vpack.c.b16 %v2341, %v2340
        %2358 = vmatprep.subr.bf16.mxu0 0
        %2359 = vmatpush1.bf16.msra.mxu0 %v2342
        %2360 = vmatprep.subr.bf16.mxu0 0
        %2361 = vmatpush1.bf16.msra.mxu0 %v2343
        %2362 = vmatprep.subr.bf16.mxu0 0
        %2363 = vmatpush1.bf16.msra.mxu0 %v2344
        %2364 = vmatprep.subr.bf16.mxu0 0
        %2365 = vmatpush1.bf16.msra.mxu0 %v2345
        %2366 = vmatprep.subr.bf16.mxu0 0
        %2367 = vmatpush1.bf16.msra.mxu0 %v2346
        %2368 = vmatprep.subr.bf16.mxu0 0
        %2369 = vmatpush1.bf16.msra.mxu0 %v2347
        %2370 = vmatprep.subr.bf16.mxu0 0
        %2371 = vmatpush1.bf16.msra.mxu0 %v2348
        %2372 = vmatprep.subr.bf16.mxu0 0
        %2373 = vmatpush1.bf16.msra.mxu0 %v2349
        %2374 = vmatprep.subr.bf16.mxu0 0
        %2375 = vmatpush1.bf16.msra.mxu0 0
        %2376 = vmatprep.subr.bf16.mxu0 0
        %2377 = vmatpush1.bf16.msra.mxu0 0
        %2378 = vmatprep.subr.bf16.mxu0 0
        %2379 = vmatpush1.bf16.msra.mxu0 0
        %2380 = vmatprep.subr.bf16.mxu0 0
        %2381 = vmatpush1.bf16.msra.mxu0 0
        %2382 = vmatprep.subr.bf16.mxu0 0
        %2383 = vmatpush1.bf16.msra.mxu0 0
        %2384 = vmatprep.subr.bf16.mxu0 0
        %2385 = vmatpush1.bf16.msra.mxu0 0
        %2386 = vmatprep.subr.bf16.mxu0 0
        %2387 = vmatpush1.bf16.msra.mxu0 0
        %2388 = vmatprep.subr.bf16.mxu0 0
        %2389 = vmatpush1.bf16.msra.mxu0 0
        %2390 = vmatprep.mubr.bf16.mxu0 0
        %2391 = vmatmul.mubr.bf16.gmra.mrb[0].mxu0 %v2302
        %v2392 = vpop.f32.mrb[0].mxu0
        %v2393 = vadd.f32 %v2308, %v2392
        %v2394 = vpop.f32.mrb[0].mxu0
        %v2395 = vpop.f32.mrb[0].mxu0
        %v2396 = vadd.f32 %v2308, %v2395
        %v2397 = vpop.f32.mrb[0].mxu0
        %2398 = vmatprep.mubr.bf16.mxu0 0
        %2399 = vmatmul.mubr.bf16.gmra.mrb[0].mxu0 %v2303
        %v2400 = vpop.f32.mrb[0].mxu0
        %v2401 = vadd.f32 %v2308, %v2400
        %v2402 = vpop.f32.mrb[0].mxu0
        %v2403 = vpop.f32.mrb[0].mxu0
        %v2404 = vadd.f32 %v2308, %v2403
        %v2405 = vpop.f32.mrb[0].mxu0
        %2406 = vdwg.mxu0
        %v2407 = vmul.f32 %v2393, 0.01
        %v2408 = vmul.f32 %v2396, 0.01
        %v2409 = vmul.f32 %v2401, 0.01
        %v2410 = vmul.f32 %v2404, 0.01
        %v2411 = vmax.f32 %v2393, %v2407
        %v2412 = vmax.f32 %v2396, %v2408
        %v2413 = vmax.f32 %v2401, %v2409
        %v2414 = vmax.f32 %v2404, %v2410
        %v2415 = vpack.c.bf16 %v2412, %v2411
        %v2416 = vpack.c.bf16 %v2414, %v2413
        %v2418 = vlaneseq
        %v2419 = vshrl.u32 %v2418, 7
        %v2420 = vsub.s32 0, %v2419
        %v2421 = vrot.slane %v2122, %v2420
        %v2439 = vunpack.c.l.b16 %v2105
        %v2440 = vunpack.c.l.b16 %v2106
        %v2441 = vunpack.c.l.b16 %v2107
        %v2442 = vunpack.c.l.b16 %v2108
        %v2443 = vunpack.c.l.b16 %v2109
        %v2444 = vunpack.c.l.b16 %v2110
        %v2445 = vunpack.c.l.b16 %v2111
        %v2446 = vunpack.c.l.b16 %v2112
        %v2447 = vunpack.c.l.b16 %v2113
        %v2448 = vunpack.c.l.b16 %v2114
        %v2449 = vunpack.c.l.b16 %v2115
        %v2450 = vunpack.c.l.b16 %v2116
        %v2451 = vunpack.c.l.b16 %v2117
        %v2452 = vunpack.c.l.b16 %v2118
        %v2453 = vunpack.c.l.b16 %v2119
        %v2454 = vunpack.c.l.b16 %v2120
        %v2455 = vpack.c.b16 %v2440, %v2439
        %v2456 = vpack.c.b16 %v2442, %v2441
        %v2457 = vpack.c.b16 %v2444, %v2443
        %v2458 = vpack.c.b16 %v2446, %v2445
        %v2459 = vpack.c.b16 %v2448, %v2447
        %v2460 = vpack.c.b16 %v2450, %v2449
        %v2461 = vpack.c.b16 %v2452, %v2451
        %v2462 = vpack.c.b16 %v2454, %v2453
        %2471 = vmatprep.subr.bf16.mxu0 0
        %2472 = vmatpush1.bf16.msra.mxu0 %v2455
        %2473 = vmatprep.subr.bf16.mxu0 0
        %2474 = vmatpush1.bf16.msra.mxu0 %v2456
        %2475 = vmatprep.subr.bf16.mxu0 0
        %2476 = vmatpush1.bf16.msra.mxu0 %v2457
        %2477 = vmatprep.subr.bf16.mxu0 0
        %2478 = vmatpush1.bf16.msra.mxu0 %v2458
        %2479 = vmatprep.subr.bf16.mxu0 0
        %2480 = vmatpush1.bf16.msra.mxu0 %v2459
        %2481 = vmatprep.subr.bf16.mxu0 0
        %2482 = vmatpush1.bf16.msra.mxu0 %v2460
        %2483 = vmatprep.subr.bf16.mxu0 0
        %2484 = vmatpush1.bf16.msra.mxu0 %v2461
        %2485 = vmatprep.subr.bf16.mxu0 0
        %2486 = vmatpush1.bf16.msra.mxu0 %v2462
        %2487 = vmatprep.subr.bf16.mxu0 0
        %2488 = vmatpush1.bf16.msra.mxu0 0
        %2489 = vmatprep.subr.bf16.mxu0 0
        %2490 = vmatpush1.bf16.msra.mxu0 0
        %2491 = vmatprep.subr.bf16.mxu0 0
        %2492 = vmatpush1.bf16.msra.mxu0 0
        %2493 = vmatprep.subr.bf16.mxu0 0
        %2494 = vmatpush1.bf16.msra.mxu0 0
        %2495 = vmatprep.subr.bf16.mxu0 0
        %2496 = vmatpush1.bf16.msra.mxu0 0
        %2497 = vmatprep.subr.bf16.mxu0 0
        %2498 = vmatpush1.bf16.msra.mxu0 0
        %2499 = vmatprep.subr.bf16.mxu0 0
        %2500 = vmatpush1.bf16.msra.mxu0 0
        %2501 = vmatprep.subr.bf16.mxu0 0
        %2502 = vmatpush1.bf16.msra.mxu0 0
        %2503 = vmatprep.mubr.bf16.mxu0 0
        %2504 = vmatmul.mubr.bf16.gmra.mrb[0].mxu0 %v2415
        %v2505 = vpop.f32.mrb[0].mxu0
        %v2506 = vadd.f32 %v2421, %v2505
        %v2507 = vpop.f32.mrb[0].mxu0
        %v2508 = vpop.f32.mrb[0].mxu0
        %v2509 = vadd.f32 %v2421, %v2508
        %v2510 = vpop.f32.mrb[0].mxu0
        %2511 = vmatprep.mubr.bf16.mxu0 0
        %2512 = vmatmul.mubr.bf16.gmra.mrb[0].mxu0 %v2416
        %v2513 = vpop.f32.mrb[0].mxu0
        %v2514 = vadd.f32 %v2421, %v2513
        %v2515 = vpop.f32.mrb[0].mxu0
        %v2516 = vpop.f32.mrb[0].mxu0
        %v2517 = vadd.f32 %v2421, %v2516
        %v2518 = vpop.f32.mrb[0].mxu0
        %2519 = vdwg.mxu0
        %2524 = vrot.lane.b32.xlu0 %v2506, 8
        %v2525 = vpop.permute.xlu0 %2524
        %2526 = vrot.lane.b32.xlu0 %v2509, 8
        %v2527 = vpop.permute.xlu0 %2526
        %2528 = vrot.lane.b32.xlu0 %v2514, 8
        %v2529 = vpop.permute.xlu0 %2528
        %2530 = vrot.lane.b32.xlu0 %v2517, 8
        %v2531 = vpop.permute.xlu0 %2530
        %v2536 = vadd.f32 %v2060, %v2525
        %v2537 = vadd.f32 %v2061, %v2527
        %v2538 = vadd.f32 %v2062, %v2529
        %v2539 = vadd.f32 %v2063, %v2531
        %s2540 = scalar_lea.vmem %s2, 16
        %v2541 = vld [vmem:[%s2540] sm:$0xf]
        %s2542 = scalar_lea.vmem [#allocation2], 4
        %v2543 = vld [vmem:[%s2542] sm:$0x1]
        %s2544 = scalar_lea.vmem %s4, 512
        %v2545 = vld [vmem:[%s2544] sm:$0xf]
        %v2546 = vld [vmem:[%s2544 + $0x4] sm:$0xf]
        %v2547 = vld [vmem:[%s2544 + $0x8] sm:$0xf]
        %v2548 = vld [vmem:[%s2544 + $0xc] sm:$0xf]
        %v2549 = vld [vmem:[%s2544 + $0x10] sm:$0xf]
        %v2550 = vld [vmem:[%s2544 + $0x14] sm:$0xf]
        %v2551 = vld [vmem:[%s2544 + $0x18] sm:$0xf]
        %v2552 = vld [vmem:[%s2544 + $0x1c] sm:$0xf]
        %v2553 = vld [vmem:[%s2544 + $0x20] sm:$0xf]
        %v2554 = vld [vmem:[%s2544 + $0x24] sm:$0xf]
        %v2555 = vld [vmem:[%s2544 + $0x28] sm:$0xf]
        %v2556 = vld [vmem:[%s2544 + $0x2c] sm:$0xf]
        %v2557 = vld [vmem:[%s2544 + $0x30] sm:$0xf]
        %v2558 = vld [vmem:[%s2544 + $0x34] sm:$0xf]
        %v2559 = vld [vmem:[%s2544 + $0x38] sm:$0xf]
        %v2560 = vld [vmem:[%s2544 + $0x3c] sm:$0xf]
        %v2561 = vld [vmem:[%s2544 + $0x40] sm:$0xf]
        %v2562 = vld [vmem:[%s2544 + $0x44] sm:$0xf]
        %v2563 = vld [vmem:[%s2544 + $0x48] sm:$0xf]
        %v2564 = vld [vmem:[%s2544 + $0x4c] sm:$0xf]
        %v2565 = vld [vmem:[%s2544 + $0x50] sm:$0xf]
        %v2566 = vld [vmem:[%s2544 + $0x54] sm:$0xf]
        %v2567 = vld [vmem:[%s2544 + $0x58] sm:$0xf]
        %v2568 = vld [vmem:[%s2544 + $0x5c] sm:$0xf]
        %v2569 = vld [vmem:[%s2544 + $0x60] sm:$0xf]
        %v2570 = vld [vmem:[%s2544 + $0x64] sm:$0xf]
        %v2571 = vld [vmem:[%s2544 + $0x68] sm:$0xf]
        %v2572 = vld [vmem:[%s2544 + $0x6c] sm:$0xf]
        %v2573 = vld [vmem:[%s2544 + $0x70] sm:$0xf]
        %v2574 = vld [vmem:[%s2544 + $0x74] sm:$0xf]
        %v2575 = vld [vmem:[%s2544 + $0x78] sm:$0xf]
        %v2576 = vld [vmem:[%s2544 + $0x7c] sm:$0xf]
        %s2577 = scalar_lea.vmem %s5, 8
        %v2578 = vld [vmem:[%s2577] sm:$0x1]
        %v2579 = vld [vmem:[%s2577 + $0x1] sm:$0x1]
        %s2580 = scalar_lea.vmem %s6, 256
        %v2581 = vld [vmem:[%s2580] sm:$0xf]
        %v2582 = vld [vmem:[%s2580 + $0x4] sm:$0xf]
        %v2583 = vld [vmem:[%s2580 + $0x8] sm:$0xf]
        %v2584 = vld [vmem:[%s2580 + $0xc] sm:$0xf]
        %v2585 = vld [vmem:[%s2580 + $0x10] sm:$0xf]
        %v2586 = vld [vmem:[%s2580 + $0x14] sm:$0xf]
        %v2587 = vld [vmem:[%s2580 + $0x18] sm:$0xf]
        %v2588 = vld [vmem:[%s2580 + $0x1c] sm:$0xf]
        %v2589 = vld [vmem:[%s2580 + $0x20] sm:$0xf]
        %v2590 = vld [vmem:[%s2580 + $0x24] sm:$0xf]
        %v2591 = vld [vmem:[%s2580 + $0x28] sm:$0xf]
        %v2592 = vld [vmem:[%s2580 + $0x2c] sm:$0xf]
        %v2593 = vld [vmem:[%s2580 + $0x30] sm:$0xf]
        %v2594 = vld [vmem:[%s2580 + $0x34] sm:$0xf]
        %v2595 = vld [vmem:[%s2580 + $0x38] sm:$0xf]
        %v2596 = vld [vmem:[%s2580 + $0x3c] sm:$0xf]
        %s2597 = scalar_lea.vmem [#allocation5], 4
        %v2598 = vld [vmem:[%s2597] sm:$0x1]
        %v2600 = vlaneseq
        %v2601 = vshrl.u32 %v2600, 7
        %v2602 = vsub.s32 0, %v2601
        %v2603 = vrot.slane %v2543, %v2602
        %v2606 = vsel %vm1640, %v2541, 0
        %2608 = vmatprep.subr.bf16.mxu0 0
        %2609 = vmatpush1.bf16.msra.mxu0 %v2606
        %2610 = vmatprep.subr.bf16.mxu0 0
        %2611 = vmatpush1.bf16.msra.mxu0 0
        %2612 = vmatprep.subr.bf16.mxu0 0
        %2613 = vmatpush1.bf16.msra.mxu0 0
        %2614 = vmatprep.subr.bf16.mxu0 0
        %2615 = vmatpush1.bf16.msra.mxu0 0
        %2616 = vmatprep.subr.bf16.mxu0 0
        %2617 = vmatpush1.bf16.msra.mxu0 0
        %2618 = vmatprep.subr.bf16.mxu0 0
        %2619 = vmatpush1.bf16.msra.mxu0 0
        %2620 = vmatprep.subr.bf16.mxu0 0
        %2621 = vmatpush1.bf16.msra.mxu0 0
        %2622 = vmatprep.subr.bf16.mxu0 0
        %2623 = vmatpush1.bf16.msra.mxu0 0
        %2624 = vmatprep.subr.bf16.mxu0 0
        %2625 = vmatpush1.bf16.msra.mxu0 0
        %2626 = vmatprep.subr.bf16.mxu0 0
        %2627 = vmatpush1.bf16.msra.mxu0 0
        %2628 = vmatprep.subr.bf16.mxu0 0
        %2629 = vmatpush1.bf16.msra.mxu0 0
        %2630 = vmatprep.subr.bf16.mxu0 0
        %2631 = vmatpush1.bf16.msra.mxu0 0
        %2632 = vmatprep.subr.bf16.mxu0 0
        %2633 = vmatpush1.bf16.msra.mxu0 0
        %2634 = vmatprep.subr.bf16.mxu0 0
        %2635 = vmatpush1.bf16.msra.mxu0 0
        %2636 = vmatprep.subr.bf16.mxu0 0
        %2637 = vmatpush1.bf16.msra.mxu0 0
        %2638 = vmatprep.subr.bf16.mxu0 0
        %2639 = vmatpush1.bf16.msra.mxu0 0
        %2640 = vmatprep.mubr.bf16.mxu0 0
        %2641 = vmatmul.mubr.bf16.gmra.mrb[0].mxu0 %v1636
        %v2642 = vpop.f32.mrb[0].mxu0
        %v2643 = vadd.f32 %v2603, %v2642
        %v2644 = vpop.f32.mrb[0].mxu0
        %v2645 = vpop.f32.mrb[0].mxu0
        %v2646 = vadd.f32 %v2603, %v2645
        %v2647 = vpop.f32.mrb[0].mxu0
        %2648 = vmatprep.mubr.bf16.mxu0 0
        %2649 = vmatmul.mubr.bf16.gmra.mrb[0].mxu0 %v1638
        %v2650 = vpop.f32.mrb[0].mxu0
        %v2651 = vadd.f32 %v2603, %v2650
        %v2652 = vpop.f32.mrb[0].mxu0
        %v2653 = vpop.f32.mrb[0].mxu0
        %v2654 = vadd.f32 %v2603, %v2653
        %v2655 = vpop.f32.mrb[0].mxu0
        %2656 = vdwg.mxu0
        %v2657 = vmul.f32 %v2643, 0.01
        %v2658 = vmul.f32 %v2646, 0.01
        %v2659 = vmul.f32 %v2651, 0.01
        %v2660 = vmul.f32 %v2654, 0.01
        %v2661 = vmax.f32 %v2643, %v2657
        %v2662 = vmax.f32 %v2646, %v2658
        %v2663 = vmax.f32 %v2651, %v2659
        %v2664 = vmax.f32 %v2654, %v2660
        %v2665 = vpack.c.bf16 %v2662, %v2661
        %v2666 = vpack.c.bf16 %v2664, %v2663
        %v2668 = vlaneseq
        %v2669 = vshrl.u32 %v2668, 7
        %v2670 = vsub.s32 0, %v2669
        %v2671 = vrot.slane %v2578, %v2670
        %v2689 = vunpack.c.l.b16 %v2545
        %v2690 = vunpack.c.l.b16 %v2546
        %v2691 = vunpack.c.l.b16 %v2547
        %v2692 = vunpack.c.l.b16 %v2548
        %v2693 = vunpack.c.l.b16 %v2549
        %v2694 = vunpack.c.l.b16 %v2550
        %v2695 = vunpack.c.l.b16 %v2551
        %v2696 = vunpack.c.l.b16 %v2552
        %v2697 = vunpack.c.l.b16 %v2553
        %v2698 = vunpack.c.l.b16 %v2554
        %v2699 = vunpack.c.l.b16 %v2555
        %v2700 = vunpack.c.l.b16 %v2556
        %v2701 = vunpack.c.l.b16 %v2557
        %v2702 = vunpack.c.l.b16 %v2558
        %v2703 = vunpack.c.l.b16 %v2559
        %v2704 = vunpack.c.l.b16 %v2560
        %v2705 = vpack.c.b16 %v2690, %v2689
        %v2706 = vpack.c.b16 %v2692, %v2691
        %v2707 = vpack.c.b16 %v2694, %v2693
        %v2708 = vpack.c.b16 %v2696, %v2695
        %v2709 = vpack.c.b16 %v2698, %v2697
        %v2710 = vpack.c.b16 %v2700, %v2699
        %v2711 = vpack.c.b16 %v2702, %v2701
        %v2712 = vpack.c.b16 %v2704, %v2703
        %2721 = vmatprep.subr.bf16.mxu0 0
        %2722 = vmatpush1.bf16.msra.mxu0 %v2705
        %2723 = vmatprep.subr.bf16.mxu0 0
        %2724 = vmatpush1.bf16.msra.mxu0 %v2706
        %2725 = vmatprep.subr.bf16.mxu0 0
        %2726 = vmatpush1.bf16.msra.mxu0 %v2707
        %2727 = vmatprep.subr.bf16.mxu0 0
        %2728 = vmatpush1.bf16.msra.mxu0 %v2708
        %2729 = vmatprep.subr.bf16.mxu0 0
        %2730 = vmatpush1.bf16.msra.mxu0 %v2709
        %2731 = vmatprep.subr.bf16.mxu0 0
        %2732 = vmatpush1.bf16.msra.mxu0 %v2710
        %2733 = vmatprep.subr.bf16.mxu0 0
        %2734 = vmatpush1.bf16.msra.mxu0 %v2711
        %2735 = vmatprep.subr.bf16.mxu0 0
        %2736 = vmatpush1.bf16.msra.mxu0 %v2712
        %2737 = vmatprep.subr.bf16.mxu0 0
        %2738 = vmatpush1.bf16.msra.mxu0 0
        %2739 = vmatprep.subr.bf16.mxu0 0
        %2740 = vmatpush1.bf16.msra.mxu0 0
        %2741 = vmatprep.subr.bf16.mxu0 0
        %2742 = vmatpush1.bf16.msra.mxu0 0
        %2743 = vmatprep.subr.bf16.mxu0 0
        %2744 = vmatpush1.bf16.msra.mxu0 0
        %2745 = vmatprep.subr.bf16.mxu0 0
        %2746 = vmatpush1.bf16.msra.mxu0 0
        %2747 = vmatprep.subr.bf16.mxu0 0
        %2748 = vmatpush1.bf16.msra.mxu0 0
        %2749 = vmatprep.subr.bf16.mxu0 0
        %2750 = vmatpush1.bf16.msra.mxu0 0
        %2751 = vmatprep.subr.bf16.mxu0 0
        %2752 = vmatpush1.bf16.msra.mxu0 0
        %2753 = vmatprep.mubr.bf16.mxu0 0
        %2754 = vmatmul.mubr.bf16.gmra.mrb[0].mxu0 %v2665
        %v2755 = vpop.f32.mrb[0].mxu0
        %v2756 = vadd.f32 %v2671, %v2755
        %v2757 = vpop.f32.mrb[0].mxu0
        %v2758 = vpop.f32.mrb[0].mxu0
        %v2759 = vadd.f32 %v2671, %v2758
        %v2760 = vpop.f32.mrb[0].mxu0
        %2761 = vmatprep.mubr.bf16.mxu0 0
        %2762 = vmatmul.mubr.bf16.gmra.mrb[0].mxu0 %v2666
        %v2763 = vpop.f32.mrb[0].mxu0
        %v2764 = vadd.f32 %v2671, %v2763
        %v2765 = vpop.f32.mrb[0].mxu0
        %v2766 = vpop.f32.mrb[0].mxu0
        %v2767 = vadd.f32 %v2671, %v2766
        %v2768 = vpop.f32.mrb[0].mxu0
        %2769 = vdwg.mxu0
        %v2770 = vmul.f32 %v2756, 0.01
        %v2771 = vmul.f32 %v2759, 0.01
        %v2772 = vmul.f32 %v2764, 0.01
        %v2773 = vmul.f32 %v2767, 0.01
        %v2774 = vmax.f32 %v2756, %v2770
        %v2775 = vmax.f32 %v2759, %v2771
        %v2776 = vmax.f32 %v2764, %v2772
        %v2777 = vmax.f32 %v2767, %v2773
        %v2778 = vpack.c.bf16 %v2775, %v2774
        %v2779 = vpack.c.bf16 %v2777, %v2776
        %v2781 = vlaneseq
        %v2782 = vshrl.u32 %v2781, 7
        %v2783 = vsub.s32 0, %v2782
        %v2784 = vrot.slane %v2579, %v2783
        %v2802 = vunpack.c.l.b16 %v2561
        %v2803 = vunpack.c.l.b16 %v2562
        %v2804 = vunpack.c.l.b16 %v2563
        %v2805 = vunpack.c.l.b16 %v2564
        %v2806 = vunpack.c.l.b16 %v2565
        %v2807 = vunpack.c.l.b16 %v2566
        %v2808 = vunpack.c.l.b16 %v2567
        %v2809 = vunpack.c.l.b16 %v2568
        %v2810 = vunpack.c.l.b16 %v2569
        %v2811 = vunpack.c.l.b16 %v2570
        %v2812 = vunpack.c.l.b16 %v2571
        %v2813 = vunpack.c.l.b16 %v2572
        %v2814 = vunpack.c.l.b16 %v2573
        %v2815 = vunpack.c.l.b16 %v2574
        %v2816 = vunpack.c.l.b16 %v2575
        %v2817 = vunpack.c.l.b16 %v2576
        %v2818 = vpack.c.b16 %v2803, %v2802
        %v2819 = vpack.c.b16 %v2805, %v2804
        %v2820 = vpack.c.b16 %v2807, %v2806
        %v2821 = vpack.c.b16 %v2809, %v2808
        %v2822 = vpack.c.b16 %v2811, %v2810
        %v2823 = vpack.c.b16 %v2813, %v2812
        %v2824 = vpack.c.b16 %v2815, %v2814
        %v2825 = vpack.c.b16 %v2817, %v2816
        %2834 = vmatprep.subr.bf16.mxu0 0
        %2835 = vmatpush1.bf16.msra.mxu0 %v2818
        %2836 = vmatprep.subr.bf16.mxu0 0
        %2837 = vmatpush1.bf16.msra.mxu0 %v2819
        %2838 = vmatprep.subr.bf16.mxu0 0
        %2839 = vmatpush1.bf16.msra.mxu0 %v2820
        %2840 = vmatprep.subr.bf16.mxu0 0
        %2841 = vmatpush1.bf16.msra.mxu0 %v2821
        %2842 = vmatprep.subr.bf16.mxu0 0
        %2843 = vmatpush1.bf16.msra.mxu0 %v2822
        %2844 = vmatprep.subr.bf16.mxu0 0
        %2845 = vmatpush1.bf16.msra.mxu0 %v2823
        %2846 = vmatprep.subr.bf16.mxu0 0
        %2847 = vmatpush1.bf16.msra.mxu0 %v2824
        %2848 = vmatprep.subr.bf16.mxu0 0
        %2849 = vmatpush1.bf16.msra.mxu0 %v2825
        %2850 = vmatprep.subr.bf16.mxu0 0
        %2851 = vmatpush1.bf16.msra.mxu0 0
        %2852 = vmatprep.subr.bf16.mxu0 0
        %2853 = vmatpush1.bf16.msra.mxu0 0
        %2854 = vmatprep.subr.bf16.mxu0 0
        %2855 = vmatpush1.bf16.msra.mxu0 0
        %2856 = vmatprep.subr.bf16.mxu0 0
        %2857 = vmatpush1.bf16.msra.mxu0 0
        %2858 = vmatprep.subr.bf16.mxu0 0
        %2859 = vmatpush1.bf16.msra.mxu0 0
        %2860 = vmatprep.subr.bf16.mxu0 0
        %2861 = vmatpush1.bf16.msra.mxu0 0
        %2862 = vmatprep.subr.bf16.mxu0 0
        %2863 = vmatpush1.bf16.msra.mxu0 0
        %2864 = vmatprep.subr.bf16.mxu0 0
        %2865 = vmatpush1.bf16.msra.mxu0 0
        %2866 = vmatprep.mubr.bf16.mxu0 0
        %2867 = vmatmul.mubr.bf16.gmra.mrb[0].mxu0 %v2778
        %v2868 = vpop.f32.mrb[0].mxu0
        %v2869 = vadd.f32 %v2784, %v2868
        %v2870 = vpop.f32.mrb[0].mxu0
        %v2871 = vpop.f32.mrb[0].mxu0
        %v2872 = vadd.f32 %v2784, %v2871
        %v2873 = vpop.f32.mrb[0].mxu0
        %2874 = vmatprep.mubr.bf16.mxu0 0
        %2875 = vmatmul.mubr.bf16.gmra.mrb[0].mxu0 %v2779
        %v2876 = vpop.f32.mrb[0].mxu0
        %v2877 = vadd.f32 %v2784, %v2876
        %v2878 = vpop.f32.mrb[0].mxu0
        %v2879 = vpop.f32.mrb[0].mxu0
        %v2880 = vadd.f32 %v2784, %v2879
        %v2881 = vpop.f32.mrb[0].mxu0
        %2882 = vdwg.mxu0
        %v2883 = vmul.f32 %v2869, 0.01
        %v2884 = vmul.f32 %v2872, 0.01
        %v2885 = vmul.f32 %v2877, 0.01
        %v2886 = vmul.f32 %v2880, 0.01
        %v2887 = vmax.f32 %v2869, %v2883
        %v2888 = vmax.f32 %v2872, %v2884
        %v2889 = vmax.f32 %v2877, %v2885
        %v2890 = vmax.f32 %v2880, %v2886
        %v2891 = vpack.c.bf16 %v2888, %v2887
        %v2892 = vpack.c.bf16 %v2890, %v2889
        %v2894 = vlaneseq
        %v2895 = vshrl.u32 %v2894, 7
        %v2896 = vsub.s32 0, %v2895
        %v2897 = vrot.slane %v2598, %v2896
        %v2915 = vunpack.c.l.b16 %v2581
        %v2916 = vunpack.c.l.b16 %v2582
        %v2917 = vunpack.c.l.b16 %v2583
        %v2918 = vunpack.c.l.b16 %v2584
        %v2919 = vunpack.c.l.b16 %v2585
        %v2920 = vunpack.c.l.b16 %v2586
        %v2921 = vunpack.c.l.b16 %v2587
        %v2922 = vunpack.c.l.b16 %v2588
        %v2923 = vunpack.c.l.b16 %v2589
        %v2924 = vunpack.c.l.b16 %v2590
        %v2925 = vunpack.c.l.b16 %v2591
        %v2926 = vunpack.c.l.b16 %v2592
        %v2927 = vunpack.c.l.b16 %v2593
        %v2928 = vunpack.c.l.b16 %v2594
        %v2929 = vunpack.c.l.b16 %v2595
        %v2930 = vunpack.c.l.b16 %v2596
        %v2931 = vpack.c.b16 %v2916, %v2915
        %v2932 = vpack.c.b16 %v2918, %v2917
        %v2933 = vpack.c.b16 %v2920, %v2919
        %v2934 = vpack.c.b16 %v2922, %v2921
        %v2935 = vpack.c.b16 %v2924, %v2923
        %v2936 = vpack.c.b16 %v2926, %v2925
        %v2937 = vpack.c.b16 %v2928, %v2927
        %v2938 = vpack.c.b16 %v2930, %v2929
        %2947 = vmatprep.subr.bf16.mxu0 0
        %2948 = vmatpush1.bf16.msra.mxu0 %v2931
        %2949 = vmatprep.subr.bf16.mxu0 0
        %2950 = vmatpush1.bf16.msra.mxu0 %v2932
        %2951 = vmatprep.subr.bf16.mxu0 0
        %2952 = vmatpush1.bf16.msra.mxu0 %v2933
        %2953 = vmatprep.subr.bf16.mxu0 0
        %2954 = vmatpush1.bf16.msra.mxu0 %v2934
        %2955 = vmatprep.subr.bf16.mxu0 0
        %2956 = vmatpush1.bf16.msra.mxu0 %v2935
        %2957 = vmatprep.subr.bf16.mxu0 0
        %2958 = vmatpush1.bf16.msra.mxu0 %v2936
        %2959 = vmatprep.subr.bf16.mxu0 0
        %2960 = vmatpush1.bf16.msra.mxu0 %v2937
        %2961 = vmatprep.subr.bf16.mxu0 0
        %2962 = vmatpush1.bf16.msra.mxu0 %v2938
        %2963 = vmatprep.subr.bf16.mxu0 0
        %2964 = vmatpush1.bf16.msra.mxu0 0
        %2965 = vmatprep.subr.bf16.mxu0 0
        %2966 = vmatpush1.bf16.msra.mxu0 0
        %2967 = vmatprep.subr.bf16.mxu0 0
        %2968 = vmatpush1.bf16.msra.mxu0 0
        %2969 = vmatprep.subr.bf16.mxu0 0
        %2970 = vmatpush1.bf16.msra.mxu0 0
        %2971 = vmatprep.subr.bf16.mxu0 0
        %2972 = vmatpush1.bf16.msra.mxu0 0
        %2973 = vmatprep.subr.bf16.mxu0 0
        %2974 = vmatpush1.bf16.msra.mxu0 0
        %2975 = vmatprep.subr.bf16.mxu0 0
        %2976 = vmatpush1.bf16.msra.mxu0 0
        %2977 = vmatprep.subr.bf16.mxu0 0
        %2978 = vmatpush1.bf16.msra.mxu0 0
        %2979 = vmatprep.mubr.bf16.mxu0 0
        %2980 = vmatmul.mubr.bf16.gmra.mrb[0].mxu0 %v2891
        %v2981 = vpop.f32.mrb[0].mxu0
        %v2982 = vadd.f32 %v2897, %v2981
        %v2983 = vpop.f32.mrb[0].mxu0
        %v2984 = vpop.f32.mrb[0].mxu0
        %v2985 = vadd.f32 %v2897, %v2984
        %v2986 = vpop.f32.mrb[0].mxu0
        %2987 = vmatprep.mubr.bf16.mxu0 0
        %2988 = vmatmul.mubr.bf16.gmra.mrb[0].mxu0 %v2892
        %v2989 = vpop.f32.mrb[0].mxu0
        %v2990 = vadd.f32 %v2897, %v2989
        %v2991 = vpop.f32.mrb[0].mxu0
        %v2992 = vpop.f32.mrb[0].mxu0
        %v2993 = vadd.f32 %v2897, %v2992
        %v2994 = vpop.f32.mrb[0].mxu0
        %2995 = vdwg.mxu0
        %v2996 = vtanh.pop %v2982
        %v2997 = vtanh.pop %v2985
        %v2998 = vtanh.pop %v2990
        %v2999 = vtanh.pop %v2993
        %v3000 = vmul.f32 %v2996, 1.442695
        %v3001 = vpow.pop %v3000
        %v3002 = vmul.f32 %v2997, 1.442695
        %v3003 = vpow.pop %v3002
        %v3004 = vmul.f32 %v2998, 1.442695
        %v3005 = vpow.pop %v3004
        %v3006 = vmul.f32 %v2999, 1.442695
        %v3007 = vpow.pop %v3006
        %v3008 = vmul.f32 %v3001, 0.75
        %v3009 = vmul.f32 %v3003, 0.75
        %v3010 = vmul.f32 %v3005, 0.75
        %v3011 = vmul.f32 %v3007, 0.75
        %3016 = vrot.lane.b32.xlu0 %v1572, 120
        %v3017 = vpop.permute.xlu0 %3016
        %3018 = vrot.lane.b32.xlu0 %v1573, 120
        %v3019 = vpop.permute.xlu0 %3018
        %3020 = vrot.lane.b32.xlu0 %v1574, 120
        %v3021 = vpop.permute.xlu0 %3020
        %3022 = vrot.lane.b32.xlu0 %v1575, 120
        %v3023 = vpop.permute.xlu0 %3022
        %v3028 = vmul.f32 %v3008, %v3017
        %v3029 = vmul.f32 %v3009, %v3019
        %v3030 = vmul.f32 %v3010, %v3021
        %v3031 = vmul.f32 %v3011, %v3023
        %3036 = vrot.lane.b32.xlu0 %v3028, 8
        %v3037 = vpop.permute.xlu0 %3036
        %3038 = vrot.lane.b32.xlu0 %v3029, 8
        %v3039 = vpop.permute.xlu0 %3038
        %3040 = vrot.lane.b32.xlu0 %v3030, 8
        %v3041 = vpop.permute.xlu0 %3040
        %3042 = vrot.lane.b32.xlu0 %v3031, 8
        %v3043 = vpop.permute.xlu0 %3042
        %v3048 = vadd.f32 %v2536, %v3037
        %v3049 = vadd.f32 %v2537, %v3039
        %v3050 = vadd.f32 %v2538, %v3041
        %v3051 = vadd.f32 %v2539, %v3043
        %s3052 = scalar_lea.vmem %s2, 4
        %v3053 = vld [vmem:[%s3052] sm:$0xf]
        %s3054 = scalar_lea.vmem [#allocation2], 1
        %v3055 = vld [vmem:[%s3054] sm:$0x1]
        %s3056 = scalar_lea.vmem %s4, 128
        %v3057 = vld [vmem:[%s3056] sm:$0xf]
        %v3058 = vld [vmem:[%s3056 + $0x4] sm:$0xf]
        %v3059 = vld [vmem:[%s3056 + $0x8] sm:$0xf]
        %v3060 = vld [vmem:[%s3056 + $0xc] sm:$0xf]
        %v3061 = vld [vmem:[%s3056 + $0x10] sm:$0xf]
        %v3062 = vld [vmem:[%s3056 + $0x14] sm:$0xf]
        %v3063 = vld [vmem:[%s3056 + $0x18] sm:$0xf]
        %v3064 = vld [vmem:[%s3056 + $0x1c] sm:$0xf]
        %v3065 = vld [vmem:[%s3056 + $0x20] sm:$0xf]
        %v3066 = vld [vmem:[%s3056 + $0x24] sm:$0xf]
        %v3067 = vld [vmem:[%s3056 + $0x28] sm:$0xf]
        %v3068 = vld [vmem:[%s3056 + $0x2c] sm:$0xf]
        %v3069 = vld [vmem:[%s3056 + $0x30] sm:$0xf]
        %v3070 = vld [vmem:[%s3056 + $0x34] sm:$0xf]
        %v3071 = vld [vmem:[%s3056 + $0x38] sm:$0xf]
        %v3072 = vld [vmem:[%s3056 + $0x3c] sm:$0xf]
        %v3073 = vld [vmem:[%s3056 + $0x40] sm:$0xf]
        %v3074 = vld [vmem:[%s3056 + $0x44] sm:$0xf]
        %v3075 = vld [vmem:[%s3056 + $0x48] sm:$0xf]
        %v3076 = vld [vmem:[%s3056 + $0x4c] sm:$0xf]
        %v3077 = vld [vmem:[%s3056 + $0x50] sm:$0xf]
        %v3078 = vld [vmem:[%s3056 + $0x54] sm:$0xf]
        %v3079 = vld [vmem:[%s3056 + $0x58] sm:$0xf]
        %v3080 = vld [vmem:[%s3056 + $0x5c] sm:$0xf]
        %v3081 = vld [vmem:[%s3056 + $0x60] sm:$0xf]
        %v3082 = vld [vmem:[%s3056 + $0x64] sm:$0xf]
        %v3083 = vld [vmem:[%s3056 + $0x68] sm:$0xf]
        %v3084 = vld [vmem:[%s3056 + $0x6c] sm:$0xf]
        %v3085 = vld [vmem:[%s3056 + $0x70] sm:$0xf]
        %v3086 = vld [vmem:[%s3056 + $0x74] sm:$0xf]
        %v3087 = vld [vmem:[%s3056 + $0x78] sm:$0xf]
        %v3088 = vld [vmem:[%s3056 + $0x7c] sm:$0xf]
        %s3089 = scalar_lea.vmem %s5, 2
        %v3090 = vld [vmem:[%s3089] sm:$0x1]
        %v3091 = vld [vmem:[%s3089 + $0x1] sm:$0x1]
        %s3092 = scalar_lea.vmem %s6, 64
        %v3093 = vld [vmem:[%s3092] sm:$0xf]
        %v3094 = vld [vmem:[%s3092 + $0x4] sm:$0xf]
        %v3095 = vld [vmem:[%s3092 + $0x8] sm:$0xf]
        %v3096 = vld [vmem:[%s3092 + $0xc] sm:$0xf]
        %v3097 = vld [vmem:[%s3092 + $0x10] sm:$0xf]
        %v3098 = vld [vmem:[%s3092 + $0x14] sm:$0xf]
        %v3099 = vld [vmem:[%s3092 + $0x18] sm:$0xf]
        %v3100 = vld [vmem:[%s3092 + $0x1c] sm:$0xf]
        %v3101 = vld [vmem:[%s3092 + $0x20] sm:$0xf]
        %v3102 = vld [vmem:[%s3092 + $0x24] sm:$0xf]
        %v3103 = vld [vmem:[%s3092 + $0x28] sm:$0xf]
        %v3104 = vld [vmem:[%s3092 + $0x2c] sm:$0xf]
        %v3105 = vld [vmem:[%s3092 + $0x30] sm:$0xf]
        %v3106 = vld [vmem:[%s3092 + $0x34] sm:$0xf]
        %v3107 = vld [vmem:[%s3092 + $0x38] sm:$0xf]
        %v3108 = vld [vmem:[%s3092 + $0x3c] sm:$0xf]
        %s3109 = scalar_lea.vmem [#allocation5], 1
        %v3110 = vld [vmem:[%s3109] sm:$0x1]
        %v3111 = vpack.c.bf16 %v3049, %v3048
        %v3112 = vpack.c.bf16 %v3051, %v3050
        %v3114 = vlaneseq
        %v3115 = vshrl.u32 %v3114, 7
        %v3116 = vsub.s32 0, %v3115
        %v3117 = vrot.slane %v3055, %v3116
        %3121 = vrot.lane.b32.xlu0 %v3111, 120
        %v3122 = vpop.permute.xlu0 %3121
        %3123 = vrot.lane.b32.xlu0 %v3112, 120
        %v3124 = vpop.permute.xlu0 %3123
        %v3126 = vsel %vm1635, %v3122, 0
        %v3129 = vsel %vm1635, %v3124, 0
        %v3132 = vsel %vm1640, %v3053, 0
        %3134 = vmatprep.subr.bf16.mxu0 0
        %3135 = vmatpush1.bf16.msra.mxu0 %v3132
        %3136 = vmatprep.subr.bf16.mxu0 0
        %3137 = vmatpush1.bf16.msra.mxu0 0
        %3138 = vmatprep.subr.bf16.mxu0 0
        %3139 = vmatpush1.bf16.msra.mxu0 0
        %3140 = vmatprep.subr.bf16.mxu0 0
        %3141 = vmatpush1.bf16.msra.mxu0 0
        %3142 = vmatprep.subr.bf16.mxu0 0
        %3143 = vmatpush1.bf16.msra.mxu0 0
        %3144 = vmatprep.subr.bf16.mxu0 0
        %3145 = vmatpush1.bf16.msra.mxu0 0
        %3146 = vmatprep.subr.bf16.mxu0 0
        %3147 = vmatpush1.bf16.msra.mxu0 0
        %3148 = vmatprep.subr.bf16.mxu0 0
        %3149 = vmatpush1.bf16.msra.mxu0 0
        %3150 = vmatprep.subr.bf16.mxu0 0
        %3151 = vmatpush1.bf16.msra.mxu0 0
        %3152 = vmatprep.subr.bf16.mxu0 0
        %3153 = vmatpush1.bf16.msra.mxu0 0
        %3154 = vmatprep.subr.bf16.mxu0 0
        %3155 = vmatpush1.bf16.msra.mxu0 0
        %3156 = vmatprep.subr.bf16.mxu0 0
        %3157 = vmatpush1.bf16.msra.mxu0 0
        %3158 = vmatprep.subr.bf16.mxu0 0
        %3159 = vmatpush1.bf16.msra.mxu0 0
        %3160 = vmatprep.subr.bf16.mxu0 0
        %3161 = vmatpush1.bf16.msra.mxu0 0
        %3162 = vmatprep.subr.bf16.mxu0 0
        %3163 = vmatpush1.bf16.msra.mxu0 0
        %3164 = vmatprep.subr.bf16.mxu0 0
        %3165 = vmatpush1.bf16.msra.mxu0 0
        %3166 = vmatprep.mubr.bf16.mxu0 0
        %3167 = vmatmul.mubr.bf16.gmra.mrb[0].mxu0 %v3126
        %v3168 = vpop.f32.mrb[0].mxu0
        %v3169 = vadd.f32 %v3117, %v3168
        %v3170 = vpop.f32.mrb[0].mxu0
        %v3171 = vpop.f32.mrb[0].mxu0
        %v3172 = vadd.f32 %v3117, %v3171
        %v3173 = vpop.f32.mrb[0].mxu0
        %3174 = vmatprep.mubr.bf16.mxu0 0
        %3175 = vmatmul.mubr.bf16.gmra.mrb[0].mxu0 %v3129
        %v3176 = vpop.f32.mrb[0].mxu0
        %v3177 = vadd.f32 %v3117, %v3176
        %v3178 = vpop.f32.mrb[0].mxu0
        %v3179 = vpop.f32.mrb[0].mxu0
        %v3180 = vadd.f32 %v3117, %v3179
        %v3181 = vpop.f32.mrb[0].mxu0
        %3182 = vdwg.mxu0
        %v3183 = vmul.f32 %v3169, 0.01
        %v3184 = vmul.f32 %v3172, 0.01
        %v3185 = vmul.f32 %v3177, 0.01
        %v3186 = vmul.f32 %v3180, 0.01
        %v3187 = vmax.f32 %v3169, %v3183
        %v3188 = vmax.f32 %v3172, %v3184
        %v3189 = vmax.f32 %v3177, %v3185
        %v3190 = vmax.f32 %v3180, %v3186
        %v3191 = vpack.c.bf16 %v3188, %v3187
        %v3192 = vpack.c.bf16 %v3190, %v3189
        %v3194 = vlaneseq
        %v3195 = vshrl.u32 %v3194, 7
        %v3196 = vsub.s32 0, %v3195
        %v3197 = vrot.slane %v3090, %v3196
        %v3215 = vunpack.c.l.b16 %v3057
        %v3216 = vunpack.c.l.b16 %v3058
        %v3217 = vunpack.c.l.b16 %v3059
        %v3218 = vunpack.c.l.b16 %v3060
        %v3219 = vunpack.c.l.b16 %v3061
        %v3220 = vunpack.c.l.b16 %v3062
        %v3221 = vunpack.c.l.b16 %v3063
        %v3222 = vunpack.c.l.b16 %v3064
        %v3223 = vunpack.c.l.b16 %v3065
        %v3224 = vunpack.c.l.b16 %v3066
        %v3225 = vunpack.c.l.b16 %v3067
        %v3226 = vunpack.c.l.b16 %v3068
        %v3227 = vunpack.c.l.b16 %v3069
        %v3228 = vunpack.c.l.b16 %v3070
        %v3229 = vunpack.c.l.b16 %v3071
        %v3230 = vunpack.c.l.b16 %v3072
        %v3231 = vpack.c.b16 %v3216, %v3215
        %v3232 = vpack.c.b16 %v3218, %v3217
        %v3233 = vpack.c.b16 %v3220, %v3219
        %v3234 = vpack.c.b16 %v3222, %v3221
        %v3235 = vpack.c.b16 %v3224, %v3223
        %v3236 = vpack.c.b16 %v3226, %v3225
        %v3237 = vpack.c.b16 %v3228, %v3227
        %v3238 = vpack.c.b16 %v3230, %v3229
        %3247 = vmatprep.subr.bf16.mxu0 0
        %3248 = vmatpush1.bf16.msra.mxu0 %v3231
        %3249 = vmatprep.subr.bf16.mxu0 0
        %3250 = vmatpush1.bf16.msra.mxu0 %v3232
        %3251 = vmatprep.subr.bf16.mxu0 0
        %3252 = vmatpush1.bf16.msra.mxu0 %v3233
        %3253 = vmatprep.subr.bf16.mxu0 0
        %3254 = vmatpush1.bf16.msra.mxu0 %v3234
        %3255 = vmatprep.subr.bf16.mxu0 0
        %3256 = vmatpush1.bf16.msra.mxu0 %v3235
        %3257 = vmatprep.subr.bf16.mxu0 0
        %3258 = vmatpush1.bf16.msra.mxu0 %v3236
        %3259 = vmatprep.subr.bf16.mxu0 0
        %3260 = vmatpush1.bf16.msra.mxu0 %v3237
        %3261 = vmatprep.subr.bf16.mxu0 0
        %3262 = vmatpush1.bf16.msra.mxu0 %v3238
        %3263 = vmatprep.subr.bf16.mxu0 0
        %3264 = vmatpush1.bf16.msra.mxu0 0
        %3265 = vmatprep.subr.bf16.mxu0 0
        %3266 = vmatpush1.bf16.msra.mxu0 0
        %3267 = vmatprep.subr.bf16.mxu0 0
        %3268 = vmatpush1.bf16.msra.mxu0 0
        %3269 = vmatprep.subr.bf16.mxu0 0
        %3270 = vmatpush1.bf16.msra.mxu0 0
        %3271 = vmatprep.subr.bf16.mxu0 0
        %3272 = vmatpush1.bf16.msra.mxu0 0
        %3273 = vmatprep.subr.bf16.mxu0 0
        %3274 = vmatpush1.bf16.msra.mxu0 0
        %3275 = vmatprep.subr.bf16.mxu0 0
        %3276 = vmatpush1.bf16.msra.mxu0 0
        %3277 = vmatprep.subr.bf16.mxu0 0
        %3278 = vmatpush1.bf16.msra.mxu0 0
        %3279 = vmatprep.mubr.bf16.mxu0 0
        %3280 = vmatmul.mubr.bf16.gmra.mrb[0].mxu0 %v3191
        %v3281 = vpop.f32.mrb[0].mxu0
        %v3282 = vadd.f32 %v3197, %v3281
        %v3283 = vpop.f32.mrb[0].mxu0
        %v3284 = vpop.f32.mrb[0].mxu0
        %v3285 = vadd.f32 %v3197, %v3284
        %v3286 = vpop.f32.mrb[0].mxu0
        %3287 = vmatprep.mubr.bf16.mxu0 0
        %3288 = vmatmul.mubr.bf16.gmra.mrb[0].mxu0 %v3192
        %v3289 = vpop.f32.mrb[0].mxu0
        %v3290 = vadd.f32 %v3197, %v3289
        %v3291 = vpop.f32.mrb[0].mxu0
        %v3292 = vpop.f32.mrb[0].mxu0
        %v3293 = vadd.f32 %v3197, %v3292
        %v3294 = vpop.f32.mrb[0].mxu0
        %3295 = vdwg.mxu0
        %v3296 = vmul.f32 %v3282, 0.01
        %v3297 = vmul.f32 %v3285, 0.01
        %v3298 = vmul.f32 %v3290, 0.01
        %v3299 = vmul.f32 %v3293, 0.01
        %v3300 = vmax.f32 %v3282, %v3296
        %v3301 = vmax.f32 %v3285, %v3297
        %v3302 = vmax.f32 %v3290, %v3298
        %v3303 = vmax.f32 %v3293, %v3299
        %v3304 = vpack.c.bf16 %v3301, %v3300
        %v3305 = vpack.c.bf16 %v3303, %v3302
        %v3307 = vlaneseq
        %v3308 = vshrl.u32 %v3307, 7
        %v3309 = vsub.s32 0, %v3308
        %v3310 = vrot.slane %v3091, %v3309
        %v3328 = vunpack.c.l.b16 %v3073
        %v3329 = vunpack.c.l.b16 %v3074
        %v3330 = vunpack.c.l.b16 %v3075
        %v3331 = vunpack.c.l.b16 %v3076
        %v3332 = vunpack.c.l.b16 %v3077
        %v3333 = vunpack.c.l.b16 %v3078
        %v3334 = vunpack.c.l.b16 %v3079
        %v3335 = vunpack.c.l.b16 %v3080
        %v3336 = vunpack.c.l.b16 %v3081
        %v3337 = vunpack.c.l.b16 %v3082
        %v3338 = vunpack.c.l.b16 %v3083
        %v3339 = vunpack.c.l.b16 %v3084
        %v3340 = vunpack.c.l.b16 %v3085
        %v3341 = vunpack.c.l.b16 %v3086
        %v3342 = vunpack.c.l.b16 %v3087
        %v3343 = vunpack.c.l.b16 %v3088
        %v3344 = vpack.c.b16 %v3329, %v3328
        %v3345 = vpack.c.b16 %v3331, %v3330
        %v3346 = vpack.c.b16 %v3333, %v3332
        %v3347 = vpack.c.b16 %v3335, %v3334
        %v3348 = vpack.c.b16 %v3337, %v3336
        %v3349 = vpack.c.b16 %v3339, %v3338
        %v3350 = vpack.c.b16 %v3341, %v3340
        %v3351 = vpack.c.b16 %v3343, %v3342
        %3360 = vmatprep.subr.bf16.mxu0 0
        %3361 = vmatpush1.bf16.msra.mxu0 %v3344
        %3362 = vmatprep.subr.bf16.mxu0 0
        %3363 = vmatpush1.bf16.msra.mxu0 %v3345
        %3364 = vmatprep.subr.bf16.mxu0 0
        %3365 = vmatpush1.bf16.msra.mxu0 %v3346
        %3366 = vmatprep.subr.bf16.mxu0 0
        %3367 = vmatpush1.bf16.msra.mxu0 %v3347
        %3368 = vmatprep.subr.bf16.mxu0 0
        %3369 = vmatpush1.bf16.msra.mxu0 %v3348
        %3370 = vmatprep.subr.bf16.mxu0 0
        %3371 = vmatpush1.bf16.msra.mxu0 %v3349
        %3372 = vmatprep.subr.bf16.mxu0 0
        %3373 = vmatpush1.bf16.msra.mxu0 %v3350
        %3374 = vmatprep.subr.bf16.mxu0 0
        %3375 = vmatpush1.bf16.msra.mxu0 %v3351
        %3376 = vmatprep.subr.bf16.mxu0 0
        %3377 = vmatpush1.bf16.msra.mxu0 0
        %3378 = vmatprep.subr.bf16.mxu0 0
        %3379 = vmatpush1.bf16.msra.mxu0 0
        %3380 = vmatprep.subr.bf16.mxu0 0
        %3381 = vmatpush1.bf16.msra.mxu0 0
        %3382 = vmatprep.subr.bf16.mxu0 0
        %3383 = vmatpush1.bf16.msra.mxu0 0
        %3384 = vmatprep.subr.bf16.mxu0 0
        %3385 = vmatpush1.bf16.msra.mxu0 0
        %3386 = vmatprep.subr.bf16.mxu0 0
        %3387 = vmatpush1.bf16.msra.mxu0 0
        %3388 = vmatprep.subr.bf16.mxu0 0
        %3389 = vmatpush1.bf16.msra.mxu0 0
        %3390 = vmatprep.subr.bf16.mxu0 0
        %3391 = vmatpush1.bf16.msra.mxu0 0
        %3392 = vmatprep.mubr.bf16.mxu0 0
        %3393 = vmatmul.mubr.bf16.gmra.mrb[0].mxu0 %v3304
        %v3394 = vpop.f32.mrb[0].mxu0
        %v3395 = vadd.f32 %v3310, %v3394
        %v3396 = vpop.f32.mrb[0].mxu0
        %v3397 = vpop.f32.mrb[0].mxu0
        %v3398 = vadd.f32 %v3310, %v3397
        %v3399 = vpop.f32.mrb[0].mxu0
        %3400 = vmatprep.mubr.bf16.mxu0 0
        %3401 = vmatmul.mubr.bf16.gmra.mrb[0].mxu0 %v3305
        %v3402 = vpop.f32.mrb[0].mxu0
        %v3403 = vadd.f32 %v3310, %v3402
        %v3404 = vpop.f32.mrb[0].mxu0
        %v3405 = vpop.f32.mrb[0].mxu0
        %v3406 = vadd.f32 %v3310, %v3405
        %v3407 = vpop.f32.mrb[0].mxu0
        %3408 = vdwg.mxu0
        %v3409 = vmul.f32 %v3395, 0.01
        %v3410 = vmul.f32 %v3398, 0.01
        %v3411 = vmul.f32 %v3403, 0.01
        %v3412 = vmul.f32 %v3406, 0.01
        %v3413 = vmax.f32 %v3395, %v3409
        %v3414 = vmax.f32 %v3398, %v3410
        %v3415 = vmax.f32 %v3403, %v3411
        %v3416 = vmax.f32 %v3406, %v3412
        %v3417 = vpack.c.bf16 %v3414, %v3413
        %v3418 = vpack.c.bf16 %v3416, %v3415
        %v3420 = vlaneseq
        %v3421 = vshrl.u32 %v3420, 7
        %v3422 = vsub.s32 0, %v3421
        %v3423 = vrot.slane %v3110, %v3422
        %v3441 = vunpack.c.l.b16 %v3093
        %v3442 = vunpack.c.l.b16 %v3094
        %v3443 = vunpack.c.l.b16 %v3095
        %v3444 = vunpack.c.l.b16 %v3096
        %v3445 = vunpack.c.l.b16 %v3097
        %v3446 = vunpack.c.l.b16 %v3098
        %v3447 = vunpack.c.l.b16 %v3099
        %v3448 = vunpack.c.l.b16 %v3100
        %v3449 = vunpack.c.l.b16 %v3101
        %v3450 = vunpack.c.l.b16 %v3102
        %v3451 = vunpack.c.l.b16 %v3103
        %v3452 = vunpack.c.l.b16 %v3104
        %v3453 = vunpack.c.l.b16 %v3105
        %v3454 = vunpack.c.l.b16 %v3106
        %v3455 = vunpack.c.l.b16 %v3107
        %v3456 = vunpack.c.l.b16 %v3108
        %v3457 = vpack.c.b16 %v3442, %v3441
        %v3458 = vpack.c.b16 %v3444, %v3443
        %v3459 = vpack.c.b16 %v3446, %v3445
        %v3460 = vpack.c.b16 %v3448, %v3447
        %v3461 = vpack.c.b16 %v3450, %v3449
        %v3462 = vpack.c.b16 %v3452, %v3451
        %v3463 = vpack.c.b16 %v3454, %v3453
        %v3464 = vpack.c.b16 %v3456, %v3455
        %3473 = vmatprep.subr.bf16.mxu0 0
        %3474 = vmatpush1.bf16.msra.mxu0 %v3457
        %3475 = vmatprep.subr.bf16.mxu0 0
        %3476 = vmatpush1.bf16.msra.mxu0 %v3458
        %3477 = vmatprep.subr.bf16.mxu0 0
        %3478 = vmatpush1.bf16.msra.mxu0 %v3459
        %3479 = vmatprep.subr.bf16.mxu0 0
        %3480 = vmatpush1.bf16.msra.mxu0 %v3460
        %3481 = vmatprep.subr.bf16.mxu0 0
        %3482 = vmatpush1.bf16.msra.mxu0 %v3461
        %3483 = vmatprep.subr.bf16.mxu0 0
        %3484 = vmatpush1.bf16.msra.mxu0 %v3462
        %3485 = vmatprep.subr.bf16.mxu0 0
        %3486 = vmatpush1.bf16.msra.mxu0 %v3463
        %3487 = vmatprep.subr.bf16.mxu0 0
        %3488 = vmatpush1.bf16.msra.mxu0 %v3464
        %3489 = vmatprep.subr.bf16.mxu0 0
        %3490 = vmatpush1.bf16.msra.mxu0 0
        %3491 = vmatprep.subr.bf16.mxu0 0
        %3492 = vmatpush1.bf16.msra.mxu0 0
        %3493 = vmatprep.subr.bf16.mxu0 0
        %3494 = vmatpush1.bf16.msra.mxu0 0
        %3495 = vmatprep.subr.bf16.mxu0 0
        %3496 = vmatpush1.bf16.msra.mxu0 0
        %3497 = vmatprep.subr.bf16.mxu0 0
        %3498 = vmatpush1.bf16.msra.mxu0 0
        %3499 = vmatprep.subr.bf16.mxu0 0
        %3500 = vmatpush1.bf16.msra.mxu0 0
        %3501 = vmatprep.subr.bf16.mxu0 0
        %3502 = vmatpush1.bf16.msra.mxu0 0
        %3503 = vmatprep.subr.bf16.mxu0 0
        %3504 = vmatpush1.bf16.msra.mxu0 0
        %3505 = vmatprep.mubr.bf16.mxu0 0
        %3506 = vmatmul.mubr.bf16.gmra.mrb[0].mxu0 %v3417
        %v3507 = vpop.f32.mrb[0].mxu0
        %v3508 = vadd.f32 %v3423, %v3507
        %v3509 = vpop.f32.mrb[0].mxu0
        %v3510 = vpop.f32.mrb[0].mxu0
        %v3511 = vadd.f32 %v3423, %v3510
        %v3512 = vpop.f32.mrb[0].mxu0
        %3513 = vmatprep.mubr.bf16.mxu0 0
        %3514 = vmatmul.mubr.bf16.gmra.mrb[0].mxu0 %v3418
        %v3515 = vpop.f32.mrb[0].mxu0
        %v3516 = vadd.f32 %v3423, %v3515
        %v3517 = vpop.f32.mrb[0].mxu0
        %v3518 = vpop.f32.mrb[0].mxu0
        %v3519 = vadd.f32 %v3423, %v3518
        %v3520 = vpop.f32.mrb[0].mxu0
        %3521 = vdwg.mxu0
        %v3522 = vtanh.pop %v3508
        %v3523 = vtanh.pop %v3511
        %v3524 = vtanh.pop %v3516
        %v3525 = vtanh.pop %v3519
        %v3526 = vmul.f32 %v3522, 1.442695
        %v3527 = vpow.pop %v3526
        %v3528 = vmul.f32 %v3523, 1.442695
        %v3529 = vpow.pop %v3528
        %v3530 = vmul.f32 %v3524, 1.442695
        %v3531 = vpow.pop %v3530
        %v3532 = vmul.f32 %v3525, 1.442695
        %v3533 = vpow.pop %v3532
        %v3534 = vmul.f32 %v617, %v3527
        %v3535 = vmul.f32 %v618, %v3529
        %v3536 = vmul.f32 %v619, %v3531
        %v3537 = vmul.f32 %v620, %v3533
        %s3538 = scalar_lea.vmem %s2, 12
        %v3539 = vld [vmem:[%s3538] sm:$0xf]
        %s3540 = scalar_lea.vmem [#allocation2], 3
        %v3541 = vld [vmem:[%s3540] sm:$0x1]
        %s3542 = scalar_lea.vmem %s4, 384
        %v3543 = vld [vmem:[%s3542] sm:$0xf]
        %v3544 = vld [vmem:[%s3542 + $0x4] sm:$0xf]
        %v3545 = vld [vmem:[%s3542 + $0x8] sm:$0xf]
        %v3546 = vld [vmem:[%s3542 + $0xc] sm:$0xf]
        %v3547 = vld [vmem:[%s3542 + $0x10] sm:$0xf]
        %v3548 = vld [vmem:[%s3542 + $0x14] sm:$0xf]
        %v3549 = vld [vmem:[%s3542 + $0x18] sm:$0xf]
        %v3550 = vld [vmem:[%s3542 + $0x1c] sm:$0xf]
        %v3551 = vld [vmem:[%s3542 + $0x20] sm:$0xf]
        %v3552 = vld [vmem:[%s3542 + $0x24] sm:$0xf]
        %v3553 = vld [vmem:[%s3542 + $0x28] sm:$0xf]
        %v3554 = vld [vmem:[%s3542 + $0x2c] sm:$0xf]
        %v3555 = vld [vmem:[%s3542 + $0x30] sm:$0xf]
        %v3556 = vld [vmem:[%s3542 + $0x34] sm:$0xf]
        %v3557 = vld [vmem:[%s3542 + $0x38] sm:$0xf]
        %v3558 = vld [vmem:[%s3542 + $0x3c] sm:$0xf]
        %v3559 = vld [vmem:[%s3542 + $0x40] sm:$0xf]
        %v3560 = vld [vmem:[%s3542 + $0x44] sm:$0xf]
        %v3561 = vld [vmem:[%s3542 + $0x48] sm:$0xf]
        %v3562 = vld [vmem:[%s3542 + $0x4c] sm:$0xf]
        %v3563 = vld [vmem:[%s3542 + $0x50] sm:$0xf]
        %v3564 = vld [vmem:[%s3542 + $0x54] sm:$0xf]
        %v3565 = vld [vmem:[%s3542 + $0x58] sm:$0xf]
        %v3566 = vld [vmem:[%s3542 + $0x5c] sm:$0xf]
        %v3567 = vld [vmem:[%s3542 + $0x60] sm:$0xf]
        %v3568 = vld [vmem:[%s3542 + $0x64] sm:$0xf]
        %v3569 = vld [vmem:[%s3542 + $0x68] sm:$0xf]
        %v3570 = vld [vmem:[%s3542 + $0x6c] sm:$0xf]
        %v3571 = vld [vmem:[%s3542 + $0x70] sm:$0xf]
        %v3572 = vld [vmem:[%s3542 + $0x74] sm:$0xf]
        %v3573 = vld [vmem:[%s3542 + $0x78] sm:$0xf]
        %v3574 = vld [vmem:[%s3542 + $0x7c] sm:$0xf]
        %s3575 = scalar_lea.vmem %s5, 6
        %v3576 = vld [vmem:[%s3575] sm:$0x1]
        %v3577 = vld [vmem:[%s3575 + $0x1] sm:$0x1]
        %s3578 = scalar_lea.vmem %s6, 192
        %v3579 = vld [vmem:[%s3578] sm:$0xf]
        %v3580 = vld [vmem:[%s3578 + $0x4] sm:$0xf]
        %v3581 = vld [vmem:[%s3578 + $0x8] sm:$0xf]
        %v3582 = vld [vmem:[%s3578 + $0xc] sm:$0xf]
        %v3583 = vld [vmem:[%s3578 + $0x10] sm:$0xf]
        %v3584 = vld [vmem:[%s3578 + $0x14] sm:$0xf]
        %v3585 = vld [vmem:[%s3578 + $0x18] sm:$0xf]
        %v3586 = vld [vmem:[%s3578 + $0x1c] sm:$0xf]
        %v3587 = vld [vmem:[%s3578 + $0x20] sm:$0xf]
        %v3588 = vld [vmem:[%s3578 + $0x24] sm:$0xf]
        %v3589 = vld [vmem:[%s3578 + $0x28] sm:$0xf]
        %v3590 = vld [vmem:[%s3578 + $0x2c] sm:$0xf]
        %v3591 = vld [vmem:[%s3578 + $0x30] sm:$0xf]
        %v3592 = vld [vmem:[%s3578 + $0x34] sm:$0xf]
        %v3593 = vld [vmem:[%s3578 + $0x38] sm:$0xf]
        %v3594 = vld [vmem:[%s3578 + $0x3c] sm:$0xf]
        %s3595 = scalar_lea.vmem [#allocation5], 3
        %v3596 = vld [vmem:[%s3595] sm:$0x1]
        %v3598 = vlaneseq
        %v3599 = vshrl.u32 %v3598, 7
        %v3600 = vsub.s32 0, %v3599
        %v3601 = vrot.slane %v3541, %v3600
        %v3604 = vsel %vm1640, %v3539, 0
        %3606 = vmatprep.subr.bf16.mxu0 0
        %3607 = vmatpush1.bf16.msra.mxu0 %v3604
        %3608 = vmatprep.subr.bf16.mxu0 0
        %3609 = vmatpush1.bf16.msra.mxu0 0
        %3610 = vmatprep.subr.bf16.mxu0 0
        %3611 = vmatpush1.bf16.msra.mxu0 0
        %3612 = vmatprep.subr.bf16.mxu0 0
        %3613 = vmatpush1.bf16.msra.mxu0 0
        %3614 = vmatprep.subr.bf16.mxu0 0
        %3615 = vmatpush1.bf16.msra.mxu0 0
        %3616 = vmatprep.subr.bf16.mxu0 0
        %3617 = vmatpush1.bf16.msra.mxu0 0
        %3618 = vmatprep.subr.bf16.mxu0 0
        %3619 = vmatpush1.bf16.msra.mxu0 0
        %3620 = vmatprep.subr.bf16.mxu0 0
        %3621 = vmatpush1.bf16.msra.mxu0 0
        %3622 = vmatprep.subr.bf16.mxu0 0
        %3623 = vmatpush1.bf16.msra.mxu0 0
        %3624 = vmatprep.subr.bf16.mxu0 0
        %3625 = vmatpush1.bf16.msra.mxu0 0
        %3626 = vmatprep.subr.bf16.mxu0 0
        %3627 = vmatpush1.bf16.msra.mxu0 0
        %3628 = vmatprep.subr.bf16.mxu0 0
        %3629 = vmatpush1.bf16.msra.mxu0 0
        %3630 = vmatprep.subr.bf16.mxu0 0
        %3631 = vmatpush1.bf16.msra.mxu0 0
        %3632 = vmatprep.subr.bf16.mxu0 0
        %3633 = vmatpush1.bf16.msra.mxu0 0
        %3634 = vmatprep.subr.bf16.mxu0 0
        %3635 = vmatpush1.bf16.msra.mxu0 0
        %3636 = vmatprep.subr.bf16.mxu0 0
        %3637 = vmatpush1.bf16.msra.mxu0 0
        %3638 = vmatprep.mubr.bf16.mxu0 0
        %3639 = vmatmul.mubr.bf16.gmra.mrb[0].mxu0 %v3126
        %v3640 = vpop.f32.mrb[0].mxu0
        %v3641 = vadd.f32 %v3601, %v3640
        %v3642 = vpop.f32.mrb[0].mxu0
        %v3643 = vpop.f32.mrb[0].mxu0
        %v3644 = vadd.f32 %v3601, %v3643
        %v3645 = vpop.f32.mrb[0].mxu0
        %3646 = vmatprep.mubr.bf16.mxu0 0
        %3647 = vmatmul.mubr.bf16.gmra.mrb[0].mxu0 %v3129
        %v3648 = vpop.f32.mrb[0].mxu0
        %v3649 = vadd.f32 %v3601, %v3648
        %v3650 = vpop.f32.mrb[0].mxu0
        %v3651 = vpop.f32.mrb[0].mxu0
        %v3652 = vadd.f32 %v3601, %v3651
        %v3653 = vpop.f32.mrb[0].mxu0
        %3654 = vdwg.mxu0
        %v3655 = vmul.f32 %v3641, 0.01
        %v3656 = vmul.f32 %v3644, 0.01
        %v3657 = vmul.f32 %v3649, 0.01
        %v3658 = vmul.f32 %v3652, 0.01
        %v3659 = vmax.f32 %v3641, %v3655
        %v3660 = vmax.f32 %v3644, %v3656
        %v3661 = vmax.f32 %v3649, %v3657
        %v3662 = vmax.f32 %v3652, %v3658
        %v3663 = vpack.c.bf16 %v3660, %v3659
        %v3664 = vpack.c.bf16 %v3662, %v3661
        %v3666 = vlaneseq
        %v3667 = vshrl.u32 %v3666, 7
        %v3668 = vsub.s32 0, %v3667
        %v3669 = vrot.slane %v3576, %v3668
        %v3687 = vunpack.c.l.b16 %v3543
        %v3688 = vunpack.c.l.b16 %v3544
        %v3689 = vunpack.c.l.b16 %v3545
        %v3690 = vunpack.c.l.b16 %v3546
        %v3691 = vunpack.c.l.b16 %v3547
        %v3692 = vunpack.c.l.b16 %v3548
        %v3693 = vunpack.c.l.b16 %v3549
        %v3694 = vunpack.c.l.b16 %v3550
        %v3695 = vunpack.c.l.b16 %v3551
        %v3696 = vunpack.c.l.b16 %v3552
        %v3697 = vunpack.c.l.b16 %v3553
        %v3698 = vunpack.c.l.b16 %v3554
        %v3699 = vunpack.c.l.b16 %v3555
        %v3700 = vunpack.c.l.b16 %v3556
        %v3701 = vunpack.c.l.b16 %v3557
        %v3702 = vunpack.c.l.b16 %v3558
        %v3703 = vpack.c.b16 %v3688, %v3687
        %v3704 = vpack.c.b16 %v3690, %v3689
        %v3705 = vpack.c.b16 %v3692, %v3691
        %v3706 = vpack.c.b16 %v3694, %v3693
        %v3707 = vpack.c.b16 %v3696, %v3695
        %v3708 = vpack.c.b16 %v3698, %v3697
        %v3709 = vpack.c.b16 %v3700, %v3699
        %v3710 = vpack.c.b16 %v3702, %v3701
        %3719 = vmatprep.subr.bf16.mxu0 0
        %3720 = vmatpush1.bf16.msra.mxu0 %v3703
        %3721 = vmatprep.subr.bf16.mxu0 0
        %3722 = vmatpush1.bf16.msra.mxu0 %v3704
        %3723 = vmatprep.subr.bf16.mxu0 0
        %3724 = vmatpush1.bf16.msra.mxu0 %v3705
        %3725 = vmatprep.subr.bf16.mxu0 0
        %3726 = vmatpush1.bf16.msra.mxu0 %v3706
        %3727 = vmatprep.subr.bf16.mxu0 0
        %3728 = vmatpush1.bf16.msra.mxu0 %v3707
        %3729 = vmatprep.subr.bf16.mxu0 0
        %3730 = vmatpush1.bf16.msra.mxu0 %v3708
        %3731 = vmatprep.subr.bf16.mxu0 0
        %3732 = vmatpush1.bf16.msra.mxu0 %v3709
        %3733 = vmatprep.subr.bf16.mxu0 0
        %3734 = vmatpush1.bf16.msra.mxu0 %v3710
        %3735 = vmatprep.subr.bf16.mxu0 0
        %3736 = vmatpush1.bf16.msra.mxu0 0
        %3737 = vmatprep.subr.bf16.mxu0 0
        %3738 = vmatpush1.bf16.msra.mxu0 0
        %3739 = vmatprep.subr.bf16.mxu0 0
        %3740 = vmatpush1.bf16.msra.mxu0 0
        %3741 = vmatprep.subr.bf16.mxu0 0
        %3742 = vmatpush1.bf16.msra.mxu0 0
        %3743 = vmatprep.subr.bf16.mxu0 0
        %3744 = vmatpush1.bf16.msra.mxu0 0
        %3745 = vmatprep.subr.bf16.mxu0 0
        %3746 = vmatpush1.bf16.msra.mxu0 0
        %3747 = vmatprep.subr.bf16.mxu0 0
        %3748 = vmatpush1.bf16.msra.mxu0 0
        %3749 = vmatprep.subr.bf16.mxu0 0
        %3750 = vmatpush1.bf16.msra.mxu0 0
        %3751 = vmatprep.mubr.bf16.mxu0 0
        %3752 = vmatmul.mubr.bf16.gmra.mrb[0].mxu0 %v3663
        %v3753 = vpop.f32.mrb[0].mxu0
        %v3754 = vadd.f32 %v3669, %v3753
        %v3755 = vpop.f32.mrb[0].mxu0
        %v3756 = vpop.f32.mrb[0].mxu0
        %v3757 = vadd.f32 %v3669, %v3756
        %v3758 = vpop.f32.mrb[0].mxu0
        %3759 = vmatprep.mubr.bf16.mxu0 0
        %3760 = vmatmul.mubr.bf16.gmra.mrb[0].mxu0 %v3664
        %v3761 = vpop.f32.mrb[0].mxu0
        %v3762 = vadd.f32 %v3669, %v3761
        %v3763 = vpop.f32.mrb[0].mxu0
        %v3764 = vpop.f32.mrb[0].mxu0
        %v3765 = vadd.f32 %v3669, %v3764
        %v3766 = vpop.f32.mrb[0].mxu0
        %3767 = vdwg.mxu0
        %v3768 = vmul.f32 %v3754, 0.01
        %v3769 = vmul.f32 %v3757, 0.01
        %v3770 = vmul.f32 %v3762, 0.01
        %v3771 = vmul.f32 %v3765, 0.01
        %v3772 = vmax.f32 %v3754, %v3768
        %v3773 = vmax.f32 %v3757, %v3769
        %v3774 = vmax.f32 %v3762, %v3770
        %v3775 = vmax.f32 %v3765, %v3771
        %v3776 = vpack.c.bf16 %v3773, %v3772
        %v3777 = vpack.c.bf16 %v3775, %v3774
        %v3779 = vlaneseq
        %v3780 = vshrl.u32 %v3779, 7
        %v3781 = vsub.s32 0, %v3780
        %v3782 = vrot.slane %v3577, %v3781
        %v3800 = vunpack.c.l.b16 %v3559
        %v3801 = vunpack.c.l.b16 %v3560
        %v3802 = vunpack.c.l.b16 %v3561
        %v3803 = vunpack.c.l.b16 %v3562
        %v3804 = vunpack.c.l.b16 %v3563
        %v3805 = vunpack.c.l.b16 %v3564
        %v3806 = vunpack.c.l.b16 %v3565
        %v3807 = vunpack.c.l.b16 %v3566
        %v3808 = vunpack.c.l.b16 %v3567
        %v3809 = vunpack.c.l.b16 %v3568
        %v3810 = vunpack.c.l.b16 %v3569
        %v3811 = vunpack.c.l.b16 %v3570
        %v3812 = vunpack.c.l.b16 %v3571
        %v3813 = vunpack.c.l.b16 %v3572
        %v3814 = vunpack.c.l.b16 %v3573
        %v3815 = vunpack.c.l.b16 %v3574
        %v3816 = vpack.c.b16 %v3801, %v3800
        %v3817 = vpack.c.b16 %v3803, %v3802
        %v3818 = vpack.c.b16 %v3805, %v3804
        %v3819 = vpack.c.b16 %v3807, %v3806
        %v3820 = vpack.c.b16 %v3809, %v3808
        %v3821 = vpack.c.b16 %v3811, %v3810
        %v3822 = vpack.c.b16 %v3813, %v3812
        %v3823 = vpack.c.b16 %v3815, %v3814
        %3832 = vmatprep.subr.bf16.mxu0 0
        %3833 = vmatpush1.bf16.msra.mxu0 %v3816
        %3834 = vmatprep.subr.bf16.mxu0 0
        %3835 = vmatpush1.bf16.msra.mxu0 %v3817
        %3836 = vmatprep.subr.bf16.mxu0 0
        %3837 = vmatpush1.bf16.msra.mxu0 %v3818
        %3838 = vmatprep.subr.bf16.mxu0 0
        %3839 = vmatpush1.bf16.msra.mxu0 %v3819
        %3840 = vmatprep.subr.bf16.mxu0 0
        %3841 = vmatpush1.bf16.msra.mxu0 %v3820
        %3842 = vmatprep.subr.bf16.mxu0 0
        %3843 = vmatpush1.bf16.msra.mxu0 %v3821
        %3844 = vmatprep.subr.bf16.mxu0 0
        %3845 = vmatpush1.bf16.msra.mxu0 %v3822
        %3846 = vmatprep.subr.bf16.mxu0 0
        %3847 = vmatpush1.bf16.msra.mxu0 %v3823
        %3848 = vmatprep.subr.bf16.mxu0 0
        %3849 = vmatpush1.bf16.msra.mxu0 0
        %3850 = vmatprep.subr.bf16.mxu0 0
        %3851 = vmatpush1.bf16.msra.mxu0 0
        %3852 = vmatprep.subr.bf16.mxu0 0
        %3853 = vmatpush1.bf16.msra.mxu0 0
        %3854 = vmatprep.subr.bf16.mxu0 0
        %3855 = vmatpush1.bf16.msra.mxu0 0
        %3856 = vmatprep.subr.bf16.mxu0 0
        %3857 = vmatpush1.bf16.msra.mxu0 0
        %3858 = vmatprep.subr.bf16.mxu0 0
        %3859 = vmatpush1.bf16.msra.mxu0 0
        %3860 = vmatprep.subr.bf16.mxu0 0
        %3861 = vmatpush1.bf16.msra.mxu0 0
        %3862 = vmatprep.subr.bf16.mxu0 0
        %3863 = vmatpush1.bf16.msra.mxu0 0
        %3864 = vmatprep.mubr.bf16.mxu0 0
        %3865 = vmatmul.mubr.bf16.gmra.mrb[0].mxu0 %v3776
        %v3866 = vpop.f32.mrb[0].mxu0
        %v3867 = vadd.f32 %v3782, %v3866
        %v3868 = vpop.f32.mrb[0].mxu0
        %v3869 = vpop.f32.mrb[0].mxu0
        %v3870 = vadd.f32 %v3782, %v3869
        %v3871 = vpop.f32.mrb[0].mxu0
        %3872 = vmatprep.mubr.bf16.mxu0 0
        %3873 = vmatmul.mubr.bf16.gmra.mrb[0].mxu0 %v3777
        %v3874 = vpop.f32.mrb[0].mxu0
        %v3875 = vadd.f32 %v3782, %v3874
        %v3876 = vpop.f32.mrb[0].mxu0
        %v3877 = vpop.f32.mrb[0].mxu0
        %v3878 = vadd.f32 %v3782, %v3877
        %v3879 = vpop.f32.mrb[0].mxu0
        %3880 = vdwg.mxu0
        %v3881 = vmul.f32 %v3867, 0.01
        %v3882 = vmul.f32 %v3870, 0.01
        %v3883 = vmul.f32 %v3875, 0.01
        %v3884 = vmul.f32 %v3878, 0.01
        %v3885 = vmax.f32 %v3867, %v3881
        %v3886 = vmax.f32 %v3870, %v3882
        %v3887 = vmax.f32 %v3875, %v3883
        %v3888 = vmax.f32 %v3878, %v3884
        %v3889 = vpack.c.bf16 %v3886, %v3885
        %v3890 = vpack.c.bf16 %v3888, %v3887
        %v3892 = vlaneseq
        %v3893 = vshrl.u32 %v3892, 7
        %v3894 = vsub.s32 0, %v3893
        %v3895 = vrot.slane %v3596, %v3894
        %v3913 = vunpack.c.l.b16 %v3579
        %v3914 = vunpack.c.l.b16 %v3580
        %v3915 = vunpack.c.l.b16 %v3581
        %v3916 = vunpack.c.l.b16 %v3582
        %v3917 = vunpack.c.l.b16 %v3583
        %v3918 = vunpack.c.l.b16 %v3584
        %v3919 = vunpack.c.l.b16 %v3585
        %v3920 = vunpack.c.l.b16 %v3586
        %v3921 = vunpack.c.l.b16 %v3587
        %v3922 = vunpack.c.l.b16 %v3588
        %v3923 = vunpack.c.l.b16 %v3589
        %v3924 = vunpack.c.l.b16 %v3590
        %v3925 = vunpack.c.l.b16 %v3591
        %v3926 = vunpack.c.l.b16 %v3592
        %v3927 = vunpack.c.l.b16 %v3593
        %v3928 = vunpack.c.l.b16 %v3594
        %v3929 = vpack.c.b16 %v3914, %v3913
        %v3930 = vpack.c.b16 %v3916, %v3915
        %v3931 = vpack.c.b16 %v3918, %v3917
        %v3932 = vpack.c.b16 %v3920, %v3919
        %v3933 = vpack.c.b16 %v3922, %v3921
        %v3934 = vpack.c.b16 %v3924, %v3923
        %v3935 = vpack.c.b16 %v3926, %v3925
        %v3936 = vpack.c.b16 %v3928, %v3927
        %3945 = vmatprep.subr.bf16.mxu0 0
        %3946 = vmatpush1.bf16.msra.mxu0 %v3929
        %3947 = vmatprep.subr.bf16.mxu0 0
        %3948 = vmatpush1.bf16.msra.mxu0 %v3930
        %3949 = vmatprep.subr.bf16.mxu0 0
        %3950 = vmatpush1.bf16.msra.mxu0 %v3931
        %3951 = vmatprep.subr.bf16.mxu0 0
        %3952 = vmatpush1.bf16.msra.mxu0 %v3932
        %3953 = vmatprep.subr.bf16.mxu0 0
        %3954 = vmatpush1.bf16.msra.mxu0 %v3933
        %3955 = vmatprep.subr.bf16.mxu0 0
        %3956 = vmatpush1.bf16.msra.mxu0 %v3934
        %3957 = vmatprep.subr.bf16.mxu0 0
        %3958 = vmatpush1.bf16.msra.mxu0 %v3935
        %3959 = vmatprep.subr.bf16.mxu0 0
        %3960 = vmatpush1.bf16.msra.mxu0 %v3936
        %3961 = vmatprep.subr.bf16.mxu0 0
        %3962 = vmatpush1.bf16.msra.mxu0 0
        %3963 = vmatprep.subr.bf16.mxu0 0
        %3964 = vmatpush1.bf16.msra.mxu0 0
        %3965 = vmatprep.subr.bf16.mxu0 0
        %3966 = vmatpush1.bf16.msra.mxu0 0
        %3967 = vmatprep.subr.bf16.mxu0 0
        %3968 = vmatpush1.bf16.msra.mxu0 0
        %3969 = vmatprep.subr.bf16.mxu0 0
        %3970 = vmatpush1.bf16.msra.mxu0 0
        %3971 = vmatprep.subr.bf16.mxu0 0
        %3972 = vmatpush1.bf16.msra.mxu0 0
        %3973 = vmatprep.subr.bf16.mxu0 0
        %3974 = vmatpush1.bf16.msra.mxu0 0
        %3975 = vmatprep.subr.bf16.mxu0 0
        %3976 = vmatpush1.bf16.msra.mxu0 0
        %3977 = vmatprep.mubr.bf16.mxu0 0
        %3978 = vmatmul.mubr.bf16.gmra.mrb[0].mxu0 %v3889
        %v3979 = vpop.f32.mrb[0].mxu0
        %v3980 = vadd.f32 %v3895, %v3979
        %v3981 = vpop.f32.mrb[0].mxu0
        %v3982 = vpop.f32.mrb[0].mxu0
        %v3983 = vadd.f32 %v3895, %v3982
        %v3984 = vpop.f32.mrb[0].mxu0
        %3985 = vmatprep.mubr.bf16.mxu0 0
        %3986 = vmatmul.mubr.bf16.gmra.mrb[0].mxu0 %v3890
        %v3987 = vpop.f32.mrb[0].mxu0
        %v3988 = vadd.f32 %v3895, %v3987
        %v3989 = vpop.f32.mrb[0].mxu0
        %v3990 = vpop.f32.mrb[0].mxu0
        %v3991 = vadd.f32 %v3895, %v3990
        %v3992 = vpop.f32.mrb[0].mxu0
        %3993 = vdwg.mxu0
        %v3994 = vadd.f32 %v3534, %v3980
        %v3995 = vadd.f32 %v3535, %v3983
        %v3996 = vadd.f32 %v3536, %v3988
        %v3997 = vadd.f32 %v3537, %v3991
        %s3998 = scalar_lea.vmem %s2, 20
        %v3999 = vld [vmem:[%s3998] sm:$0xf]
        %s4000 = scalar_lea.vmem [#allocation2], 5
        %v4001 = vld [vmem:[%s4000] sm:$0x1]
        %s4002 = scalar_lea.vmem %s4, 640
        %v4003 = vld [vmem:[%s4002] sm:$0xf]
        %v4004 = vld [vmem:[%s4002 + $0x4] sm:$0xf]
        %v4005 = vld [vmem:[%s4002 + $0x8] sm:$0xf]
        %v4006 = vld [vmem:[%s4002 + $0xc] sm:$0xf]
        %v4007 = vld [vmem:[%s4002 + $0x10] sm:$0xf]
        %v4008 = vld [vmem:[%s4002 + $0x14] sm:$0xf]
        %v4009 = vld [vmem:[%s4002 + $0x18] sm:$0xf]
        %v4010 = vld [vmem:[%s4002 + $0x1c] sm:$0xf]
        %v4011 = vld [vmem:[%s4002 + $0x20] sm:$0xf]
        %v4012 = vld [vmem:[%s4002 + $0x24] sm:$0xf]
        %v4013 = vld [vmem:[%s4002 + $0x28] sm:$0xf]
        %v4014 = vld [vmem:[%s4002 + $0x2c] sm:$0xf]
        %v4015 = vld [vmem:[%s4002 + $0x30] sm:$0xf]
        %v4016 = vld [vmem:[%s4002 + $0x34] sm:$0xf]
        %v4017 = vld [vmem:[%s4002 + $0x38] sm:$0xf]
        %v4018 = vld [vmem:[%s4002 + $0x3c] sm:$0xf]
        %v4019 = vld [vmem:[%s4002 + $0x40] sm:$0xf]
        %v4020 = vld [vmem:[%s4002 + $0x44] sm:$0xf]
        %v4021 = vld [vmem:[%s4002 + $0x48] sm:$0xf]
        %v4022 = vld [vmem:[%s4002 + $0x4c] sm:$0xf]
        %v4023 = vld [vmem:[%s4002 + $0x50] sm:$0xf]
        %v4024 = vld [vmem:[%s4002 + $0x54] sm:$0xf]
        %v4025 = vld [vmem:[%s4002 + $0x58] sm:$0xf]
        %v4026 = vld [vmem:[%s4002 + $0x5c] sm:$0xf]
        %v4027 = vld [vmem:[%s4002 + $0x60] sm:$0xf]
        %v4028 = vld [vmem:[%s4002 + $0x64] sm:$0xf]
        %v4029 = vld [vmem:[%s4002 + $0x68] sm:$0xf]
        %v4030 = vld [vmem:[%s4002 + $0x6c] sm:$0xf]
        %v4031 = vld [vmem:[%s4002 + $0x70] sm:$0xf]
        %v4032 = vld [vmem:[%s4002 + $0x74] sm:$0xf]
        %v4033 = vld [vmem:[%s4002 + $0x78] sm:$0xf]
        %v4034 = vld [vmem:[%s4002 + $0x7c] sm:$0xf]
        %s4035 = scalar_lea.vmem %s5, 10
        %v4036 = vld [vmem:[%s4035] sm:$0x1]
        %v4037 = vld [vmem:[%s4035 + $0x1] sm:$0x1]
        %s4038 = scalar_lea.vmem %s6, 320
        %v4039 = vld [vmem:[%s4038] sm:$0xf]
        %v4040 = vld [vmem:[%s4038 + $0x4] sm:$0xf]
        %v4041 = vld [vmem:[%s4038 + $0x8] sm:$0xf]
        %v4042 = vld [vmem:[%s4038 + $0xc] sm:$0xf]
        %v4043 = vld [vmem:[%s4038 + $0x10] sm:$0xf]
        %v4044 = vld [vmem:[%s4038 + $0x14] sm:$0xf]
        %v4045 = vld [vmem:[%s4038 + $0x18] sm:$0xf]
        %v4046 = vld [vmem:[%s4038 + $0x1c] sm:$0xf]
        %v4047 = vld [vmem:[%s4038 + $0x20] sm:$0xf]
        %v4048 = vld [vmem:[%s4038 + $0x24] sm:$0xf]
        %v4049 = vld [vmem:[%s4038 + $0x28] sm:$0xf]
        %v4050 = vld [vmem:[%s4038 + $0x2c] sm:$0xf]
        %v4051 = vld [vmem:[%s4038 + $0x30] sm:$0xf]
        %v4052 = vld [vmem:[%s4038 + $0x34] sm:$0xf]
        %v4053 = vld [vmem:[%s4038 + $0x38] sm:$0xf]
        %v4054 = vld [vmem:[%s4038 + $0x3c] sm:$0xf]
        %s4055 = scalar_lea.vmem [#allocation5], 5
        %v4056 = vld [vmem:[%s4055] sm:$0x1]
        %v4058 = vlaneseq
        %v4059 = vshrl.u32 %v4058, 7
        %v4060 = vsub.s32 0, %v4059
        %v4061 = vrot.slane %v4001, %v4060
        %v4064 = vsel %vm1640, %v3999, 0
        %4066 = vmatprep.subr.bf16.mxu0 0
        %4067 = vmatpush1.bf16.msra.mxu0 %v4064
        %4068 = vmatprep.subr.bf16.mxu0 0
        %4069 = vmatpush1.bf16.msra.mxu0 0
        %4070 = vmatprep.subr.bf16.mxu0 0
        %4071 = vmatpush1.bf16.msra.mxu0 0
        %4072 = vmatprep.subr.bf16.mxu0 0
        %4073 = vmatpush1.bf16.msra.mxu0 0
        %4074 = vmatprep.subr.bf16.mxu0 0
        %4075 = vmatpush1.bf16.msra.mxu0 0
        %4076 = vmatprep.subr.bf16.mxu0 0
        %4077 = vmatpush1.bf16.msra.mxu0 0
        %4078 = vmatprep.subr.bf16.mxu0 0
        %4079 = vmatpush1.bf16.msra.mxu0 0
        %4080 = vmatprep.subr.bf16.mxu0 0
        %4081 = vmatpush1.bf16.msra.mxu0 0
        %4082 = vmatprep.subr.bf16.mxu0 0
        %4083 = vmatpush1.bf16.msra.mxu0 0
        %4084 = vmatprep.subr.bf16.mxu0 0
        %4085 = vmatpush1.bf16.msra.mxu0 0
        %4086 = vmatprep.subr.bf16.mxu0 0
        %4087 = vmatpush1.bf16.msra.mxu0 0
        %4088 = vmatprep.subr.bf16.mxu0 0
        %4089 = vmatpush1.bf16.msra.mxu0 0
        %4090 = vmatprep.subr.bf16.mxu0 0
        %4091 = vmatpush1.bf16.msra.mxu0 0
        %4092 = vmatprep.subr.bf16.mxu0 0
        %4093 = vmatpush1.bf16.msra.mxu0 0
        %4094 = vmatprep.subr.bf16.mxu0 0
        %4095 = vmatpush1.bf16.msra.mxu0 0
        %4096 = vmatprep.subr.bf16.mxu0 0
        %4097 = vmatpush1.bf16.msra.mxu0 0
        %4098 = vmatprep.mubr.bf16.mxu0 0
        %4099 = vmatmul.mubr.bf16.gmra.mrb[0].mxu0 %v3126
        %v4100 = vpop.f32.mrb[0].mxu0
        %v4101 = vadd.f32 %v4061, %v4100
        %v4102 = vpop.f32.mrb[0].mxu0
        %v4103 = vpop.f32.mrb[0].mxu0
        %v4104 = vadd.f32 %v4061, %v4103
        %v4105 = vpop.f32.mrb[0].mxu0
        %4106 = vmatprep.mubr.bf16.mxu0 0
        %4107 = vmatmul.mubr.bf16.gmra.mrb[0].mxu0 %v3129
        %v4108 = vpop.f32.mrb[0].mxu0
        %v4109 = vadd.f32 %v4061, %v4108
        %v4110 = vpop.f32.mrb[0].mxu0
        %v4111 = vpop.f32.mrb[0].mxu0
        %v4112 = vadd.f32 %v4061, %v4111
        %v4113 = vpop.f32.mrb[0].mxu0
        %4114 = vdwg.mxu0
        %v4115 = vmul.f32 %v4101, 0.01
        %v4116 = vmul.f32 %v4104, 0.01
        %v4117 = vmul.f32 %v4109, 0.01
        %v4118 = vmul.f32 %v4112, 0.01
        %v4119 = vmax.f32 %v4101, %v4115
        %v4120 = vmax.f32 %v4104, %v4116
        %v4121 = vmax.f32 %v4109, %v4117
        %v4122 = vmax.f32 %v4112, %v4118
        %v4123 = vpack.c.bf16 %v4120, %v4119
        %v4124 = vpack.c.bf16 %v4122, %v4121
        %v4126 = vlaneseq
        %v4127 = vshrl.u32 %v4126, 7
        %v4128 = vsub.s32 0, %v4127
        %v4129 = vrot.slane %v4036, %v4128
        %v4147 = vunpack.c.l.b16 %v4003
        %v4148 = vunpack.c.l.b16 %v4004
        %v4149 = vunpack.c.l.b16 %v4005
        %v4150 = vunpack.c.l.b16 %v4006
        %v4151 = vunpack.c.l.b16 %v4007
        %v4152 = vunpack.c.l.b16 %v4008
        %v4153 = vunpack.c.l.b16 %v4009
        %v4154 = vunpack.c.l.b16 %v4010
        %v4155 = vunpack.c.l.b16 %v4011
        %v4156 = vunpack.c.l.b16 %v4012
        %v4157 = vunpack.c.l.b16 %v4013
        %v4158 = vunpack.c.l.b16 %v4014
        %v4159 = vunpack.c.l.b16 %v4015
        %v4160 = vunpack.c.l.b16 %v4016
        %v4161 = vunpack.c.l.b16 %v4017
        %v4162 = vunpack.c.l.b16 %v4018
        %v4163 = vpack.c.b16 %v4148, %v4147
        %v4164 = vpack.c.b16 %v4150, %v4149
        %v4165 = vpack.c.b16 %v4152, %v4151
        %v4166 = vpack.c.b16 %v4154, %v4153
        %v4167 = vpack.c.b16 %v4156, %v4155
        %v4168 = vpack.c.b16 %v4158, %v4157
        %v4169 = vpack.c.b16 %v4160, %v4159
        %v4170 = vpack.c.b16 %v4162, %v4161
        %4179 = vmatprep.subr.bf16.mxu0 0
        %4180 = vmatpush1.bf16.msra.mxu0 %v4163
        %4181 = vmatprep.subr.bf16.mxu0 0
        %4182 = vmatpush1.bf16.msra.mxu0 %v4164
        %4183 = vmatprep.subr.bf16.mxu0 0
        %4184 = vmatpush1.bf16.msra.mxu0 %v4165
        %4185 = vmatprep.subr.bf16.mxu0 0
        %4186 = vmatpush1.bf16.msra.mxu0 %v4166
        %4187 = vmatprep.subr.bf16.mxu0 0
        %4188 = vmatpush1.bf16.msra.mxu0 %v4167
        %4189 = vmatprep.subr.bf16.mxu0 0
        %4190 = vmatpush1.bf16.msra.mxu0 %v4168
        %4191 = vmatprep.subr.bf16.mxu0 0
        %4192 = vmatpush1.bf16.msra.mxu0 %v4169
        %4193 = vmatprep.subr.bf16.mxu0 0
        %4194 = vmatpush1.bf16.msra.mxu0 %v4170
        %4195 = vmatprep.subr.bf16.mxu0 0
        %4196 = vmatpush1.bf16.msra.mxu0 0
        %4197 = vmatprep.subr.bf16.mxu0 0
        %4198 = vmatpush1.bf16.msra.mxu0 0
        %4199 = vmatprep.subr.bf16.mxu0 0
        %4200 = vmatpush1.bf16.msra.mxu0 0
        %4201 = vmatprep.subr.bf16.mxu0 0
        %4202 = vmatpush1.bf16.msra.mxu0 0
        %4203 = vmatprep.subr.bf16.mxu0 0
        %4204 = vmatpush1.bf16.msra.mxu0 0
        %4205 = vmatprep.subr.bf16.mxu0 0
        %4206 = vmatpush1.bf16.msra.mxu0 0
        %4207 = vmatprep.subr.bf16.mxu0 0
        %4208 = vmatpush1.bf16.msra.mxu0 0
        %4209 = vmatprep.subr.bf16.mxu0 0
        %4210 = vmatpush1.bf16.msra.mxu0 0
        %4211 = vmatprep.mubr.bf16.mxu0 0
        %4212 = vmatmul.mubr.bf16.gmra.mrb[0].mxu0 %v4123
        %v4213 = vpop.f32.mrb[0].mxu0
        %v4214 = vadd.f32 %v4129, %v4213
        %v4215 = vpop.f32.mrb[0].mxu0
        %v4216 = vpop.f32.mrb[0].mxu0
        %v4217 = vadd.f32 %v4129, %v4216
        %v4218 = vpop.f32.mrb[0].mxu0
        %4219 = vmatprep.mubr.bf16.mxu0 0
        %4220 = vmatmul.mubr.bf16.gmra.mrb[0].mxu0 %v4124
        %v4221 = vpop.f32.mrb[0].mxu0
        %v4222 = vadd.f32 %v4129, %v4221
        %v4223 = vpop.f32.mrb[0].mxu0
        %v4224 = vpop.f32.mrb[0].mxu0
        %v4225 = vadd.f32 %v4129, %v4224
        %v4226 = vpop.f32.mrb[0].mxu0
        %4227 = vdwg.mxu0
        %v4228 = vmul.f32 %v4214, 0.01
        %v4229 = vmul.f32 %v4217, 0.01
        %v4230 = vmul.f32 %v4222, 0.01
        %v4231 = vmul.f32 %v4225, 0.01
        %v4232 = vmax.f32 %v4214, %v4228
        %v4233 = vmax.f32 %v4217, %v4229
        %v4234 = vmax.f32 %v4222, %v4230
        %v4235 = vmax.f32 %v4225, %v4231
        %v4236 = vpack.c.bf16 %v4233, %v4232
        %v4237 = vpack.c.bf16 %v4235, %v4234
        %v4239 = vlaneseq
        %v4240 = vshrl.u32 %v4239, 7
        %v4241 = vsub.s32 0, %v4240
        %v4242 = vrot.slane %v4037, %v4241
        %v4260 = vunpack.c.l.b16 %v4019
        %v4261 = vunpack.c.l.b16 %v4020
        %v4262 = vunpack.c.l.b16 %v4021
        %v4263 = vunpack.c.l.b16 %v4022
        %v4264 = vunpack.c.l.b16 %v4023
        %v4265 = vunpack.c.l.b16 %v4024
        %v4266 = vunpack.c.l.b16 %v4025
        %v4267 = vunpack.c.l.b16 %v4026
        %v4268 = vunpack.c.l.b16 %v4027
        %v4269 = vunpack.c.l.b16 %v4028
        %v4270 = vunpack.c.l.b16 %v4029
        %v4271 = vunpack.c.l.b16 %v4030
        %v4272 = vunpack.c.l.b16 %v4031
        %v4273 = vunpack.c.l.b16 %v4032
        %v4274 = vunpack.c.l.b16 %v4033
        %v4275 = vunpack.c.l.b16 %v4034
        %v4276 = vpack.c.b16 %v4261, %v4260
        %v4277 = vpack.c.b16 %v4263, %v4262
        %v4278 = vpack.c.b16 %v4265, %v4264
        %v4279 = vpack.c.b16 %v4267, %v4266
        %v4280 = vpack.c.b16 %v4269, %v4268
        %v4281 = vpack.c.b16 %v4271, %v4270
        %v4282 = vpack.c.b16 %v4273, %v4272
        %v4283 = vpack.c.b16 %v4275, %v4274
        %4292 = vmatprep.subr.bf16.mxu0 0
        %4293 = vmatpush1.bf16.msra.mxu0 %v4276
        %4294 = vmatprep.subr.bf16.mxu0 0
        %4295 = vmatpush1.bf16.msra.mxu0 %v4277
        %4296 = vmatprep.subr.bf16.mxu0 0
        %4297 = vmatpush1.bf16.msra.mxu0 %v4278
        %4298 = vmatprep.subr.bf16.mxu0 0
        %4299 = vmatpush1.bf16.msra.mxu0 %v4279
        %4300 = vmatprep.subr.bf16.mxu0 0
        %4301 = vmatpush1.bf16.msra.mxu0 %v4280
        %4302 = vmatprep.subr.bf16.mxu0 0
        %4303 = vmatpush1.bf16.msra.mxu0 %v4281
        %4304 = vmatprep.subr.bf16.mxu0 0
        %4305 = vmatpush1.bf16.msra.mxu0 %v4282
        %4306 = vmatprep.subr.bf16.mxu0 0
        %4307 = vmatpush1.bf16.msra.mxu0 %v4283
        %4308 = vmatprep.subr.bf16.mxu0 0
        %4309 = vmatpush1.bf16.msra.mxu0 0
        %4310 = vmatprep.subr.bf16.mxu0 0
        %4311 = vmatpush1.bf16.msra.mxu0 0
        %4312 = vmatprep.subr.bf16.mxu0 0
        %4313 = vmatpush1.bf16.msra.mxu0 0
        %4314 = vmatprep.subr.bf16.mxu0 0
        %4315 = vmatpush1.bf16.msra.mxu0 0
        %4316 = vmatprep.subr.bf16.mxu0 0
        %4317 = vmatpush1.bf16.msra.mxu0 0
        %4318 = vmatprep.subr.bf16.mxu0 0
        %4319 = vmatpush1.bf16.msra.mxu0 0
        %4320 = vmatprep.subr.bf16.mxu0 0
        %4321 = vmatpush1.bf16.msra.mxu0 0
        %4322 = vmatprep.subr.bf16.mxu0 0
        %4323 = vmatpush1.bf16.msra.mxu0 0
        %4324 = vmatprep.mubr.bf16.mxu0 0
        %4325 = vmatmul.mubr.bf16.gmra.mrb[0].mxu0 %v4236
        %v4326 = vpop.f32.mrb[0].mxu0
        %v4327 = vadd.f32 %v4242, %v4326
        %v4328 = vpop.f32.mrb[0].mxu0
        %v4329 = vpop.f32.mrb[0].mxu0
        %v4330 = vadd.f32 %v4242, %v4329
        %v4331 = vpop.f32.mrb[0].mxu0
        %4332 = vmatprep.mubr.bf16.mxu0 0
        %4333 = vmatmul.mubr.bf16.gmra.mrb[0].mxu0 %v4237
        %v4334 = vpop.f32.mrb[0].mxu0
        %v4335 = vadd.f32 %v4242, %v4334
        %v4336 = vpop.f32.mrb[0].mxu0
        %v4337 = vpop.f32.mrb[0].mxu0
        %v4338 = vadd.f32 %v4242, %v4337
        %v4339 = vpop.f32.mrb[0].mxu0
        %4340 = vdwg.mxu0
        %v4341 = vmul.f32 %v4327, 0.01
        %v4342 = vmul.f32 %v4330, 0.01
        %v4343 = vmul.f32 %v4335, 0.01
        %v4344 = vmul.f32 %v4338, 0.01
        %v4345 = vmax.f32 %v4327, %v4341
        %v4346 = vmax.f32 %v4330, %v4342
        %v4347 = vmax.f32 %v4335, %v4343
        %v4348 = vmax.f32 %v4338, %v4344
        %v4349 = vpack.c.bf16 %v4346, %v4345
        %v4350 = vpack.c.bf16 %v4348, %v4347
        %v4352 = vlaneseq
        %v4353 = vshrl.u32 %v4352, 7
        %v4354 = vsub.s32 0, %v4353
        %v4355 = vrot.slane %v4056, %v4354
        %v4373 = vunpack.c.l.b16 %v4039
        %v4374 = vunpack.c.l.b16 %v4040
        %v4375 = vunpack.c.l.b16 %v4041
        %v4376 = vunpack.c.l.b16 %v4042
        %v4377 = vunpack.c.l.b16 %v4043
        %v4378 = vunpack.c.l.b16 %v4044
        %v4379 = vunpack.c.l.b16 %v4045
        %v4380 = vunpack.c.l.b16 %v4046
        %v4381 = vunpack.c.l.b16 %v4047
        %v4382 = vunpack.c.l.b16 %v4048
        %v4383 = vunpack.c.l.b16 %v4049
        %v4384 = vunpack.c.l.b16 %v4050
        %v4385 = vunpack.c.l.b16 %v4051
        %v4386 = vunpack.c.l.b16 %v4052
        %v4387 = vunpack.c.l.b16 %v4053
        %v4388 = vunpack.c.l.b16 %v4054
        %v4389 = vpack.c.b16 %v4374, %v4373
        %v4390 = vpack.c.b16 %v4376, %v4375
        %v4391 = vpack.c.b16 %v4378, %v4377
        %v4392 = vpack.c.b16 %v4380, %v4379
        %v4393 = vpack.c.b16 %v4382, %v4381
        %v4394 = vpack.c.b16 %v4384, %v4383
        %v4395 = vpack.c.b16 %v4386, %v4385
        %v4396 = vpack.c.b16 %v4388, %v4387
        %4405 = vmatprep.subr.bf16.mxu0 0
        %4406 = vmatpush1.bf16.msra.mxu0 %v4389
        %4407 = vmatprep.subr.bf16.mxu0 0
        %4408 = vmatpush1.bf16.msra.mxu0 %v4390
        %4409 = vmatprep.subr.bf16.mxu0 0
        %4410 = vmatpush1.bf16.msra.mxu0 %v4391
        %4411 = vmatprep.subr.bf16.mxu0 0
        %4412 = vmatpush1.bf16.msra.mxu0 %v4392
        %4413 = vmatprep.subr.bf16.mxu0 0
        %4414 = vmatpush1.bf16.msra.mxu0 %v4393
        %4415 = vmatprep.subr.bf16.mxu0 0
        %4416 = vmatpush1.bf16.msra.mxu0 %v4394
        %4417 = vmatprep.subr.bf16.mxu0 0
        %4418 = vmatpush1.bf16.msra.mxu0 %v4395
        %4419 = vmatprep.subr.bf16.mxu0 0
        %4420 = vmatpush1.bf16.msra.mxu0 %v4396
        %4421 = vmatprep.subr.bf16.mxu0 0
        %4422 = vmatpush1.bf16.msra.mxu0 0
        %4423 = vmatprep.subr.bf16.mxu0 0
        %4424 = vmatpush1.bf16.msra.mxu0 0
        %4425 = vmatprep.subr.bf16.mxu0 0
        %4426 = vmatpush1.bf16.msra.mxu0 0
        %4427 = vmatprep.subr.bf16.mxu0 0
        %4428 = vmatpush1.bf16.msra.mxu0 0
        %4429 = vmatprep.subr.bf16.mxu0 0
        %4430 = vmatpush1.bf16.msra.mxu0 0
        %4431 = vmatprep.subr.bf16.mxu0 0
        %4432 = vmatpush1.bf16.msra.mxu0 0
        %4433 = vmatprep.subr.bf16.mxu0 0
        %4434 = vmatpush1.bf16.msra.mxu0 0
        %4435 = vmatprep.subr.bf16.mxu0 0
        %4436 = vmatpush1.bf16.msra.mxu0 0
        %4437 = vmatprep.mubr.bf16.mxu0 0
        %4438 = vmatmul.mubr.bf16.gmra.mrb[0].mxu0 %v4349
        %v4439 = vpop.f32.mrb[0].mxu0
        %v4440 = vadd.f32 %v4355, %v4439
        %v4441 = vpop.f32.mrb[0].mxu0
        %v4442 = vpop.f32.mrb[0].mxu0
        %v4443 = vadd.f32 %v4355, %v4442
        %v4444 = vpop.f32.mrb[0].mxu0
        %4445 = vmatprep.mubr.bf16.mxu0 0
        %4446 = vmatmul.mubr.bf16.gmra.mrb[0].mxu0 %v4350
        %v4447 = vpop.f32.mrb[0].mxu0
        %v4448 = vadd.f32 %v4355, %v4447
        %v4449 = vpop.f32.mrb[0].mxu0
        %v4450 = vpop.f32.mrb[0].mxu0
        %v4451 = vadd.f32 %v4355, %v4450
        %v4452 = vpop.f32.mrb[0].mxu0
        %4453 = vdwg.mxu0
        %v4454 = vtanh.pop %v4440
        %v4455 = vtanh.pop %v4443
        %v4456 = vtanh.pop %v4448
        %v4457 = vtanh.pop %v4451
        %v4458 = vmul.f32 %v4454, 1.442695
        %v4459 = vpow.pop %v4458
        %v4460 = vmul.f32 %v4455, 1.442695
        %v4461 = vpow.pop %v4460
        %v4462 = vmul.f32 %v4456, 1.442695
        %v4463 = vpow.pop %v4462
        %v4464 = vmul.f32 %v4457, 1.442695
        %v4465 = vpow.pop %v4464
        %v4466 = vmul.f32 %v4459, 0.75
        %v4467 = vmul.f32 %v4461, 0.75
        %v4468 = vmul.f32 %v4463, 0.75
        %v4469 = vmul.f32 %v4465, 0.75
        %v4470 = vmul.f32 %v4466, %v1572
        %v4471 = vmul.f32 %v4467, %v1573
        %v4472 = vmul.f32 %v4468, %v1574
        %v4473 = vmul.f32 %v4469, %v1575
        %v4474 = vadd.f32 %v3994, %v4470
        %v4475 = vadd.f32 %v3995, %v4471
        %v4476 = vadd.f32 %v3996, %v4472
        %v4477 = vadd.f32 %v3997, %v4473
        %4482 = vrot.lane.b32.xlu0 %v3048, 120
        %v4483 = vpop.permute.xlu0 %4482
        %4484 = vrot.lane.b32.xlu0 %v3049, 120
        %v4485 = vpop.permute.xlu0 %4484
        %4486 = vrot.lane.b32.xlu0 %v3050, 120
        %v4487 = vpop.permute.xlu0 %4486
        %4488 = vrot.lane.b32.xlu0 %v3051, 120
        %v4489 = vpop.permute.xlu0 %4488
        %4498 = vrot.lane.b32.xlu0 %v4474, 8
        %v4499 = vpop.permute.xlu0 %4498
        %4500 = vrot.lane.b32.xlu0 %v4475, 8
        %v4501 = vpop.permute.xlu0 %4500
        %4502 = vrot.lane.b32.xlu0 %v4476, 8
        %v4503 = vpop.permute.xlu0 %4502
        %4504 = vrot.lane.b32.xlu0 %v4477, 8
        %v4505 = vpop.permute.xlu0 %4504
        %v4510 = vsel %vm1635, %v4483, %v4499
        %v4511 = vsel %vm1635, %v4485, %v4501
        %v4512 = vsel %vm1635, %v4487, %v4503
        %v4513 = vsel %vm1635, %v4489, %v4505
        %4514 = vrot.lane.b32.xlu0 %v1572, 8
        %v4515 = vpop.permute.xlu0 %4514
        %4516 = vrot.lane.b32.xlu0 %v1573, 8
        %v4517 = vpop.permute.xlu0 %4516
        %4518 = vrot.lane.b32.xlu0 %v1574, 8
        %v4519 = vpop.permute.xlu0 %4518
        %4520 = vrot.lane.b32.xlu0 %v1575, 8
        %v4521 = vpop.permute.xlu0 %4520
        %v4526 = vsel %vm1635, %v3017, %v4515
        %v4527 = vsel %vm1635, %v3019, %v4517
        %v4528 = vsel %vm1635, %v3021, %v4519
        %v4529 = vsel %vm1635, %v3023, %v4521
        %s4530 = scalar_lea.vmem %s8, 24
        %v4531 = vld [vmem:[%s4530] sm:$0xf]
        %v4532 = vld [vmem:[%s4530 + $0x4] sm:$0xf]
        %s4533 = scalar_lea.vmem %s9, 3
        %v4534 = vld [vmem:[%s4533] sm:$0x1]
        %s4535 = scalar_lea.vmem [#allocation7], 384
        %v4536 = vld [vmem:[%s4535] sm:$0xf]
        %v4537 = vld [vmem:[%s4535 + $0x4] sm:$0xf]
        %v4538 = vld [vmem:[%s4535 + $0x8] sm:$0xf]
        %v4539 = vld [vmem:[%s4535 + $0xc] sm:$0xf]
        %v4540 = vld [vmem:[%s4535 + $0x10] sm:$0xf]
        %v4541 = vld [vmem:[%s4535 + $0x14] sm:$0xf]
        %v4542 = vld [vmem:[%s4535 + $0x18] sm:$0xf]
        %v4543 = vld [vmem:[%s4535 + $0x1c] sm:$0xf]
        %v4544 = vld [vmem:[%s4535 + $0x20] sm:$0xf]
        %v4545 = vld [vmem:[%s4535 + $0x24] sm:$0xf]
        %v4546 = vld [vmem:[%s4535 + $0x28] sm:$0xf]
        %v4547 = vld [vmem:[%s4535 + $0x2c] sm:$0xf]
        %v4548 = vld [vmem:[%s4535 + $0x30] sm:$0xf]
        %v4549 = vld [vmem:[%s4535 + $0x34] sm:$0xf]
        %v4550 = vld [vmem:[%s4535 + $0x38] sm:$0xf]
        %v4551 = vld [vmem:[%s4535 + $0x3c] sm:$0xf]
        %v4552 = vld [vmem:[%s4535 + $0x40] sm:$0xf]
        %v4553 = vld [vmem:[%s4535 + $0x44] sm:$0xf]
        %v4554 = vld [vmem:[%s4535 + $0x48] sm:$0xf]
        %v4555 = vld [vmem:[%s4535 + $0x4c] sm:$0xf]
        %v4556 = vld [vmem:[%s4535 + $0x50] sm:$0xf]
        %v4557 = vld [vmem:[%s4535 + $0x54] sm:$0xf]
        %v4558 = vld [vmem:[%s4535 + $0x58] sm:$0xf]
        %v4559 = vld [vmem:[%s4535 + $0x5c] sm:$0xf]
        %v4560 = vld [vmem:[%s4535 + $0x60] sm:$0xf]
        %v4561 = vld [vmem:[%s4535 + $0x64] sm:$0xf]
        %v4562 = vld [vmem:[%s4535 + $0x68] sm:$0xf]
        %v4563 = vld [vmem:[%s4535 + $0x6c] sm:$0xf]
        %v4564 = vld [vmem:[%s4535 + $0x70] sm:$0xf]
        %v4565 = vld [vmem:[%s4535 + $0x74] sm:$0xf]
        %v4566 = vld [vmem:[%s4535 + $0x78] sm:$0xf]
        %v4567 = vld [vmem:[%s4535 + $0x7c] sm:$0xf]
        %s4568 = scalar_lea.vmem %s11, 6
        %v4569 = vld [vmem:[%s4568] sm:$0x1]
        %v4570 = vld [vmem:[%s4568 + $0x1] sm:$0x1]
        %s4571 = scalar_lea.vmem %s12, 192
        %v4572 = vld [vmem:[%s4571] sm:$0xf]
        %v4573 = vld [vmem:[%s4571 + $0x4] sm:$0xf]
        %v4574 = vld [vmem:[%s4571 + $0x8] sm:$0xf]
        %v4575 = vld [vmem:[%s4571 + $0xc] sm:$0xf]
        %v4576 = vld [vmem:[%s4571 + $0x10] sm:$0xf]
        %v4577 = vld [vmem:[%s4571 + $0x14] sm:$0xf]
        %v4578 = vld [vmem:[%s4571 + $0x18] sm:$0xf]
        %v4579 = vld [vmem:[%s4571 + $0x1c] sm:$0xf]
        %v4580 = vld [vmem:[%s4571 + $0x20] sm:$0xf]
        %v4581 = vld [vmem:[%s4571 + $0x24] sm:$0xf]
        %v4582 = vld [vmem:[%s4571 + $0x28] sm:$0xf]
        %v4583 = vld [vmem:[%s4571 + $0x2c] sm:$0xf]
        %v4584 = vld [vmem:[%s4571 + $0x30] sm:$0xf]
        %v4585 = vld [vmem:[%s4571 + $0x34] sm:$0xf]
        %v4586 = vld [vmem:[%s4571 + $0x38] sm:$0xf]
        %v4587 = vld [vmem:[%s4571 + $0x3c] sm:$0xf]
        %s4588 = scalar_lea.vmem %s13, 3
        %v4589 = vld [vmem:[%s4588] sm:$0x1]
        %v4590 = vpack.c.bf16 %v4511, %v4510
        %v4591 = vpack.c.bf16 %v4513, %v4512
        %v4593 = vlaneseq
        %v4594 = vshrl.u32 %v4593, 7
        %v4595 = vsub.s32 0, %v4594
        %v4596 = vrot.slane %v4534, %v4595
        %v4600 = vunpack.c.l.b16 %v4531
        %v4601 = vunpack.c.l.b16 %v4532
        %v4602 = vpack.c.b16 %v4601, %v4600
        %v4605 = vsel %vm699, %v4590, 0
        %v4608 = vsel %vm699, %v4591, 0
        %4610 = vmatprep.subr.bf16.mxu0 0
        %4611 = vmatpush1.bf16.msra.mxu0 %v4602
        %4612 = vmatprep.subr.bf16.mxu0 0
        %4613 = vmatpush1.bf16.msra.mxu0 0
        %4614 = vmatprep.subr.bf16.mxu0 0
        %4615 = vmatpush1.bf16.msra.mxu0 0
        %4616 = vmatprep.subr.bf16.mxu0 0
        %4617 = vmatpush1.bf16.msra.mxu0 0
        %4618 = vmatprep.subr.bf16.mxu0 0
        %4619 = vmatpush1.bf16.msra.mxu0 0
        %4620 = vmatprep.subr.bf16.mxu0 0
        %4621 = vmatpush1.bf16.msra.mxu0 0
        %4622 = vmatprep.subr.bf16.mxu0 0
        %4623 = vmatpush1.bf16.msra.mxu0 0
        %4624 = vmatprep.subr.bf16.mxu0 0
        %4625 = vmatpush1.bf16.msra.mxu0 0
        %4626 = vmatprep.subr.bf16.mxu0 0
        %4627 = vmatpush1.bf16.msra.mxu0 0
        %4628 = vmatprep.subr.bf16.mxu0 0
        %4629 = vmatpush1.bf16.msra.mxu0 0
        %4630 = vmatprep.subr.bf16.mxu0 0
        %4631 = vmatpush1.bf16.msra.mxu0 0
        %4632 = vmatprep.subr.bf16.mxu0 0
        %4633 = vmatpush1.bf16.msra.mxu0 0
        %4634 = vmatprep.subr.bf16.mxu0 0
        %4635 = vmatpush1.bf16.msra.mxu0 0
        %4636 = vmatprep.subr.bf16.mxu0 0
        %4637 = vmatpush1.bf16.msra.mxu0 0
        %4638 = vmatprep.subr.bf16.mxu0 0
        %4639 = vmatpush1.bf16.msra.mxu0 0
        %4640 = vmatprep.subr.bf16.mxu0 0
        %4641 = vmatpush1.bf16.msra.mxu0 0
        %4642 = vmatprep.mubr.bf16.mxu0 0
        %4643 = vmatmul.mubr.bf16.gmra.mrb[0].mxu0 %v4605
        %v4644 = vpop.f32.mrb[0].mxu0
        %v4645 = vadd.f32 %v4596, %v4644
        %v4646 = vpop.f32.mrb[0].mxu0
        %v4647 = vpop.f32.mrb[0].mxu0
        %v4648 = vadd.f32 %v4596, %v4647
        %v4649 = vpop.f32.mrb[0].mxu0
        %4650 = vmatprep.mubr.bf16.mxu0 0
        %4651 = vmatmul.mubr.bf16.gmra.mrb[0].mxu0 %v4608
        %v4652 = vpop.f32.mrb[0].mxu0
        %v4653 = vadd.f32 %v4596, %v4652
        %v4654 = vpop.f32.mrb[0].mxu0
        %v4655 = vpop.f32.mrb[0].mxu0
        %v4656 = vadd.f32 %v4596, %v4655
        %v4657 = vpop.f32.mrb[0].mxu0
        %4658 = vdwg.mxu0
        %v4659 = vmul.f32 %v4645, 0.01
        %v4660 = vmul.f32 %v4648, 0.01
        %v4661 = vmul.f32 %v4653, 0.01
        %v4662 = vmul.f32 %v4656, 0.01
        %v4663 = vmax.f32 %v4645, %v4659
        %v4664 = vmax.f32 %v4648, %v4660
        %v4665 = vmax.f32 %v4653, %v4661
        %v4666 = vmax.f32 %v4656, %v4662
        %v4667 = vpack.c.bf16 %v4664, %v4663
        %v4668 = vpack.c.bf16 %v4666, %v4665
        %v4670 = vlaneseq
        %v4671 = vshrl.u32 %v4670, 7
        %v4672 = vsub.s32 0, %v4671
        %v4673 = vrot.slane %v4569, %v4672
        %v4691 = vunpack.c.l.b16 %v4536
        %v4692 = vunpack.c.l.b16 %v4537
        %v4693 = vunpack.c.l.b16 %v4538
        %v4694 = vunpack.c.l.b16 %v4539
        %v4695 = vunpack.c.l.b16 %v4540
        %v4696 = vunpack.c.l.b16 %v4541
        %v4697 = vunpack.c.l.b16 %v4542
        %v4698 = vunpack.c.l.b16 %v4543
        %v4699 = vunpack.c.l.b16 %v4544
        %v4700 = vunpack.c.l.b16 %v4545
        %v4701 = vunpack.c.l.b16 %v4546
        %v4702 = vunpack.c.l.b16 %v4547
        %v4703 = vunpack.c.l.b16 %v4548
        %v4704 = vunpack.c.l.b16 %v4549
        %v4705 = vunpack.c.l.b16 %v4550
        %v4706 = vunpack.c.l.b16 %v4551
        %v4707 = vpack.c.b16 %v4692, %v4691
        %v4708 = vpack.c.b16 %v4694, %v4693
        %v4709 = vpack.c.b16 %v4696, %v4695
        %v4710 = vpack.c.b16 %v4698, %v4697
        %v4711 = vpack.c.b16 %v4700, %v4699
        %v4712 = vpack.c.b16 %v4702, %v4701
        %v4713 = vpack.c.b16 %v4704, %v4703
        %v4714 = vpack.c.b16 %v4706, %v4705
        %4723 = vmatprep.subr.bf16.mxu0 0
        %4724 = vmatpush1.bf16.msra.mxu0 %v4707
        %4725 = vmatprep.subr.bf16.mxu0 0
        %4726 = vmatpush1.bf16.msra.mxu0 %v4708
        %4727 = vmatprep.subr.bf16.mxu0 0
        %4728 = vmatpush1.bf16.msra.mxu0 %v4709
        %4729 = vmatprep.subr.bf16.mxu0 0
        %4730 = vmatpush1.bf16.msra.mxu0 %v4710
        %4731 = vmatprep.subr.bf16.mxu0 0
        %4732 = vmatpush1.bf16.msra.mxu0 %v4711
        %4733 = vmatprep.subr.bf16.mxu0 0
        %4734 = vmatpush1.bf16.msra.mxu0 %v4712
        %4735 = vmatprep.subr.bf16.mxu0 0
        %4736 = vmatpush1.bf16.msra.mxu0 %v4713
        %4737 = vmatprep.subr.bf16.mxu0 0
        %4738 = vmatpush1.bf16.msra.mxu0 %v4714
        %4739 = vmatprep.subr.bf16.mxu0 0
        %4740 = vmatpush1.bf16.msra.mxu0 0
        %4741 = vmatprep.subr.bf16.mxu0 0
        %4742 = vmatpush1.bf16.msra.mxu0 0
        %4743 = vmatprep.subr.bf16.mxu0 0
        %4744 = vmatpush1.bf16.msra.mxu0 0
        %4745 = vmatprep.subr.bf16.mxu0 0
        %4746 = vmatpush1.bf16.msra.mxu0 0
        %4747 = vmatprep.subr.bf16.mxu0 0
        %4748 = vmatpush1.bf16.msra.mxu0 0
        %4749 = vmatprep.subr.bf16.mxu0 0
        %4750 = vmatpush1.bf16.msra.mxu0 0
        %4751 = vmatprep.subr.bf16.mxu0 0
        %4752 = vmatpush1.bf16.msra.mxu0 0
        %4753 = vmatprep.subr.bf16.mxu0 0
        %4754 = vmatpush1.bf16.msra.mxu0 0
        %4755 = vmatprep.mubr.bf16.mxu0 0
        %4756 = vmatmul.mubr.bf16.gmra.mrb[0].mxu0 %v4667
        %v4757 = vpop.f32.mrb[0].mxu0
        %v4758 = vadd.f32 %v4673, %v4757
        %v4759 = vpop.f32.mrb[0].mxu0
        %v4760 = vpop.f32.mrb[0].mxu0
        %v4761 = vadd.f32 %v4673, %v4760
        %v4762 = vpop.f32.mrb[0].mxu0
        %4763 = vmatprep.mubr.bf16.mxu0 0
        %4764 = vmatmul.mubr.bf16.gmra.mrb[0].mxu0 %v4668
        %v4765 = vpop.f32.mrb[0].mxu0
        %v4766 = vadd.f32 %v4673, %v4765
        %v4767 = vpop.f32.mrb[0].mxu0
        %v4768 = vpop.f32.mrb[0].mxu0
        %v4769 = vadd.f32 %v4673, %v4768
        %v4770 = vpop.f32.mrb[0].mxu0
        %4771 = vdwg.mxu0
        %v4772 = vmul.f32 %v4758, 0.01
        %v4773 = vmul.f32 %v4761, 0.01
        %v4774 = vmul.f32 %v4766, 0.01
        %v4775 = vmul.f32 %v4769, 0.01
        %v4776 = vmax.f32 %v4758, %v4772
        %v4777 = vmax.f32 %v4761, %v4773
        %v4778 = vmax.f32 %v4766, %v4774
        %v4779 = vmax.f32 %v4769, %v4775
        %v4780 = vpack.c.bf16 %v4777, %v4776
        %v4781 = vpack.c.bf16 %v4779, %v4778
        %v4783 = vlaneseq
        %v4784 = vshrl.u32 %v4783, 7
        %v4785 = vsub.s32 0, %v4784
        %v4786 = vrot.slane %v4570, %v4785
        %v4804 = vunpack.c.l.b16 %v4552
        %v4805 = vunpack.c.l.b16 %v4553
        %v4806 = vunpack.c.l.b16 %v4554
        %v4807 = vunpack.c.l.b16 %v4555
        %v4808 = vunpack.c.l.b16 %v4556
        %v4809 = vunpack.c.l.b16 %v4557
        %v4810 = vunpack.c.l.b16 %v4558
        %v4811 = vunpack.c.l.b16 %v4559
        %v4812 = vunpack.c.l.b16 %v4560
        %v4813 = vunpack.c.l.b16 %v4561
        %v4814 = vunpack.c.l.b16 %v4562
        %v4815 = vunpack.c.l.b16 %v4563
        %v4816 = vunpack.c.l.b16 %v4564
        %v4817 = vunpack.c.l.b16 %v4565
        %v4818 = vunpack.c.l.b16 %v4566
        %v4819 = vunpack.c.l.b16 %v4567
        %v4820 = vpack.c.b16 %v4805, %v4804
        %v4821 = vpack.c.b16 %v4807, %v4806
        %v4822 = vpack.c.b16 %v4809, %v4808
        %v4823 = vpack.c.b16 %v4811, %v4810
        %v4824 = vpack.c.b16 %v4813, %v4812
        %v4825 = vpack.c.b16 %v4815, %v4814
        %v4826 = vpack.c.b16 %v4817, %v4816
        %v4827 = vpack.c.b16 %v4819, %v4818
        %4836 = vmatprep.subr.bf16.mxu0 0
        %4837 = vmatpush1.bf16.msra.mxu0 %v4820
        %4838 = vmatprep.subr.bf16.mxu0 0
        %4839 = vmatpush1.bf16.msra.mxu0 %v4821
        %4840 = vmatprep.subr.bf16.mxu0 0
        %4841 = vmatpush1.bf16.msra.mxu0 %v4822
        %4842 = vmatprep.subr.bf16.mxu0 0
        %4843 = vmatpush1.bf16.msra.mxu0 %v4823
        %4844 = vmatprep.subr.bf16.mxu0 0
        %4845 = vmatpush1.bf16.msra.mxu0 %v4824
        %4846 = vmatprep.subr.bf16.mxu0 0
        %4847 = vmatpush1.bf16.msra.mxu0 %v4825
        %4848 = vmatprep.subr.bf16.mxu0 0
        %4849 = vmatpush1.bf16.msra.mxu0 %v4826
        %4850 = vmatprep.subr.bf16.mxu0 0
        %4851 = vmatpush1.bf16.msra.mxu0 %v4827
        %4852 = vmatprep.subr.bf16.mxu0 0
        %4853 = vmatpush1.bf16.msra.mxu0 0
        %4854 = vmatprep.subr.bf16.mxu0 0
        %4855 = vmatpush1.bf16.msra.mxu0 0
        %4856 = vmatprep.subr.bf16.mxu0 0
        %4857 = vmatpush1.bf16.msra.mxu0 0
        %4858 = vmatprep.subr.bf16.mxu0 0
        %4859 = vmatpush1.bf16.msra.mxu0 0
        %4860 = vmatprep.subr.bf16.mxu0 0
        %4861 = vmatpush1.bf16.msra.mxu0 0
        %4862 = vmatprep.subr.bf16.mxu0 0
        %4863 = vmatpush1.bf16.msra.mxu0 0
        %4864 = vmatprep.subr.bf16.mxu0 0
        %4865 = vmatpush1.bf16.msra.mxu0 0
        %4866 = vmatprep.subr.bf16.mxu0 0
        %4867 = vmatpush1.bf16.msra.mxu0 0
        %4868 = vmatprep.mubr.bf16.mxu0 0
        %4869 = vmatmul.mubr.bf16.gmra.mrb[0].mxu0 %v4780
        %v4870 = vpop.f32.mrb[0].mxu0
        %v4871 = vadd.f32 %v4786, %v4870
        %v4872 = vpop.f32.mrb[0].mxu0
        %v4873 = vpop.f32.mrb[0].mxu0
        %v4874 = vadd.f32 %v4786, %v4873
        %v4875 = vpop.f32.mrb[0].mxu0
        %4876 = vmatprep.mubr.bf16.mxu0 0
        %4877 = vmatmul.mubr.bf16.gmra.mrb[0].mxu0 %v4781
        %v4878 = vpop.f32.mrb[0].mxu0
        %v4879 = vadd.f32 %v4786, %v4878
        %v4880 = vpop.f32.mrb[0].mxu0
        %v4881 = vpop.f32.mrb[0].mxu0
        %v4882 = vadd.f32 %v4786, %v4881
        %v4883 = vpop.f32.mrb[0].mxu0
        %4884 = vdwg.mxu0
        %v4885 = vmul.f32 %v4871, 0.01
        %v4886 = vmul.f32 %v4874, 0.01
        %v4887 = vmul.f32 %v4879, 0.01
        %v4888 = vmul.f32 %v4882, 0.01
        %v4889 = vmax.f32 %v4871, %v4885
        %v4890 = vmax.f32 %v4874, %v4886
        %v4891 = vmax.f32 %v4879, %v4887
        %v4892 = vmax.f32 %v4882, %v4888
        %v4893 = vpack.c.bf16 %v4890, %v4889
        %v4894 = vpack.c.bf16 %v4892, %v4891
        %v4896 = vlaneseq
        %v4897 = vshrl.u32 %v4896, 7
        %v4898 = vsub.s32 0, %v4897
        %v4899 = vrot.slane %v4589, %v4898
        %v4917 = vunpack.c.l.b16 %v4572
        %v4918 = vunpack.c.l.b16 %v4573
        %v4919 = vunpack.c.l.b16 %v4574
        %v4920 = vunpack.c.l.b16 %v4575
        %v4921 = vunpack.c.l.b16 %v4576
        %v4922 = vunpack.c.l.b16 %v4577
        %v4923 = vunpack.c.l.b16 %v4578
        %v4924 = vunpack.c.l.b16 %v4579
        %v4925 = vunpack.c.l.b16 %v4580
        %v4926 = vunpack.c.l.b16 %v4581
        %v4927 = vunpack.c.l.b16 %v4582
        %v4928 = vunpack.c.l.b16 %v4583
        %v4929 = vunpack.c.l.b16 %v4584
        %v4930 = vunpack.c.l.b16 %v4585
        %v4931 = vunpack.c.l.b16 %v4586
        %v4932 = vunpack.c.l.b16 %v4587
        %v4933 = vpack.c.b16 %v4918, %v4917
        %v4934 = vpack.c.b16 %v4920, %v4919
        %v4935 = vpack.c.b16 %v4922, %v4921
        %v4936 = vpack.c.b16 %v4924, %v4923
        %v4937 = vpack.c.b16 %v4926, %v4925
        %v4938 = vpack.c.b16 %v4928, %v4927
        %v4939 = vpack.c.b16 %v4930, %v4929
        %v4940 = vpack.c.b16 %v4932, %v4931
        %4949 = vmatprep.subr.bf16.mxu0 0
        %4950 = vmatpush1.bf16.msra.mxu0 %v4933
        %4951 = vmatprep.subr.bf16.mxu0 0
        %4952 = vmatpush1.bf16.msra.mxu0 %v4934
        %4953 = vmatprep.subr.bf16.mxu0 0
        %4954 = vmatpush1.bf16.msra.mxu0 %v4935
        %4955 = vmatprep.subr.bf16.mxu0 0
        %4956 = vmatpush1.bf16.msra.mxu0 %v4936
        %4957 = vmatprep.subr.bf16.mxu0 0
        %4958 = vmatpush1.bf16.msra.mxu0 %v4937
        %4959 = vmatprep.subr.bf16.mxu0 0
        %4960 = vmatpush1.bf16.msra.mxu0 %v4938
        %4961 = vmatprep.subr.bf16.mxu0 0
        %4962 = vmatpush1.bf16.msra.mxu0 %v4939
        %4963 = vmatprep.subr.bf16.mxu0 0
        %4964 = vmatpush1.bf16.msra.mxu0 %v4940
        %4965 = vmatprep.subr.bf16.mxu0 0
        %4966 = vmatpush1.bf16.msra.mxu0 0
        %4967 = vmatprep.subr.bf16.mxu0 0
        %4968 = vmatpush1.bf16.msra.mxu0 0
        %4969 = vmatprep.subr.bf16.mxu0 0
        %4970 = vmatpush1.bf16.msra.mxu0 0
        %4971 = vmatprep.subr.bf16.mxu0 0
        %4972 = vmatpush1.bf16.msra.mxu0 0
        %4973 = vmatprep.subr.bf16.mxu0 0
        %4974 = vmatpush1.bf16.msra.mxu0 0
        %4975 = vmatprep.subr.bf16.mxu0 0
        %4976 = vmatpush1.bf16.msra.mxu0 0
        %4977 = vmatprep.subr.bf16.mxu0 0
        %4978 = vmatpush1.bf16.msra.mxu0 0
        %4979 = vmatprep.subr.bf16.mxu0 0
        %4980 = vmatpush1.bf16.msra.mxu0 0
        %4981 = vmatprep.mubr.bf16.mxu0 0
        %4982 = vmatmul.mubr.bf16.gmra.mrb[0].mxu0 %v4893
        %v4983 = vpop.f32.mrb[0].mxu0
        %v4984 = vadd.f32 %v4899, %v4983
        %v4985 = vpop.f32.mrb[0].mxu0
        %v4986 = vpop.f32.mrb[0].mxu0
        %v4987 = vadd.f32 %v4899, %v4986
        %v4988 = vpop.f32.mrb[0].mxu0
        %4989 = vmatprep.mubr.bf16.mxu0 0
        %4990 = vmatmul.mubr.bf16.gmra.mrb[0].mxu0 %v4894
        %v4991 = vpop.f32.mrb[0].mxu0
        %v4992 = vadd.f32 %v4899, %v4991
        %v4993 = vpop.f32.mrb[0].mxu0
        %v4994 = vpop.f32.mrb[0].mxu0
        %v4995 = vadd.f32 %v4899, %v4994
        %v4996 = vpop.f32.mrb[0].mxu0
        %4997 = vdwg.mxu0
        %v4998 = vtanh.pop %v4984
        %v4999 = vtanh.pop %v4987
        %v5000 = vtanh.pop %v4992
        %v5001 = vtanh.pop %v4995
        %v5002 = vmul.f32 %v4998, 0.5
        %v5003 = vmul.f32 %v4999, 0.5
        %v5004 = vmul.f32 %v5000, 0.5
        %v5005 = vmul.f32 %v5001, 0.5
        %v5006 = vmul.f32 %v5002, 1.442695
        %v5007 = vpow.pop %v5006
        %v5008 = vmul.f32 %v5003, 1.442695
        %v5009 = vpow.pop %v5008
        %v5010 = vmul.f32 %v5004, 1.442695
        %v5011 = vpow.pop %v5010
        %v5012 = vmul.f32 %v5005, 1.442695
        %v5013 = vpow.pop %v5012
        %v5014 = vmul.f32 %v4526, %v5007
        %v5015 = vmul.f32 %v4527, %v5009
        %v5016 = vmul.f32 %v4528, %v5011
        %v5017 = vmul.f32 %v4529, %v5013
        %s5018 = scalar_lea.vmem %s8, 8
        %v5019 = vld [vmem:[%s5018] sm:$0xf]
        %v5020 = vld [vmem:[%s5018 + $0x4] sm:$0xf]
        %s5021 = scalar_lea.vmem %s9, 1
        %v5022 = vld [vmem:[%s5021] sm:$0x1]
        %s5023 = scalar_lea.vmem [#allocation7], 128
        %v5024 = vld [vmem:[%s5023] sm:$0xf]
        %v5025 = vld [vmem:[%s5023 + $0x4] sm:$0xf]
        %v5026 = vld [vmem:[%s5023 + $0x8] sm:$0xf]
        %v5027 = vld [vmem:[%s5023 + $0xc] sm:$0xf]
        %v5028 = vld [vmem:[%s5023 + $0x10] sm:$0xf]
        %v5029 = vld [vmem:[%s5023 + $0x14] sm:$0xf]
        %v5030 = vld [vmem:[%s5023 + $0x18] sm:$0xf]
        %v5031 = vld [vmem:[%s5023 + $0x1c] sm:$0xf]
        %v5032 = vld [vmem:[%s5023 + $0x20] sm:$0xf]
        %v5033 = vld [vmem:[%s5023 + $0x24] sm:$0xf]
        %v5034 = vld [vmem:[%s5023 + $0x28] sm:$0xf]
        %v5035 = vld [vmem:[%s5023 + $0x2c] sm:$0xf]
        %v5036 = vld [vmem:[%s5023 + $0x30] sm:$0xf]
        %v5037 = vld [vmem:[%s5023 + $0x34] sm:$0xf]
        %v5038 = vld [vmem:[%s5023 + $0x38] sm:$0xf]
        %v5039 = vld [vmem:[%s5023 + $0x3c] sm:$0xf]
        %v5040 = vld [vmem:[%s5023 + $0x40] sm:$0xf]
        %v5041 = vld [vmem:[%s5023 + $0x44] sm:$0xf]
        %v5042 = vld [vmem:[%s5023 + $0x48] sm:$0xf]
        %v5043 = vld [vmem:[%s5023 + $0x4c] sm:$0xf]
        %v5044 = vld [vmem:[%s5023 + $0x50] sm:$0xf]
        %v5045 = vld [vmem:[%s5023 + $0x54] sm:$0xf]
        %v5046 = vld [vmem:[%s5023 + $0x58] sm:$0xf]
        %v5047 = vld [vmem:[%s5023 + $0x5c] sm:$0xf]
        %v5048 = vld [vmem:[%s5023 + $0x60] sm:$0xf]
        %v5049 = vld [vmem:[%s5023 + $0x64] sm:$0xf]
        %v5050 = vld [vmem:[%s5023 + $0x68] sm:$0xf]
        %v5051 = vld [vmem:[%s5023 + $0x6c] sm:$0xf]
        %v5052 = vld [vmem:[%s5023 + $0x70] sm:$0xf]
        %v5053 = vld [vmem:[%s5023 + $0x74] sm:$0xf]
        %v5054 = vld [vmem:[%s5023 + $0x78] sm:$0xf]
        %v5055 = vld [vmem:[%s5023 + $0x7c] sm:$0xf]
        %s5056 = scalar_lea.vmem %s11, 2
        %v5057 = vld [vmem:[%s5056] sm:$0x1]
        %v5058 = vld [vmem:[%s5056 + $0x1] sm:$0x1]
        %s5059 = scalar_lea.vmem %s12, 64
        %v5060 = vld [vmem:[%s5059] sm:$0xf]
        %v5061 = vld [vmem:[%s5059 + $0x4] sm:$0xf]
        %v5062 = vld [vmem:[%s5059 + $0x8] sm:$0xf]
        %v5063 = vld [vmem:[%s5059 + $0xc] sm:$0xf]
        %v5064 = vld [vmem:[%s5059 + $0x10] sm:$0xf]
        %v5065 = vld [vmem:[%s5059 + $0x14] sm:$0xf]
        %v5066 = vld [vmem:[%s5059 + $0x18] sm:$0xf]
        %v5067 = vld [vmem:[%s5059 + $0x1c] sm:$0xf]
        %v5068 = vld [vmem:[%s5059 + $0x20] sm:$0xf]
        %v5069 = vld [vmem:[%s5059 + $0x24] sm:$0xf]
        %v5070 = vld [vmem:[%s5059 + $0x28] sm:$0xf]
        %v5071 = vld [vmem:[%s5059 + $0x2c] sm:$0xf]
        %v5072 = vld [vmem:[%s5059 + $0x30] sm:$0xf]
        %v5073 = vld [vmem:[%s5059 + $0x34] sm:$0xf]
        %v5074 = vld [vmem:[%s5059 + $0x38] sm:$0xf]
        %v5075 = vld [vmem:[%s5059 + $0x3c] sm:$0xf]
        %s5076 = scalar_lea.vmem %s13, 1
        %v5077 = vld [vmem:[%s5076] sm:$0x1]
        %v5079 = vlaneseq
        %v5080 = vshrl.u32 %v5079, 7
        %v5081 = vsub.s32 0, %v5080
        %v5082 = vrot.slane %v5022, %v5081
        %v5086 = vunpack.c.l.b16 %v5019
        %v5087 = vunpack.c.l.b16 %v5020
        %v5088 = vpack.c.b16 %v5087, %v5086
        %5090 = vmatprep.subr.bf16.mxu0 0
        %5091 = vmatpush1.bf16.msra.mxu0 %v5088
        %5092 = vmatprep.subr.bf16.mxu0 0
        %5093 = vmatpush1.bf16.msra.mxu0 0
        %5094 = vmatprep.subr.bf16.mxu0 0
        %5095 = vmatpush1.bf16.msra.mxu0 0
        %5096 = vmatprep.subr.bf16.mxu0 0
        %5097 = vmatpush1.bf16.msra.mxu0 0
        %5098 = vmatprep.subr.bf16.mxu0 0
        %5099 = vmatpush1.bf16.msra.mxu0 0
        %5100 = vmatprep.subr.bf16.mxu0 0
        %5101 = vmatpush1.bf16.msra.mxu0 0
        %5102 = vmatprep.subr.bf16.mxu0 0
        %5103 = vmatpush1.bf16.msra.mxu0 0
        %5104 = vmatprep.subr.bf16.mxu0 0
        %5105 = vmatpush1.bf16.msra.mxu0 0
        %5106 = vmatprep.subr.bf16.mxu0 0
        %5107 = vmatpush1.bf16.msra.mxu0 0
        %5108 = vmatprep.subr.bf16.mxu0 0
        %5109 = vmatpush1.bf16.msra.mxu0 0
        %5110 = vmatprep.subr.bf16.mxu0 0
        %5111 = vmatpush1.bf16.msra.mxu0 0
        %5112 = vmatprep.subr.bf16.mxu0 0
        %5113 = vmatpush1.bf16.msra.mxu0 0
        %5114 = vmatprep.subr.bf16.mxu0 0
        %5115 = vmatpush1.bf16.msra.mxu0 0
        %5116 = vmatprep.subr.bf16.mxu0 0
        %5117 = vmatpush1.bf16.msra.mxu0 0
        %5118 = vmatprep.subr.bf16.mxu0 0
        %5119 = vmatpush1.bf16.msra.mxu0 0
        %5120 = vmatprep.subr.bf16.mxu0 0
        %5121 = vmatpush1.bf16.msra.mxu0 0
        %5122 = vmatprep.mubr.bf16.mxu0 0
        %5123 = vmatmul.mubr.bf16.gmra.mrb[0].mxu0 %v4605
        %v5124 = vpop.f32.mrb[0].mxu0
        %v5125 = vadd.f32 %v5082, %v5124
        %v5126 = vpop.f32.mrb[0].mxu0
        %v5127 = vpop.f32.mrb[0].mxu0
        %v5128 = vadd.f32 %v5082, %v5127
        %v5129 = vpop.f32.mrb[0].mxu0
        %5130 = vmatprep.mubr.bf16.mxu0 0
        %5131 = vmatmul.mubr.bf16.gmra.mrb[0].mxu0 %v4608
        %v5132 = vpop.f32.mrb[0].mxu0
        %v5133 = vadd.f32 %v5082, %v5132
        %v5134 = vpop.f32.mrb[0].mxu0
        %v5135 = vpop.f32.mrb[0].mxu0
        %v5136 = vadd.f32 %v5082, %v5135
        %v5137 = vpop.f32.mrb[0].mxu0
        %5138 = vdwg.mxu0
        %v5139 = vmul.f32 %v5125, 0.01
        %v5140 = vmul.f32 %v5128, 0.01
        %v5141 = vmul.f32 %v5133, 0.01
        %v5142 = vmul.f32 %v5136, 0.01
        %v5143 = vmax.f32 %v5125, %v5139
        %v5144 = vmax.f32 %v5128, %v5140
        %v5145 = vmax.f32 %v5133, %v5141
        %v5146 = vmax.f32 %v5136, %v5142
        %v5147 = vpack.c.bf16 %v5144, %v5143
        %v5148 = vpack.c.bf16 %v5146, %v5145
        %v5150 = vlaneseq
        %v5151 = vshrl.u32 %v5150, 7
        %v5152 = vsub.s32 0, %v5151
        %v5153 = vrot.slane %v5057, %v5152
        %v5171 = vunpack.c.l.b16 %v5024
        %v5172 = vunpack.c.l.b16 %v5025
        %v5173 = vunpack.c.l.b16 %v5026
        %v5174 = vunpack.c.l.b16 %v5027
        %v5175 = vunpack.c.l.b16 %v5028
        %v5176 = vunpack.c.l.b16 %v5029
        %v5177 = vunpack.c.l.b16 %v5030
        %v5178 = vunpack.c.l.b16 %v5031
        %v5179 = vunpack.c.l.b16 %v5032
        %v5180 = vunpack.c.l.b16 %v5033
        %v5181 = vunpack.c.l.b16 %v5034
        %v5182 = vunpack.c.l.b16 %v5035
        %v5183 = vunpack.c.l.b16 %v5036
        %v5184 = vunpack.c.l.b16 %v5037
        %v5185 = vunpack.c.l.b16 %v5038
        %v5186 = vunpack.c.l.b16 %v5039
        %v5187 = vpack.c.b16 %v5172, %v5171
        %v5188 = vpack.c.b16 %v5174, %v5173
        %v5189 = vpack.c.b16 %v5176, %v5175
        %v5190 = vpack.c.b16 %v5178, %v5177
        %v5191 = vpack.c.b16 %v5180, %v5179
        %v5192 = vpack.c.b16 %v5182, %v5181
        %v5193 = vpack.c.b16 %v5184, %v5183
        %v5194 = vpack.c.b16 %v5186, %v5185
        %5203 = vmatprep.subr.bf16.mxu0 0
        %5204 = vmatpush1.bf16.msra.mxu0 %v5187
        %5205 = vmatprep.subr.bf16.mxu0 0
        %5206 = vmatpush1.bf16.msra.mxu0 %v5188
        %5207 = vmatprep.subr.bf16.mxu0 0
        %5208 = vmatpush1.bf16.msra.mxu0 %v5189
        %5209 = vmatprep.subr.bf16.mxu0 0
        %5210 = vmatpush1.bf16.msra.mxu0 %v5190
        %5211 = vmatprep.subr.bf16.mxu0 0
        %5212 = vmatpush1.bf16.msra.mxu0 %v5191
        %5213 = vmatprep.subr.bf16.mxu0 0
        %5214 = vmatpush1.bf16.msra.mxu0 %v5192
        %5215 = vmatprep.subr.bf16.mxu0 0
        %5216 = vmatpush1.bf16.msra.mxu0 %v5193
        %5217 = vmatprep.subr.bf16.mxu0 0
        %5218 = vmatpush1.bf16.msra.mxu0 %v5194
        %5219 = vmatprep.subr.bf16.mxu0 0
        %5220 = vmatpush1.bf16.msra.mxu0 0
        %5221 = vmatprep.subr.bf16.mxu0 0
        %5222 = vmatpush1.bf16.msra.mxu0 0
        %5223 = vmatprep.subr.bf16.mxu0 0
        %5224 = vmatpush1.bf16.msra.mxu0 0
        %5225 = vmatprep.subr.bf16.mxu0 0
        %5226 = vmatpush1.bf16.msra.mxu0 0
        %5227 = vmatprep.subr.bf16.mxu0 0
        %5228 = vmatpush1.bf16.msra.mxu0 0
        %5229 = vmatprep.subr.bf16.mxu0 0
        %5230 = vmatpush1.bf16.msra.mxu0 0
        %5231 = vmatprep.subr.bf16.mxu0 0
        %5232 = vmatpush1.bf16.msra.mxu0 0
        %5233 = vmatprep.subr.bf16.mxu0 0
        %5234 = vmatpush1.bf16.msra.mxu0 0
        %5235 = vmatprep.mubr.bf16.mxu0 0
        %5236 = vmatmul.mubr.bf16.gmra.mrb[0].mxu0 %v5147
        %v5237 = vpop.f32.mrb[0].mxu0
        %v5238 = vadd.f32 %v5153, %v5237
        %v5239 = vpop.f32.mrb[0].mxu0
        %v5240 = vpop.f32.mrb[0].mxu0
        %v5241 = vadd.f32 %v5153, %v5240
        %v5242 = vpop.f32.mrb[0].mxu0
        %5243 = vmatprep.mubr.bf16.mxu0 0
        %5244 = vmatmul.mubr.bf16.gmra.mrb[0].mxu0 %v5148
        %v5245 = vpop.f32.mrb[0].mxu0
        %v5246 = vadd.f32 %v5153, %v5245
        %v5247 = vpop.f32.mrb[0].mxu0
        %v5248 = vpop.f32.mrb[0].mxu0
        %v5249 = vadd.f32 %v5153, %v5248
        %v5250 = vpop.f32.mrb[0].mxu0
        %5251 = vdwg.mxu0
        %v5252 = vmul.f32 %v5238, 0.01
        %v5253 = vmul.f32 %v5241, 0.01
        %v5254 = vmul.f32 %v5246, 0.01
        %v5255 = vmul.f32 %v5249, 0.01
        %v5256 = vmax.f32 %v5238, %v5252
        %v5257 = vmax.f32 %v5241, %v5253
        %v5258 = vmax.f32 %v5246, %v5254
        %v5259 = vmax.f32 %v5249, %v5255
        %v5260 = vpack.c.bf16 %v5257, %v5256
        %v5261 = vpack.c.bf16 %v5259, %v5258
        %v5263 = vlaneseq
        %v5264 = vshrl.u32 %v5263, 7
        %v5265 = vsub.s32 0, %v5264
        %v5266 = vrot.slane %v5058, %v5265
        %v5284 = vunpack.c.l.b16 %v5040
        %v5285 = vunpack.c.l.b16 %v5041
        %v5286 = vunpack.c.l.b16 %v5042
        %v5287 = vunpack.c.l.b16 %v5043
        %v5288 = vunpack.c.l.b16 %v5044
        %v5289 = vunpack.c.l.b16 %v5045
        %v5290 = vunpack.c.l.b16 %v5046
        %v5291 = vunpack.c.l.b16 %v5047
        %v5292 = vunpack.c.l.b16 %v5048
        %v5293 = vunpack.c.l.b16 %v5049
        %v5294 = vunpack.c.l.b16 %v5050
        %v5295 = vunpack.c.l.b16 %v5051
        %v5296 = vunpack.c.l.b16 %v5052
        %v5297 = vunpack.c.l.b16 %v5053
        %v5298 = vunpack.c.l.b16 %v5054
        %v5299 = vunpack.c.l.b16 %v5055
        %v5300 = vpack.c.b16 %v5285, %v5284
        %v5301 = vpack.c.b16 %v5287, %v5286
        %v5302 = vpack.c.b16 %v5289, %v5288
        %v5303 = vpack.c.b16 %v5291, %v5290
        %v5304 = vpack.c.b16 %v5293, %v5292
        %v5305 = vpack.c.b16 %v5295, %v5294
        %v5306 = vpack.c.b16 %v5297, %v5296
        %v5307 = vpack.c.b16 %v5299, %v5298
        %5316 = vmatprep.subr.bf16.mxu0 0
        %5317 = vmatpush1.bf16.msra.mxu0 %v5300
        %5318 = vmatprep.subr.bf16.mxu0 0
        %5319 = vmatpush1.bf16.msra.mxu0 %v5301
        %5320 = vmatprep.subr.bf16.mxu0 0
        %5321 = vmatpush1.bf16.msra.mxu0 %v5302
        %5322 = vmatprep.subr.bf16.mxu0 0
        %5323 = vmatpush1.bf16.msra.mxu0 %v5303
        %5324 = vmatprep.subr.bf16.mxu0 0
        %5325 = vmatpush1.bf16.msra.mxu0 %v5304
        %5326 = vmatprep.subr.bf16.mxu0 0
        %5327 = vmatpush1.bf16.msra.mxu0 %v5305
        %5328 = vmatprep.subr.bf16.mxu0 0
        %5329 = vmatpush1.bf16.msra.mxu0 %v5306
        %5330 = vmatprep.subr.bf16.mxu0 0
        %5331 = vmatpush1.bf16.msra.mxu0 %v5307
        %5332 = vmatprep.subr.bf16.mxu0 0
        %5333 = vmatpush1.bf16.msra.mxu0 0
        %5334 = vmatprep.subr.bf16.mxu0 0
        %5335 = vmatpush1.bf16.msra.mxu0 0
        %5336 = vmatprep.subr.bf16.mxu0 0
        %5337 = vmatpush1.bf16.msra.mxu0 0
        %5338 = vmatprep.subr.bf16.mxu0 0
        %5339 = vmatpush1.bf16.msra.mxu0 0
        %5340 = vmatprep.subr.bf16.mxu0 0
        %5341 = vmatpush1.bf16.msra.mxu0 0
        %5342 = vmatprep.subr.bf16.mxu0 0
        %5343 = vmatpush1.bf16.msra.mxu0 0
        %5344 = vmatprep.subr.bf16.mxu0 0
        %5345 = vmatpush1.bf16.msra.mxu0 0
        %5346 = vmatprep.subr.bf16.mxu0 0
        %5347 = vmatpush1.bf16.msra.mxu0 0
        %5348 = vmatprep.mubr.bf16.mxu0 0
        %5349 = vmatmul.mubr.bf16.gmra.mrb[0].mxu0 %v5260
        %v5350 = vpop.f32.mrb[0].mxu0
        %v5351 = vadd.f32 %v5266, %v5350
        %v5352 = vpop.f32.mrb[0].mxu0
        %v5353 = vpop.f32.mrb[0].mxu0
        %v5354 = vadd.f32 %v5266, %v5353
        %v5355 = vpop.f32.mrb[0].mxu0
        %5356 = vmatprep.mubr.bf16.mxu0 0
        %5357 = vmatmul.mubr.bf16.gmra.mrb[0].mxu0 %v5261
        %v5358 = vpop.f32.mrb[0].mxu0
        %v5359 = vadd.f32 %v5266, %v5358
        %v5360 = vpop.f32.mrb[0].mxu0
        %v5361 = vpop.f32.mrb[0].mxu0
        %v5362 = vadd.f32 %v5266, %v5361
        %v5363 = vpop.f32.mrb[0].mxu0
        %5364 = vdwg.mxu0
        %v5365 = vmul.f32 %v5351, 0.01
        %v5366 = vmul.f32 %v5354, 0.01
        %v5367 = vmul.f32 %v5359, 0.01
        %v5368 = vmul.f32 %v5362, 0.01
        %v5369 = vmax.f32 %v5351, %v5365
        %v5370 = vmax.f32 %v5354, %v5366
        %v5371 = vmax.f32 %v5359, %v5367
        %v5372 = vmax.f32 %v5362, %v5368
        %v5373 = vpack.c.bf16 %v5370, %v5369
        %v5374 = vpack.c.bf16 %v5372, %v5371
        %v5376 = vlaneseq
        %v5377 = vshrl.u32 %v5376, 7
        %v5378 = vsub.s32 0, %v5377
        %v5379 = vrot.slane %v5077, %v5378
        %v5397 = vunpack.c.l.b16 %v5060
        %v5398 = vunpack.c.l.b16 %v5061
        %v5399 = vunpack.c.l.b16 %v5062
        %v5400 = vunpack.c.l.b16 %v5063
        %v5401 = vunpack.c.l.b16 %v5064
        %v5402 = vunpack.c.l.b16 %v5065
        %v5403 = vunpack.c.l.b16 %v5066
        %v5404 = vunpack.c.l.b16 %v5067
        %v5405 = vunpack.c.l.b16 %v5068
        %v5406 = vunpack.c.l.b16 %v5069
        %v5407 = vunpack.c.l.b16 %v5070
        %v5408 = vunpack.c.l.b16 %v5071
        %v5409 = vunpack.c.l.b16 %v5072
        %v5410 = vunpack.c.l.b16 %v5073
        %v5411 = vunpack.c.l.b16 %v5074
        %v5412 = vunpack.c.l.b16 %v5075
        %v5413 = vpack.c.b16 %v5398, %v5397
        %v5414 = vpack.c.b16 %v5400, %v5399
        %v5415 = vpack.c.b16 %v5402, %v5401
        %v5416 = vpack.c.b16 %v5404, %v5403
        %v5417 = vpack.c.b16 %v5406, %v5405
        %v5418 = vpack.c.b16 %v5408, %v5407
        %v5419 = vpack.c.b16 %v5410, %v5409
        %v5420 = vpack.c.b16 %v5412, %v5411
        %5429 = vmatprep.subr.bf16.mxu0 0
        %5430 = vmatpush1.bf16.msra.mxu0 %v5413
        %5431 = vmatprep.subr.bf16.mxu0 0
        %5432 = vmatpush1.bf16.msra.mxu0 %v5414
        %5433 = vmatprep.subr.bf16.mxu0 0
        %5434 = vmatpush1.bf16.msra.mxu0 %v5415
        %5435 = vmatprep.subr.bf16.mxu0 0
        %5436 = vmatpush1.bf16.msra.mxu0 %v5416
        %5437 = vmatprep.subr.bf16.mxu0 0
        %5438 = vmatpush1.bf16.msra.mxu0 %v5417
        %5439 = vmatprep.subr.bf16.mxu0 0
        %5440 = vmatpush1.bf16.msra.mxu0 %v5418
        %5441 = vmatprep.subr.bf16.mxu0 0
        %5442 = vmatpush1.bf16.msra.mxu0 %v5419
        %5443 = vmatprep.subr.bf16.mxu0 0
        %5444 = vmatpush1.bf16.msra.mxu0 %v5420
        %5445 = vmatprep.subr.bf16.mxu0 0
        %5446 = vmatpush1.bf16.msra.mxu0 0
        %5447 = vmatprep.subr.bf16.mxu0 0
        %5448 = vmatpush1.bf16.msra.mxu0 0
        %5449 = vmatprep.subr.bf16.mxu0 0
        %5450 = vmatpush1.bf16.msra.mxu0 0
        %5451 = vmatprep.subr.bf16.mxu0 0
        %5452 = vmatpush1.bf16.msra.mxu0 0
        %5453 = vmatprep.subr.bf16.mxu0 0
        %5454 = vmatpush1.bf16.msra.mxu0 0
        %5455 = vmatprep.subr.bf16.mxu0 0
        %5456 = vmatpush1.bf16.msra.mxu0 0
        %5457 = vmatprep.subr.bf16.mxu0 0
        %5458 = vmatpush1.bf16.msra.mxu0 0
        %5459 = vmatprep.subr.bf16.mxu0 0
        %5460 = vmatpush1.bf16.msra.mxu0 0
        %5461 = vmatprep.mubr.bf16.mxu0 0
        %5462 = vmatmul.mubr.bf16.gmra.mrb[0].mxu0 %v5373
        %v5463 = vpop.f32.mrb[0].mxu0
        %v5464 = vadd.f32 %v5379, %v5463
        %v5465 = vpop.f32.mrb[0].mxu0
        %v5466 = vpop.f32.mrb[0].mxu0
        %v5467 = vadd.f32 %v5379, %v5466
        %v5468 = vpop.f32.mrb[0].mxu0
        %5469 = vmatprep.mubr.bf16.mxu0 0
        %5470 = vmatmul.mubr.bf16.gmra.mrb[0].mxu0 %v5374
        %v5471 = vpop.f32.mrb[0].mxu0
        %v5472 = vadd.f32 %v5379, %v5471
        %v5473 = vpop.f32.mrb[0].mxu0
        %v5474 = vpop.f32.mrb[0].mxu0
        %v5475 = vadd.f32 %v5379, %v5474
        %v5476 = vpop.f32.mrb[0].mxu0
        %5477 = vdwg.mxu0
        %v5478 = vmul.f32 %v5464, 0.375
        %v5479 = vmul.f32 %v5467, 0.375
        %v5480 = vmul.f32 %v5472, 0.375
        %v5481 = vmul.f32 %v5475, 0.375
        %v5482 = vsub.f32 %v5014, %v5478
        %v5483 = vsub.f32 %v5015, %v5479
        %v5484 = vsub.f32 %v5016, %v5480
        %v5485 = vsub.f32 %v5017, %v5481
        %5486 = vst.msk [vmem:[%s607] sm:$0xff] %vm699, %v4510
        %5487 = vst.msk [vmem:[%s607 + $0x8] sm:$0xff] %vm699, %v4511
        %5488 = vst.msk [vmem:[%s607 + $0x10] sm:$0xff] %vm699, %v4512
        %5489 = vst.msk [vmem:[%s607 + $0x18] sm:$0xff] %vm699, %v4513
        %5490 = vst.msk [vmem:[%s613] sm:$0xff] %vm699, %v5482
        %5491 = vst.msk [vmem:[%s613 + $0x8] sm:$0xff] %vm699, %v5483
        %5492 = vst.msk [vmem:[%s613 + $0x10] sm:$0xff] %vm699, %v5484
        %5493 = vst.msk [vmem:[%s613 + $0x18] sm:$0xff] %vm699, %v5485
        %v5494 = vadd.f32 %v1094, %v4998
        %v5495 = vadd.f32 %v1095, %v4999
        %v5496 = vadd.f32 %v1096, %v5000
        %v5497 = vadd.f32 %v1097, %v5001
        %v5498 = vsel %vm699, %v5494, 0.0
        %5499 = vadd.xlane.f32.xlu0 %v5498
        %v5500 = vpop.xlane.xlu0 %5499
        %v5501 = vsel %vm699, %v5495, 0.0
        %5502 = vadd.xlane.f32.xlu0 %v5501
        %v5503 = vpop.xlane.xlu0 %5502
        %v5504 = vsel %vm699, %v5496, 0.0
        %5505 = vadd.xlane.f32.xlu0 %v5504
        %v5506 = vpop.xlane.xlu0 %5505
        %v5507 = vsel %vm699, %v5497, 0.0
        %5508 = vadd.xlane.f32.xlu0 %v5507
        %v5509 = vpop.xlane.xlu0 %5508
        %v5510 = vmul.f32 %v5500, 0.5
        %v5511 = vmul.f32 %v5503, 0.5
        %v5512 = vmul.f32 %v5506, 0.5
        %v5513 = vmul.f32 %v5509, 0.5
        %v5514 = vadd.f32 %v2032, %v3522
        %v5515 = vadd.f32 %v2033, %v3523
        %v5516 = vadd.f32 %v2034, %v3524
        %v5517 = vadd.f32 %v2035, %v3525
        %v5518 = vsel %vm1635, %v5514, 0.0
        %5519 = vadd.xlane.f32.xlu0 %v5518
        %v5520 = vpop.xlane.xlu0 %5519
        %v5521 = vsel %vm1635, %v5515, 0.0
        %5522 = vadd.xlane.f32.xlu0 %v5521
        %v5523 = vpop.xlane.xlu0 %5522
        %v5524 = vsel %vm1635, %v5516, 0.0
        %5525 = vadd.xlane.f32.xlu0 %v5524
        %v5526 = vpop.xlane.xlu0 %5525
        %v5527 = vsel %vm1635, %v5517, 0.0
        %5528 = vadd.xlane.f32.xlu0 %v5527
        %v5529 = vpop.xlane.xlu0 %5528
        %v5530 = vadd.f32 %v5510, %v5520
        %v5531 = vadd.f32 %v5511, %v5523
        %v5532 = vadd.f32 %v5512, %v5526
        %v5533 = vadd.f32 %v5513, %v5529
        %5534 = vst [vmem:[%s590] sm:$0xff] %v5530
        %5535 = vst [vmem:[%s590 + $0x8] sm:$0xff] %v5531
        %5536 = vst [vmem:[%s590 + $0x10] sm:$0xff] %v5532
        %5537 = vst [vmem:[%s590 + $0x18] sm:$0xff] %v5533
        %s5538 = smul.u32 4, %s33
        %p5539 = scmp.lt.s32.totalorder %s5538, 7
        %s5540 = scalar_select %p5539, %s5538, 7
        %s5541 = smul.addr %s5540, 8
        %s5542 = scalar_lea.vmem %s14, %s5541
        %s5543 = smul.u32 4, %s33
        %p5544 = scmp.lt.s32.totalorder %s5543, 7
        %s5545 = scalar_select %p5544, %s5543, 7
        %s5546 = smul.addr %s5545, 8
        %s5547 = scalar_lea.vmem %s15, %s5546
        %s5548 = sand.u32 %s397, 1
        %s5549 = scalar_lea.sflag [#allocation4], %s5548
        %s5550 = sand.u32 %s397, 1
        %s5551 = smul.addr %s5550, 32
        %s5552 = scalar_lea.vmem [#allocation8], %s5551
        // Predicated region
        $region89: #{tpu_custom_call.1} parent=75 // pred_check
          %p5553 = pneg %p355
        $region90: #{tpu_custom_call.1} parent=75 // pred_check_branch
          %5555 = sbr.rel (%p5553) target = $region92
        $region91: #{tpu_custom_call.1} parent=75 // pred_region
          %s5556 = smul.u32 4, %s33
        $region92: #{tpu_custom_call.1} parent=75 // pred_fallthru
          _
        // Predicated region
        $region93: #{tpu_custom_call.1} parent=75 // pred_check
          %p5557 = pneg %p381
        $region94: #{tpu_custom_call.1} parent=75 // pred_check_branch
          %5559 = sbr.rel (%p5557) target = $region96
        $region95: #{tpu_custom_call.1} parent=75 // pred_region
          %s5560 = smul.u32 4, %s33
        $region96: #{tpu_custom_call.1} parent=75 // pred_fallthru
          _
        // Predicated region
        $region97: #{tpu_custom_call.1} parent=75 // pred_check
          %p5561 = pneg %p407
        $region98: #{tpu_custom_call.1} parent=75 // pred_check_branch
          %5563 = sbr.rel (%p5561) target = $region100
        $region99: #{tpu_custom_call.1} parent=75 // pred_region
          %s5564 = smul.u32 4, %s33
          %s5566 = ssub.s32 512, 512
          %5567 = vsyncadd %s5549, %s5566
          %s5568 = smul.addr %s5564, 128
          %s5569 = scalar_lea.hbm %s16, %s5568
          %s5570 = sshll.u32 %s5552, 4
          %s5571 = int_to_ptr.vmem [resolvable:$true] %s5570
          %5576 = dma.vmem_to_hbm [thread:$0]  %s5571, 512, %s5569, %s5549, 128, 128, 8
        $region100: #{tpu_custom_call.1} parent=75 // pred_fallthru
          _
      $region76: #{tpu_custom_call.1} parent=5 // pred_fallthru
        _
      %p5577 = scmp.le.s32.totalorder 2, %s28
      // Predicated region
      $region101: #{tpu_custom_call.1} parent=5 // pred_check
        %p5578 = pneg %p5577
      $region102: #{tpu_custom_call.1} parent=5 // pred_check_branch
        %5580 = sbr.rel (%p5578) target = $region104
      $region103: #{tpu_custom_call.1} parent=5 // pred_region
        %s5581 = ssub.s32 %s28, 2
        // Predicated region
        $region105: #{tpu_custom_call.1} parent=103 // pred_check
          %p5582 = pneg %p361
        $region106: #{tpu_custom_call.1} parent=103 // pred_check_branch
          %5584 = sbr.rel (%p5582) target = $region108
        $region107: #{tpu_custom_call.1} parent=103 // pred_region
          %s5585 = smul.u32 4, %s34
          %p5586 = scmp.lt.s32.totalorder %s5585, 7
          %s5587 = scalar_select %p5586, %s5585, 7
          %s5588 = smul.addr %s5587, 8
          %s5589 = scalar_lea.vmem %s14, %s5588
        $region108: #{tpu_custom_call.1} parent=103 // pred_fallthru
          _
        // Predicated region
        $region109: #{tpu_custom_call.1} parent=103 // pred_check
          %p5590 = pneg %p387
        $region110: #{tpu_custom_call.1} parent=103 // pred_check_branch
          %5592 = sbr.rel (%p5590) target = $region112
        $region111: #{tpu_custom_call.1} parent=103 // pred_region
          %s5593 = smul.u32 4, %s34
          %p5594 = scmp.lt.s32.totalorder %s5593, 7
          %s5595 = scalar_select %p5594, %s5593, 7
          %s5596 = smul.addr %s5595, 8
          %s5597 = scalar_lea.vmem %s15, %s5596
        $region112: #{tpu_custom_call.1} parent=103 // pred_fallthru
          _
        // Predicated region
        $region113: #{tpu_custom_call.1} parent=103 // pred_check
          %p5598 = pneg %p413
        $region114: #{tpu_custom_call.1} parent=103 // pred_check_branch
          %5600 = sbr.rel (%p5598) target = $region116
        $region115: #{tpu_custom_call.1} parent=103 // pred_region
          %s5601 = sand.u32 %s398, 1
          %s5602 = scalar_lea.sflag [#allocation4], %s5601
          %s5603 = sand.u32 %s398, 1
          %s5604 = smul.addr %s5603, 32
          %s5605 = scalar_lea.vmem [#allocation8], %s5604
          %5606 = dma.done %s5602, 512
        $region116: #{tpu_custom_call.1} parent=103 // pred_fallthru
          _
      $region104: #{tpu_custom_call.1} parent=5 // pred_fallthru
        _
    $region6: #{tpu_custom_call.1} parent=1 // loop_footer
      %s32 = sadd.s32 1, %s28
    $region7: #{tpu_custom_call.1} parent=1 // loop_footer_branch
      %27 = sbr.rel target = $region3
    $region8: #{tpu_custom_call.1} parent=1 // loop_exit
      _
    %5607 = vsyncpa [#allocation3], 1
    %s5608 = scalar_lea.sflag [#allocation3], 1
    %5609 = vsyncpa %s5608, 1
    %5610 = vsyncpa [#allocation6], 1
    %5611 = vsyncpa [#allocation4], 1
    %s5612 = scalar_lea.sflag [#allocation4], 1
    %5613 = vsyncpa %s5612, 1

</llo_original>
